<compile_context>
chip_gen: v7x
topology: tpu7x:2x2x1
jax: 0.10.0
libtpu: 0.0.40
codegen_flags: <defaults>
</compile_context>

<pallas_src>
import functools

import jax
import jax.numpy as jnp
from jax import lax
from jax.experimental import pallas as pl
from jax.experimental.pallas import tpu as pltpu


def _round_up(x, m):
    return (x + m - 1) // m * m


# ---------------------------------------------------------------------------
# Shared kernel: 7x7 / stride-2 / pad-3 convolution (direct, width-folded)
# ---------------------------------------------------------------------------
def _conv7_kernel(x0_ref, x1_ref, w_ref, b_ref, o_ref, *, ow, relu_lanes,
                  multi_step):
    """One grid step computes R consecutive output rows (flattened to R*OW).

    x0_ref/x1_ref: (1, rows_q*OW, Kpad)  even / odd row-parity folded input
    w_ref:         (7, Kpad, Cout)       per-kh folded weights (resident)
    b_ref:         (1, Cout)
    o_ref:         (1, R*OW, Cout)
    """
    m = o_ref.shape[1]                      # R * OW
    cout = o_ref.shape[2]
    r = m // ow
    base = pl.program_id(1) * r if multi_step else 0

    acc = jnp.zeros((m, cout), jnp.float32)
    for kh in range(7):                     # 7 MXU matmuls per grid step
        src = x0_ref if kh % 2 == 0 else x1_ref
        start = (base + kh // 2) * ow
        if multi_step and ow % 8 == 0:
            start = pl.multiple_of(start, 8)
        slab = src[0, pl.ds(start, m), :]                       # (R*OW, Kpad)
        acc = acc + jnp.dot(slab, w_ref[kh],
                            preferred_element_type=jnp.float32)

    out = acc + b_ref[...]                                      # + (1, Cout)
    if relu_lanes:
        lane = lax.broadcasted_iota(jnp.int32, out.shape, 1)
        out = jnp.where(lane < relu_lanes, jnp.maximum(out, 0.0), out)
    o_ref[0] = out.astype(o_ref.dtype)


def conv7x7_s2_p3(x, w, b, *, relu_lanes=0, rows_per_step=8,
                  out_dtype=jnp.bfloat16):
    """Direct 7x7 / stride-2 / pad-3 convolution, NHWC -> NHWC.

    The zero-padded bf16 input is split by row parity and "width-folded"
    (the 7 kw taps x Cin concatenated along channels) -- an input-scale
    intermediate built by XLA strided slices, NOT an output-scale im2col.
    Partial ReLU (first `relu_lanes` output channels) is fused.
    """
    n, h, wd, cin = x.shape
    assert w.shape[:3] == (7, 7, cin)
    cout = w.shape[3]
    oh = (h - 1) // 2 + 1
    ow = (wd - 1) // 2 + 1

    kfold = 7 * cin
    # Keep the contraction a clean multiple of 128 lanes (proven MXU path).
    # TODO(synk): keep K = 7*Cin unpadded (28 for the fused first conv) once
    # the small-K jnp.dot path is validated; it shrinks this intermediate ~4x.
    kpad = _round_up(kfold, 128)

    xp = jnp.pad(x.astype(jnp.bfloat16), ((0, 0), (3, 3), (3, 3), (0, 0)))

    def fold(xq):
        # xq: (N, rows_q, Wp, Cin), one row-parity phase of the padded input.
        parts = []
        for kw in range(7):
            p, t = kw % 2, kw // 2
            parts.append(xq[:, :, p::2, :][:, :, t:t + ow, :])
        out = jnp.concatenate(parts, axis=-1)          # (N, rows_q, OW, 7*Cin)
        if kpad != kfold:
            out = jnp.pad(out, ((0, 0), (0, 0), (0, 0), (0, kpad - kfold)))
        rq = out.shape[1]
        return out.reshape(n, rq * ow, kpad), rq

    x0, r0 = fold(xp[:, 0::2])
    x1, r1 = fold(xp[:, 1::2])
    assert r0 >= oh + 3 and r1 >= oh + 2

    # Folded weights, tap order kw = 0..6 matching fold(); bf16 for the MXU.
    wf = jnp.concatenate([w[:, kw] for kw in range(7)], axis=1)  # (7,7Cin,Cout)
    wf = jnp.pad(wf, ((0, 0), (0, kpad - kfold), (0, 0))).astype(jnp.bfloat16)
    bf = b.reshape(1, cout).astype(jnp.float32)

    # Output rows per grid step: amortizes per-step overhead and raises MXU
    # row occupancy; keep the output block's sublane dim 8-aligned (or full).
    r = oh
    for cand in range(min(rows_per_step, oh), 0, -1):
        if oh % cand == 0 and ((cand * ow) % 8 == 0 or cand == oh):
            r = cand
            break
    n_row_steps = oh // r

    kernel = functools.partial(_conv7_kernel, ow=ow, relu_lanes=relu_lanes,
                               multi_step=n_row_steps > 1)
    out = pl.pallas_call(
        kernel,
        out_shape=jax.ShapeDtypeStruct((n, oh * ow, cout), out_dtype),
        grid=(n, n_row_steps),
        in_specs=[
            pl.BlockSpec((1, r0 * ow, kpad), lambda bb, i: (bb, 0, 0)),
            pl.BlockSpec((1, r1 * ow, kpad), lambda bb, i: (bb, 0, 0)),
            pl.BlockSpec((7, kpad, cout), lambda bb, i: (0, 0, 0)),   # resident
            pl.BlockSpec((1, cout), lambda bb, i: (0, 0)),
        ],
        out_specs=pl.BlockSpec((1, r * ow, cout), lambda bb, i: (bb, i, 0)),
        compiler_params=pltpu.CompilerParams(
            dimension_semantics=("parallel", "parallel")),
    )(x0, x1, wf, bf)
    return out.reshape(n, oh, ow, cout)


# ---------------------------------------------------------------------------
# Kernel 2: 3x3 / stride-2 / pad-1 max pool from parity phases (single pass)
# ---------------------------------------------------------------------------
def _maxpool_kernel(ee_ref, eo_ref, oe_ref, oo_ref, o_ref):
    """out[i,j] = max over rows {2i-1,2i,2i+1} x cols {2j-1,2j,2j+1}.

    eo/oe/oo carry a one-element -inf border (left col / top row), so all nine
    terms are dense contiguous slices: one pass over the data, 9 VPU maxima.
    """
    oh, ow = o_ref.shape[1], o_ref.shape[2]
    ee = ee_ref[0].astype(jnp.float32)        # [i, j]   -> t3[2i,   2j]
    eo = eo_ref[0].astype(jnp.float32)        # [i, j]   -> t3[2i,   2j-1]
    oe = oe_ref[0].astype(jnp.float32)        # [i, j]   -> t3[2i-1, 2j]
    oo = oo_ref[0].astype(jnp.float32)        # [i, j]   -> t3[2i-1, 2j-1]
    m = ee
    m = jnp.maximum(m, eo[:, 1:])             # (2i,   2j+1)
    m = jnp.maximum(m, eo[:, :ow])            # (2i,   2j-1)
    m = jnp.maximum(m, oe[1:, :])             # (2i+1, 2j)
    m = jnp.maximum(m, oe[:oh, :])            # (2i-1, 2j)
    m = jnp.maximum(m, oo[1:, 1:])            # (2i+1, 2j+1)
    m = jnp.maximum(m, oo[1:, :ow])           # (2i+1, 2j-1)
    m = jnp.maximum(m, oo[:oh, 1:])           # (2i-1, 2j+1)
    m = jnp.maximum(m, oo[:oh, :ow])          # (2i-1, 2j-1)
    o_ref[0] = m.astype(o_ref.dtype)


def maxpool_3x3_s2_p1(t3):
    """MaxPool2d(3, stride=2, padding=1) on NHWC with even H, W (bf16 in/out).

    Only the four parity slices of t3 (together one copy, bf16) plus 1-element
    -inf borders are materialized outside the kernel.
    TODO(synk): fold the phase split into the kernel via strided pl.ds ref
    reads and tile output rows with a 1-row halo (drops the remaining copy and
    lets v7x shard rows when N == 1).
    """
    n, h1, w1, c = t3.shape
    assert h1 % 2 == 0 and w1 % 2 == 0
    oh, ow = h1 // 2, w1 // 2
    ninf = float("-inf")
    ee = t3[:, 0::2, 0::2, :]
    eo = jnp.pad(t3[:, 0::2, 1::2, :], ((0, 0), (0, 0), (1, 0), (0, 0)),
                 constant_values=ninf)
    oe = jnp.pad(t3[:, 1::2, 0::2, :], ((0, 0), (1, 0), (0, 0), (0, 0)),
                 constant_values=ninf)
    oo = jnp.pad(t3[:, 1::2, 1::2, :], ((0, 0), (1, 0), (1, 0), (0, 0)),
                 constant_values=ninf)
    return pl.pallas_call(
        _maxpool_kernel,
        out_shape=jax.ShapeDtypeStruct((n, oh, ow, c), t3.dtype),
        grid=(n,),
        in_specs=[
            pl.BlockSpec((1, oh, ow, c), lambda b: (b, 0, 0, 0)),
            pl.BlockSpec((1, oh, ow + 1, c), lambda b: (b, 0, 0, 0)),
            pl.BlockSpec((1, oh + 1, ow, c), lambda b: (b, 0, 0, 0)),
            pl.BlockSpec((1, oh + 1, ow + 1, c), lambda b: (b, 0, 0, 0)),
        ],
        out_specs=pl.BlockSpec((1, oh, ow, c), lambda b: (b, 0, 0, 0)),
        compiler_params=pltpu.CompilerParams(
            dimension_semantics=("parallel",)),
    )(ee, eo, oe, oo)


# ---------------------------------------------------------------------------
# Full forward (NCHW in / NCHW out, like PyTorch)
# ---------------------------------------------------------------------------
def conv_maxpool2d_forward(x_nchw, params):
    (w1, b1), (w2, b2), (w3, b3) = params                # HWIO weights
    x = jnp.transpose(x_nchw, (0, 2, 3, 1))              # NCHW -> NHWC
    n, h, wd, _ = x.shape

    # conv1 + conv2 fused into one 128-lane-output convolution.  A constant
    # ones channel (zero-padded like the data) reproduces conv2(x + 1) exactly
    # including the border: its weight row is sum_Cin(w2).
    x_aug = jnp.concatenate([x, jnp.ones((n, h, wd, 1), x.dtype)], axis=-1)
    w1a = jnp.concatenate([w1, jnp.zeros((7, 7, 1, w1.shape[-1]), w1.dtype)],
                          axis=2)
    w2a = jnp.concatenate([w2, jnp.sum(w2, axis=2, keepdims=True)], axis=2)
    w_fused = jnp.concatenate([w1a, w2a], axis=3)        # (7, 7, 4, 128)
    b_fused = jnp.concatenate([b1, b2])                  # (128,)

    # t3 == cat(relu(conv1(x)), conv2(x + 1)); bf16 (largest tensor).
    t3 = conv7x7_s2_p3(x_aug, w_fused, b_fused, relu_lanes=w1.shape[-1],
                       rows_per_step=16, out_dtype=jnp.bfloat16)

    t4 = maxpool_3x3_s2_p1(t3)

    # conv3: bf16 MXU inputs, f32 accumulation and f32 output.
    t5 = conv7x7_s2_p3(t4, w3, b3, relu_lanes=0, rows_per_step=8,
                       out_dtype=jnp.float32)
    return jnp.transpose(t5, (0, 3, 1, 2))               # NHWC -> NCHW


# ---------------------------------------------------------------------------
# Pure-JAX reference (for correctness check)
# ---------------------------------------------------------------------------
def reference_forward(x_nchw, params):
    (w1, b1), (w2, b2), (w3, b3) = params
    x = jnp.transpose(x_nchw, (0, 2, 3, 1))

    def conv(inp, w, b):
        y = lax.conv_general_dilated(
            inp, w, window_strides=(2, 2), padding=[(3, 3), (3, 3)],
            dimension_numbers=("NHWC", "HWIO", "NHWC"),
            precision=lax.Precision.HIGHEST)
        return y + b

    t1 = jax.nn.relu(conv(x, w1, b1))
    t2 = conv(x + 1.0, w2, b2)
    t3 = jnp.concatenate([t1, t2], axis=-1)
    t4 = lax.reduce_window(t3, -jnp.inf, lax.max,
                           window_dimensions=(1, 3, 3, 1),
                           window_strides=(1, 2, 2, 1),
                           padding=((0, 0), (1, 1), (1, 1), (0, 0)))
    t5 = conv(t4, w3, b3)
    return jnp.transpose(t5, (0, 3, 1, 2))


# ---------------------------------------------------------------------------
if __name__ == "__main__":
    key = jax.random.PRNGKey(0)
    kx, k1, k2, k3, kb1, kb2, kb3 = jax.random.split(key, 7)

    # Deterministic synthetic parameters (HWIO layout).
    w1 = 0.05 * jax.random.normal(k1, (7, 7, 3, 64), jnp.float32)
    b1 = 0.05 * jax.random.normal(kb1, (64,), jnp.float32)
    w2 = 0.05 * jax.random.normal(k2, (7, 7, 3, 64), jnp.float32)
    b2 = 0.05 * jax.random.normal(kb2, (64,), jnp.float32)
    w3 = 0.05 * jax.random.normal(k3, (7, 7, 128, 128), jnp.float32)
    b3 = 0.05 * jax.random.normal(kb3, (128,), jnp.float32)
    params = ((w1, b1), (w2, b2), (w3, b3))

    # Small NCHW input consistent with Conv2d(3, ...): (N=2, C=3, H=16, W=16)
    x = jax.random.normal(kx, (2, 3, 16, 16), jnp.float32)

    fwd = jax.jit(conv_maxpool2d_forward)
    out = jax.block_until_ready(fwd(x, params))
    ref = jax.block_until_ready(reference_forward(x, params))

    assert out.shape == (2, 128, 2, 2), out.shape
    # Tolerance reflects bf16 MXU inputs (f32 accumulation) end-to-end and the
    # bf16-stored t3/t4; conv3's reduction length is 6272.
    max_err = float(jnp.max(jnp.abs(out - ref)))
    scale = float(jnp.max(jnp.abs(ref)))
    assert max_err <= 2e-2 * scale + 1e-3, (max_err, scale)

    print("KERNEL_OK")
</pallas_src>

<mosaic_0001>
module attributes {stable_mosaic.version = 11 : i64} {
  func.func @_conv7_kernel(%arg0: i32, %arg1: i32, %arg2: memref<1x88x128xbf16, #tpu.memory_space<vmem>>, %arg3: memref<1x88x128xbf16, #tpu.memory_space<vmem>>, %arg4: memref<7x128x128xbf16, #tpu.memory_space<vmem>>, %arg5: memref<1x128xf32, #tpu.memory_space<vmem>>, %arg6: memref<1x64x128xbf16, #tpu.memory_space<vmem>>) attributes {dimension_semantics = [#tpu.dimension_semantics<parallel>, #tpu.dimension_semantics<parallel>], iteration_bounds = array<i64: 2, 1>, scalar_prefetch = 0 : i64, scratch_operands = 0 : i64, tpu.core_type = #tpu.core_type<tc>, window_params = [{transform_indices = @transform_0, window_bounds = array<i64: 1, 88, 128>}, {transform_indices = @transform_1, window_bounds = array<i64: 1, 88, 128>}, {pipeline_mode = #tpu.pipeline_mode<synchronous>, transform_indices = @transform_2, window_bounds = array<i64: 7, 128, 128>}, {pipeline_mode = #tpu.pipeline_mode<synchronous>, transform_indices = @transform_3, window_bounds = array<i64: 1, 128>}, {transform_indices = @transform_4, window_bounds = array<i64: 1, 64, 128>}]} {
    %cst = arith.constant 0.000000e+00 : f32
    %0 = vector.broadcast %cst : f32 to vector<64x128xf32>
    %c0 = arith.constant 0 : index
    %c0_0 = arith.constant 0 : index
    %c0_1 = arith.constant 0 : index
    %1 = vector.load %arg2[%c0, %c0_0, %c0_1] : memref<1x88x128xbf16, #tpu.memory_space<vmem>>, vector<1x64x128xbf16>
    %2 = vector.shape_cast %1 : vector<1x64x128xbf16> to vector<64x128xbf16>
    %c0_2 = arith.constant 0 : index
    %c0_3 = arith.constant 0 : index
    %c0_4 = arith.constant 0 : index
    %3 = vector.load %arg4[%c0_2, %c0_3, %c0_4] : memref<7x128x128xbf16, #tpu.memory_space<vmem>>, vector<1x128x128xbf16>
    %4 = vector.shape_cast %3 : vector<1x128x128xbf16> to vector<128x128xbf16>
    %cst_5 = arith.constant dense<0.000000e+00> : vector<64x128xf32>
    %5 = tpu.matmul %2, %4, %cst_5 {dimension_numbers = #tpu.dot_dimension_numbers<[1], [0], [0], [1], [0, 0, 1, 1], [], []>} : vector<64x128xbf16>, vector<128x128xbf16>, vector<64x128xf32> -> vector<64x128xf32>
    %6 = arith.addf %0, %5 : vector<64x128xf32>
    %c0_6 = arith.constant 0 : index
    %c0_7 = arith.constant 0 : index
    %c0_8 = arith.constant 0 : index
    %7 = vector.load %arg3[%c0_6, %c0_7, %c0_8] : memref<1x88x128xbf16, #tpu.memory_space<vmem>>, vector<1x64x128xbf16>
    %8 = vector.shape_cast %7 : vector<1x64x128xbf16> to vector<64x128xbf16>
    %c1 = arith.constant 1 : index
    %c0_9 = arith.constant 0 : index
    %c0_10 = arith.constant 0 : index
    %9 = vector.load %arg4[%c1, %c0_9, %c0_10] : memref<7x128x128xbf16, #tpu.memory_space<vmem>>, vector<1x128x128xbf16>
    %10 = vector.shape_cast %9 : vector<1x128x128xbf16> to vector<128x128xbf16>
    %cst_11 = arith.constant dense<0.000000e+00> : vector<64x128xf32>
    %11 = tpu.matmul %8, %10, %cst_11 {dimension_numbers = #tpu.dot_dimension_numbers<[1], [0], [0], [1], [0, 0, 1, 1], [], []>} : vector<64x128xbf16>, vector<128x128xbf16>, vector<64x128xf32> -> vector<64x128xf32>
    %12 = arith.addf %6, %11 : vector<64x128xf32>
    %c0_12 = arith.constant 0 : index
    %c8 = arith.constant 8 : index
    %c0_13 = arith.constant 0 : index
    %13 = vector.load %arg2[%c0_12, %c8, %c0_13] : memref<1x88x128xbf16, #tpu.memory_space<vmem>>, vector<1x64x128xbf16>
    %14 = vector.shape_cast %13 : vector<1x64x128xbf16> to vector<64x128xbf16>
    %c2 = arith.constant 2 : index
    %c0_14 = arith.constant 0 : index
    %c0_15 = arith.constant 0 : index
    %15 = vector.load %arg4[%c2, %c0_14, %c0_15] : memref<7x128x128xbf16, #tpu.memory_space<vmem>>, vector<1x128x128xbf16>
    %16 = vector.shape_cast %15 : vector<1x128x128xbf16> to vector<128x128xbf16>
    %cst_16 = arith.constant dense<0.000000e+00> : vector<64x128xf32>
    %17 = tpu.matmul %14, %16, %cst_16 {dimension_numbers = #tpu.dot_dimension_numbers<[1], [0], [0], [1], [0, 0, 1, 1], [], []>} : vector<64x128xbf16>, vector<128x128xbf16>, vector<64x128xf32> -> vector<64x128xf32>
    %18 = arith.addf %12, %17 : vector<64x128xf32>
    %c0_17 = arith.constant 0 : index
    %c8_18 = arith.constant 8 : index
    %c0_19 = arith.constant 0 : index
    %19 = vector.load %arg3[%c0_17, %c8_18, %c0_19] : memref<1x88x128xbf16, #tpu.memory_space<vmem>>, vector<1x64x128xbf16>
    %20 = vector.shape_cast %19 : vector<1x64x128xbf16> to vector<64x128xbf16>
    %c3 = arith.constant 3 : index
    %c0_20 = arith.constant 0 : index
    %c0_21 = arith.constant 0 : index
    %21 = vector.load %arg4[%c3, %c0_20, %c0_21] : memref<7x128x128xbf16, #tpu.memory_space<vmem>>, vector<1x128x128xbf16>
    %22 = vector.shape_cast %21 : vector<1x128x128xbf16> to vector<128x128xbf16>
    %cst_22 = arith.constant dense<0.000000e+00> : vector<64x128xf32>
    %23 = tpu.matmul %20, %22, %cst_22 {dimension_numbers = #tpu.dot_dimension_numbers<[1], [0], [0], [1], [0, 0, 1, 1], [], []>} : vector<64x128xbf16>, vector<128x128xbf16>, vector<64x128xf32> -> vector<64x128xf32>
    %24 = arith.addf %18, %23 : vector<64x128xf32>
    %c0_23 = arith.constant 0 : index
    %c16 = arith.constant 16 : index
    %c0_24 = arith.constant 0 : index
    %25 = vector.load %arg2[%c0_23, %c16, %c0_24] : memref<1x88x128xbf16, #tpu.memory_space<vmem>>, vector<1x64x128xbf16>
    %26 = vector.shape_cast %25 : vector<1x64x128xbf16> to vector<64x128xbf16>
    %c4 = arith.constant 4 : index
    %c0_25 = arith.constant 0 : index
    %c0_26 = arith.constant 0 : index
    %27 = vector.load %arg4[%c4, %c0_25, %c0_26] : memref<7x128x128xbf16, #tpu.memory_space<vmem>>, vector<1x128x128xbf16>
    %28 = vector.shape_cast %27 : vector<1x128x128xbf16> to vector<128x128xbf16>
    %cst_27 = arith.constant dense<0.000000e+00> : vector<64x128xf32>
    %29 = tpu.matmul %26, %28, %cst_27 {dimension_numbers = #tpu.dot_dimension_numbers<[1], [0], [0], [1], [0, 0, 1, 1], [], []>} : vector<64x128xbf16>, vector<128x128xbf16>, vector<64x128xf32> -> vector<64x128xf32>
    %30 = arith.addf %24, %29 : vector<64x128xf32>
    %c0_28 = arith.constant 0 : index
    %c16_29 = arith.constant 16 : index
    %c0_30 = arith.constant 0 : index
    %31 = vector.load %arg3[%c0_28, %c16_29, %c0_30] : memref<1x88x128xbf16, #tpu.memory_space<vmem>>, vector<1x64x128xbf16>
    %32 = vector.shape_cast %31 : vector<1x64x128xbf16> to vector<64x128xbf16>
    %c5 = arith.constant 5 : index
    %c0_31 = arith.constant 0 : index
    %c0_32 = arith.constant 0 : index
    %33 = vector.load %arg4[%c5, %c0_31, %c0_32] : memref<7x128x128xbf16, #tpu.memory_space<vmem>>, vector<1x128x128xbf16>
    %34 = vector.shape_cast %33 : vector<1x128x128xbf16> to vector<128x128xbf16>
    %cst_33 = arith.constant dense<0.000000e+00> : vector<64x128xf32>
    %35 = tpu.matmul %32, %34, %cst_33 {dimension_numbers = #tpu.dot_dimension_numbers<[1], [0], [0], [1], [0, 0, 1, 1], [], []>} : vector<64x128xbf16>, vector<128x128xbf16>, vector<64x128xf32> -> vector<64x128xf32>
    %36 = arith.addf %30, %35 : vector<64x128xf32>
    %c0_34 = arith.constant 0 : index
    %c24 = arith.constant 24 : index
    %c0_35 = arith.constant 0 : index
    %37 = vector.load %arg2[%c0_34, %c24, %c0_35] : memref<1x88x128xbf16, #tpu.memory_space<vmem>>, vector<1x64x128xbf16>
    %38 = vector.shape_cast %37 : vector<1x64x128xbf16> to vector<64x128xbf16>
    %c6 = arith.constant 6 : index
    %c0_36 = arith.constant 0 : index
    %c0_37 = arith.constant 0 : index
    %39 = vector.load %arg4[%c6, %c0_36, %c0_37] : memref<7x128x128xbf16, #tpu.memory_space<vmem>>, vector<1x128x128xbf16>
    %40 = vector.shape_cast %39 : vector<1x128x128xbf16> to vector<128x128xbf16>
    %cst_38 = arith.constant dense<0.000000e+00> : vector<64x128xf32>
    %41 = tpu.matmul %38, %40, %cst_38 {dimension_numbers = #tpu.dot_dimension_numbers<[1], [0], [0], [1], [0, 0, 1, 1], [], []>} : vector<64x128xbf16>, vector<128x128xbf16>, vector<64x128xf32> -> vector<64x128xf32>
    %42 = arith.addf %36, %41 : vector<64x128xf32>
    %c0_39 = arith.constant 0 : index
    %c0_40 = arith.constant 0 : index
    %43 = vector.load %arg5[%c0_39, %c0_40] : memref<1x128xf32, #tpu.memory_space<vmem>>, vector<1x128xf32>
    %44 = vector.broadcast %43 : vector<1x128xf32> to vector<64x128xf32>
    %45 = arith.addf %42, %44 : vector<64x128xf32>
    %46 = tpu.iota {dimensions = array<i32: 1>} : vector<64x128xi32>
    %c64_i32 = arith.constant 64 : i32
    %47 = vector.broadcast %c64_i32 : i32 to vector<64x128xi32>
    %48 = arith.cmpi slt, %46, %47 : vector<64x128xi32>
    %cst_41 = arith.constant 0.000000e+00 : f32
    %49 = vector.broadcast %cst_41 : f32 to vector<64x128xf32>
    %50 = arith.maximumf %45, %49 : vector<64x128xf32>
    %51 = arith.select %48, %50, %45 : vector<64x128xi1>, vector<64x128xf32>
    %52 = arith.truncf %51 : vector<64x128xf32> to vector<64x128xbf16>
    %c0_42 = arith.constant 0 : index
    %c0_43 = arith.constant 0 : index
    %c0_44 = arith.constant 0 : index
    %53 = vector.load %arg6[%c0_42, %c0_43, %c0_44] : memref<1x64x128xbf16, #tpu.memory_space<vmem>>, vector<1x64x128xbf16>
    %54 = vector.shape_cast %53 : vector<1x64x128xbf16> to vector<64x128xbf16>
    %55 = vector.shape_cast %52 : vector<64x128xbf16> to vector<1x64x128xbf16>
    tpu.vector_store %arg6[%c0_42, %c0_43, %c0_44], %55 {strides = array<i32>} : memref<1x64x128xbf16, #tpu.memory_space<vmem>>, vector<1x64x128xbf16>,
    return
  }
  func.func @transform_0(%arg0: i32, %arg1: i32) -> (i32, i32, i32) {
    %c0_i32 = arith.constant 0 : i32
    %c0_i32_0 = arith.constant 0 : i32
    %c0_i32_1 = arith.constant 0 : i32
    return %arg0, %c0_i32, %c0_i32_0 : i32, i32, i32
  }
  func.func @transform_1(%arg0: i32, %arg1: i32) -> (i32, i32, i32) {
    %c0_i32 = arith.constant 0 : i32
    %c0_i32_0 = arith.constant 0 : i32
    %c0_i32_1 = arith.constant 0 : i32
    return %arg0, %c0_i32, %c0_i32_0 : i32, i32, i32
  }
  func.func @transform_2(%arg0: i32, %arg1: i32) -> (i32, i32, i32) {
    %c0_i32 = arith.constant 0 : i32
    %c0_i32_0 = arith.constant 0 : i32
    %c0_i32_1 = arith.constant 0 : i32
    %c0_i32_2 = arith.constant 0 : i32
    return %c0_i32, %c0_i32_0, %c0_i32_1 : i32, i32, i32
  }
  func.func @transform_3(%arg0: i32, %arg1: i32) -> (i32, i32) {
    %c0_i32 = arith.constant 0 : i32
    %c0_i32_0 = arith.constant 0 : i32
    %c0_i32_1 = arith.constant 0 : i32
    return %c0_i32, %c0_i32_0 : i32, i32
  }
  func.func @transform_4(%arg0: i32, %arg1: i32) -> (i32, i32, i32) {
    %c0_i32 = arith.constant 0 : i32
    %c0_i32_0 = arith.constant 0 : i32
    return %arg0, %arg1, %c0_i32 : i32, i32, i32
  }
}

module attributes {stable_mosaic.version = 11 : i64} {
  func.func @_maxpool_kernel(%arg0: i32, %arg1: memref<1x4x4x128xbf16, #tpu.memory_space<vmem>>, %arg2: memref<1x4x5x128xbf16, #tpu.memory_space<vmem>>, %arg3: memref<1x5x4x128xbf16, #tpu.memory_space<vmem>>, %arg4: memref<1x5x5x128xbf16, #tpu.memory_space<vmem>>, %arg5: memref<1x4x4x128xbf16, #tpu.memory_space<vmem>>) attributes {dimension_semantics = [#tpu.dimension_semantics<parallel>], iteration_bounds = array<i64: 2>, scalar_prefetch = 0 : i64, scratch_operands = 0 : i64, tpu.core_type = #tpu.core_type<tc>, window_params = [{transform_indices = @transform_0, window_bounds = array<i64: 1, 4, 4, 128>}, {transform_indices = @transform_1, window_bounds = array<i64: 1, 4, 5, 128>}, {transform_indices = @transform_2, window_bounds = array<i64: 1, 5, 4, 128>}, {transform_indices = @transform_3, window_bounds = array<i64: 1, 5, 5, 128>}, {transform_indices = @transform_4, window_bounds = array<i64: 1, 4, 4, 128>}]} {
    %c0 = arith.constant 0 : index
    %c0_0 = arith.constant 0 : index
    %c0_1 = arith.constant 0 : index
    %c0_2 = arith.constant 0 : index
    %0 = vector.load %arg1[%c0, %c0_0, %c0_1, %c0_2] : memref<1x4x4x128xbf16, #tpu.memory_space<vmem>>, vector<1x4x4x128xbf16>
    %1 = vector.shape_cast %0 : vector<1x4x4x128xbf16> to vector<4x4x128xbf16>
    %2 = arith.extf %1 : vector<4x4x128xbf16> to vector<4x4x128xf32>
    %c0_3 = arith.constant 0 : index
    %c0_4 = arith.constant 0 : index
    %c0_5 = arith.constant 0 : index
    %c0_6 = arith.constant 0 : index
    %3 = vector.load %arg2[%c0_3, %c0_4, %c0_5, %c0_6] : memref<1x4x5x128xbf16, #tpu.memory_space<vmem>>, vector<1x4x5x128xbf16>
    %4 = vector.shape_cast %3 : vector<1x4x5x128xbf16> to vector<4x5x128xbf16>
    %5 = arith.extf %4 : vector<4x5x128xbf16> to vector<4x5x128xf32>
    %c0_7 = arith.constant 0 : index
    %c0_8 = arith.constant 0 : index
    %c0_9 = arith.constant 0 : index
    %c0_10 = arith.constant 0 : index
    %6 = vector.load %arg3[%c0_7, %c0_8, %c0_9, %c0_10] : memref<1x5x4x128xbf16, #tpu.memory_space<vmem>>, vector<1x5x4x128xbf16>
    %7 = vector.shape_cast %6 : vector<1x5x4x128xbf16> to vector<5x4x128xbf16>
    %8 = arith.extf %7 : vector<5x4x128xbf16> to vector<5x4x128xf32>
    %c0_11 = arith.constant 0 : index
    %c0_12 = arith.constant 0 : index
    %c0_13 = arith.constant 0 : index
    %c0_14 = arith.constant 0 : index
    %9 = vector.load %arg4[%c0_11, %c0_12, %c0_13, %c0_14] : memref<1x5x5x128xbf16, #tpu.memory_space<vmem>>, vector<1x5x5x128xbf16>
    %10 = vector.shape_cast %9 : vector<1x5x5x128xbf16> to vector<5x5x128xbf16>
    %11 = arith.extf %10 : vector<5x5x128xbf16> to vector<5x5x128xf32>
    %12 = vector.extract_strided_slice %5 {offsets = [0, 1, 0], sizes = [4, 4, 128], strides = [1, 1, 1]} : vector<4x5x128xf32> to vector<4x4x128xf32>
    %13 = arith.maximumf %2, %12 : vector<4x4x128xf32>
    %14 = vector.extract_strided_slice %5 {offsets = [0, 0, 0], sizes = [4, 4, 128], strides = [1, 1, 1]} : vector<4x5x128xf32> to vector<4x4x128xf32>
    %15 = arith.maximumf %13, %14 : vector<4x4x128xf32>
    %16 = vector.extract_strided_slice %8 {offsets = [1, 0, 0], sizes = [4, 4, 128], strides = [1, 1, 1]} : vector<5x4x128xf32> to vector<4x4x128xf32>
    %17 = arith.maximumf %15, %16 : vector<4x4x128xf32>
    %18 = vector.extract_strided_slice %8 {offsets = [0, 0, 0], sizes = [4, 4, 128], strides = [1, 1, 1]} : vector<5x4x128xf32> to vector<4x4x128xf32>
    %19 = arith.maximumf %17, %18 : vector<4x4x128xf32>
    %20 = vector.extract_strided_slice %11 {offsets = [1, 1, 0], sizes = [4, 4, 128], strides = [1, 1, 1]} : vector<5x5x128xf32> to vector<4x4x128xf32>
    %21 = arith.maximumf %19, %20 : vector<4x4x128xf32>
    %22 = vector.extract_strided_slice %11 {offsets = [1, 0, 0], sizes = [4, 4, 128], strides = [1, 1, 1]} : vector<5x5x128xf32> to vector<4x4x128xf32>
    %23 = arith.maximumf %21, %22 : vector<4x4x128xf32>
    %24 = vector.extract_strided_slice %11 {offsets = [0, 1, 0], sizes = [4, 4, 128], strides = [1, 1, 1]} : vector<5x5x128xf32> to vector<4x4x128xf32>
    %25 = arith.maximumf %23, %24 : vector<4x4x128xf32>
    %26 = vector.extract_strided_slice %11 {offsets = [0, 0, 0], sizes = [4, 4, 128], strides = [1, 1, 1]} : vector<5x5x128xf32> to vector<4x4x128xf32>
    %27 = arith.maximumf %25, %26 : vector<4x4x128xf32>
    %28 = arith.truncf %27 : vector<4x4x128xf32> to vector<4x4x128xbf16>
    %c0_15 = arith.constant 0 : index
    %c0_16 = arith.constant 0 : index
    %c0_17 = arith.constant 0 : index
    %c0_18 = arith.constant 0 : index
    %29 = vector.load %arg5[%c0_15, %c0_16, %c0_17, %c0_18] : memref<1x4x4x128xbf16, #tpu.memory_space<vmem>>, vector<1x4x4x128xbf16>
    %30 = vector.shape_cast %29 : vector<1x4x4x128xbf16> to vector<4x4x128xbf16>
    %31 = vector.shape_cast %28 : vector<4x4x128xbf16> to vector<1x4x4x128xbf16>
    tpu.vector_store %arg5[%c0_15, %c0_16, %c0_17, %c0_18], %31 {strides = array<i32>} : memref<1x4x4x128xbf16, #tpu.memory_space<vmem>>, vector<1x4x4x128xbf16>,
    return
  }
  func.func @transform_0(%arg0: i32) -> (i32, i32, i32, i32) {
    %c0_i32 = arith.constant 0 : i32
    %c0_i32_0 = arith.constant 0 : i32
    %c0_i32_1 = arith.constant 0 : i32
    %c0_i32_2 = arith.constant 0 : i32
    return %arg0, %c0_i32, %c0_i32_0, %c0_i32_1 : i32, i32, i32, i32
  }
  func.func @transform_1(%arg0: i32) -> (i32, i32, i32, i32) {
    %c0_i32 = arith.constant 0 : i32
    %c0_i32_0 = arith.constant 0 : i32
    %c0_i32_1 = arith.constant 0 : i32
    %c0_i32_2 = arith.constant 0 : i32
    return %arg0, %c0_i32, %c0_i32_0, %c0_i32_1 : i32, i32, i32, i32
  }
  func.func @transform_2(%arg0: i32) -> (i32, i32, i32, i32) {
    %c0_i32 = arith.constant 0 : i32
    %c0_i32_0 = arith.constant 0 : i32
    %c0_i32_1 = arith.constant 0 : i32
    %c0_i32_2 = arith.constant 0 : i32
    return %arg0, %c0_i32, %c0_i32_0, %c0_i32_1 : i32, i32, i32, i32
  }
  func.func @transform_3(%arg0: i32) -> (i32, i32, i32, i32) {
    %c0_i32 = arith.constant 0 : i32
    %c0_i32_0 = arith.constant 0 : i32
    %c0_i32_1 = arith.constant 0 : i32
    %c0_i32_2 = arith.constant 0 : i32
    return %arg0, %c0_i32, %c0_i32_0, %c0_i32_1 : i32, i32, i32, i32
  }
  func.func @transform_4(%arg0: i32) -> (i32, i32, i32, i32) {
    %c0_i32 = arith.constant 0 : i32
    %c0_i32_0 = arith.constant 0 : i32
    %c0_i32_1 = arith.constant 0 : i32
    %c0_i32_2 = arith.constant 0 : i32
    return %arg0, %c0_i32, %c0_i32_0, %c0_i32_1 : i32, i32, i32, i32
  }
}

module attributes {stable_mosaic.version = 11 : i64} {
  func.func @_conv7_kernel(%arg0: i32, %arg1: i32, %arg2: memref<1x10x896xbf16, #tpu.memory_space<vmem>>, %arg3: memref<1x10x896xbf16, #tpu.memory_space<vmem>>, %arg4: memref<7x896x128xbf16, #tpu.memory_space<vmem>>, %arg5: memref<1x128xf32, #tpu.memory_space<vmem>>, %arg6: memref<1x4x128xf32, #tpu.memory_space<vmem>>) attributes {dimension_semantics = [#tpu.dimension_semantics<parallel>, #tpu.dimension_semantics<parallel>], iteration_bounds = array<i64: 2, 1>, scalar_prefetch = 0 : i64, scratch_operands = 0 : i64, tpu.core_type = #tpu.core_type<tc>, window_params = [{transform_indices = @transform_0, window_bounds = array<i64: 1, 10, 896>}, {transform_indices = @transform_1, window_bounds = array<i64: 1, 10, 896>}, {pipeline_mode = #tpu.pipeline_mode<synchronous>, transform_indices = @transform_2, window_bounds = array<i64: 7, 896, 128>}, {pipeline_mode = #tpu.pipeline_mode<synchronous>, transform_indices = @transform_3, window_bounds = array<i64: 1, 128>}, {transform_indices = @transform_4, window_bounds = array<i64: 1, 4, 128>}]} {
    %cst = arith.constant 0.000000e+00 : f32
    %0 = vector.broadcast %cst : f32 to vector<4x128xf32>
    %c0 = arith.constant 0 : index
    %c0_0 = arith.constant 0 : index
    %c0_1 = arith.constant 0 : index
    %1 = vector.load %arg2[%c0, %c0_0, %c0_1] : memref<1x10x896xbf16, #tpu.memory_space<vmem>>, vector<1x4x896xbf16>
    %2 = vector.shape_cast %1 : vector<1x4x896xbf16> to vector<4x896xbf16>
    %c0_2 = arith.constant 0 : index
    %c0_3 = arith.constant 0 : index
    %c0_4 = arith.constant 0 : index
    %3 = vector.load %arg4[%c0_2, %c0_3, %c0_4] : memref<7x896x128xbf16, #tpu.memory_space<vmem>>, vector<1x896x128xbf16>
    %4 = vector.shape_cast %3 : vector<1x896x128xbf16> to vector<896x128xbf16>
    %cst_5 = arith.constant dense<0.000000e+00> : vector<4x128xf32>
    %5 = tpu.matmul %2, %4, %cst_5 {dimension_numbers = #tpu.dot_dimension_numbers<[1], [0], [0], [1], [0, 0, 1, 1], [], []>} : vector<4x896xbf16>, vector<896x128xbf16>, vector<4x128xf32> -> vector<4x128xf32>
    %6 = arith.addf %0, %5 : vector<4x128xf32>
    %c0_6 = arith.constant 0 : index
    %c0_7 = arith.constant 0 : index
    %c0_8 = arith.constant 0 : index
    %7 = vector.load %arg3[%c0_6, %c0_7, %c0_8] : memref<1x10x896xbf16, #tpu.memory_space<vmem>>, vector<1x4x896xbf16>
    %8 = vector.shape_cast %7 : vector<1x4x896xbf16> to vector<4x896xbf16>
    %c1 = arith.constant 1 : index
    %c0_9 = arith.constant 0 : index
    %c0_10 = arith.constant 0 : index
    %9 = vector.load %arg4[%c1, %c0_9, %c0_10] : memref<7x896x128xbf16, #tpu.memory_space<vmem>>, vector<1x896x128xbf16>
    %10 = vector.shape_cast %9 : vector<1x896x128xbf16> to vector<896x128xbf16>
    %cst_11 = arith.constant dense<0.000000e+00> : vector<4x128xf32>
    %11 = tpu.matmul %8, %10, %cst_11 {dimension_numbers = #tpu.dot_dimension_numbers<[1], [0], [0], [1], [0, 0, 1, 1], [], []>} : vector<4x896xbf16>, vector<896x128xbf16>, vector<4x128xf32> -> vector<4x128xf32>
    %12 = arith.addf %6, %11 : vector<4x128xf32>
    %c0_12 = arith.constant 0 : index
    %c2 = arith.constant 2 : index
    %c0_13 = arith.constant 0 : index
    %13 = vector.load %arg2[%c0_12, %c2, %c0_13] : memref<1x10x896xbf16, #tpu.memory_space<vmem>>, vector<1x4x896xbf16>
    %14 = vector.shape_cast %13 : vector<1x4x896xbf16> to vector<4x896xbf16>
    %c2_14 = arith.constant 2 : index
    %c0_15 = arith.constant 0 : index
    %c0_16 = arith.constant 0 : index
    %15 = vector.load %arg4[%c2_14, %c0_15, %c0_16] : memref<7x896x128xbf16, #tpu.memory_space<vmem>>, vector<1x896x128xbf16>
    %16 = vector.shape_cast %15 : vector<1x896x128xbf16> to vector<896x128xbf16>
    %cst_17 = arith.constant dense<0.000000e+00> : vector<4x128xf32>
    %17 = tpu.matmul %14, %16, %cst_17 {dimension_numbers = #tpu.dot_dimension_numbers<[1], [0], [0], [1], [0, 0, 1, 1], [], []>} : vector<4x896xbf16>, vector<896x128xbf16>, vector<4x128xf32> -> vector<4x128xf32>
    %18 = arith.addf %12, %17 : vector<4x128xf32>
    %c0_18 = arith.constant 0 : index
    %c2_19 = arith.constant 2 : index
    %c0_20 = arith.constant 0 : index
    %19 = vector.load %arg3[%c0_18, %c2_19, %c0_20] : memref<1x10x896xbf16, #tpu.memory_space<vmem>>, vector<1x4x896xbf16>
    %20 = vector.shape_cast %19 : vector<1x4x896xbf16> to vector<4x896xbf16>
    %c3 = arith.constant 3 : index
    %c0_21 = arith.constant 0 : index
    %c0_22 = arith.constant 0 : index
    %21 = vector.load %arg4[%c3, %c0_21, %c0_22] : memref<7x896x128xbf16, #tpu.memory_space<vmem>>, vector<1x896x128xbf16>
    %22 = vector.shape_cast %21 : vector<1x896x128xbf16> to vector<896x128xbf16>
    %cst_23 = arith.constant dense<0.000000e+00> : vector<4x128xf32>
    %23 = tpu.matmul %20, %22, %cst_23 {dimension_numbers = #tpu.dot_dimension_numbers<[1], [0], [0], [1], [0, 0, 1, 1], [], []>} : vector<4x896xbf16>, vector<896x128xbf16>, vector<4x128xf32> -> vector<4x128xf32>
    %24 = arith.addf %18, %23 : vector<4x128xf32>
    %c0_24 = arith.constant 0 : index
    %c4 = arith.constant 4 : index
    %c0_25 = arith.constant 0 : index
    %25 = vector.load %arg2[%c0_24, %c4, %c0_25] : memref<1x10x896xbf16, #tpu.memory_space<vmem>>, vector<1x4x896xbf16>
    %26 = vector.shape_cast %25 : vector<1x4x896xbf16> to vector<4x896xbf16>
    %c4_26 = arith.constant 4 : index
    %c0_27 = arith.constant 0 : index
    %c0_28 = arith.constant 0 : index
    %27 = vector.load %arg4[%c4_26, %c0_27, %c0_28] : memref<7x896x128xbf16, #tpu.memory_space<vmem>>, vector<1x896x128xbf16>
    %28 = vector.shape_cast %27 : vector<1x896x128xbf16> to vector<896x128xbf16>
    %cst_29 = arith.constant dense<0.000000e+00> : vector<4x128xf32>
    %29 = tpu.matmul %26, %28, %cst_29 {dimension_numbers = #tpu.dot_dimension_numbers<[1], [0], [0], [1], [0, 0, 1, 1], [], []>} : vector<4x896xbf16>, vector<896x128xbf16>, vector<4x128xf32> -> vector<4x128xf32>
    %30 = arith.addf %24, %29 : vector<4x128xf32>
    %c0_30 = arith.constant 0 : index
    %c4_31 = arith.constant 4 : index
    %c0_32 = arith.constant 0 : index
    %31 = vector.load %arg3[%c0_30, %c4_31, %c0_32] : memref<1x10x896xbf16, #tpu.memory_space<vmem>>, vector<1x4x896xbf16>
    %32 = vector.shape_cast %31 : vector<1x4x896xbf16> to vector<4x896xbf16>
    %c5 = arith.constant 5 : index
    %c0_33 = arith.constant 0 : index
    %c0_34 = arith.constant 0 : index
    %33 = vector.load %arg4[%c5, %c0_33, %c0_34] : memref<7x896x128xbf16, #tpu.memory_space<vmem>>, vector<1x896x128xbf16>
    %34 = vector.shape_cast %33 : vector<1x896x128xbf16> to vector<896x128xbf16>
    %cst_35 = arith.constant dense<0.000000e+00> : vector<4x128xf32>
    %35 = tpu.matmul %32, %34, %cst_35 {dimension_numbers = #tpu.dot_dimension_numbers<[1], [0], [0], [1], [0, 0, 1, 1], [], []>} : vector<4x896xbf16>, vector<896x128xbf16>, vector<4x128xf32> -> vector<4x128xf32>
    %36 = arith.addf %30, %35 : vector<4x128xf32>
    %c0_36 = arith.constant 0 : index
    %c6 = arith.constant 6 : index
    %c0_37 = arith.constant 0 : index
    %37 = vector.load %arg2[%c0_36, %c6, %c0_37] : memref<1x10x896xbf16, #tpu.memory_space<vmem>>, vector<1x4x896xbf16>
    %38 = vector.shape_cast %37 : vector<1x4x896xbf16> to vector<4x896xbf16>
    %c6_38 = arith.constant 6 : index
    %c0_39 = arith.constant 0 : index
    %c0_40 = arith.constant 0 : index
    %39 = vector.load %arg4[%c6_38, %c0_39, %c0_40] : memref<7x896x128xbf16, #tpu.memory_space<vmem>>, vector<1x896x128xbf16>
    %40 = vector.shape_cast %39 : vector<1x896x128xbf16> to vector<896x128xbf16>
    %cst_41 = arith.constant dense<0.000000e+00> : vector<4x128xf32>
    %41 = tpu.matmul %38, %40, %cst_41 {dimension_numbers = #tpu.dot_dimension_numbers<[1], [0], [0], [1], [0, 0, 1, 1], [], []>} : vector<4x896xbf16>, vector<896x128xbf16>, vector<4x128xf32> -> vector<4x128xf32>
    %42 = arith.addf %36, %41 : vector<4x128xf32>
    %c0_42 = arith.constant 0 : index
    %c0_43 = arith.constant 0 : index
    %43 = vector.load %arg5[%c0_42, %c0_43] : memref<1x128xf32, #tpu.memory_space<vmem>>, vector<1x128xf32>
    %44 = vector.broadcast %43 : vector<1x128xf32> to vector<4x128xf32>
    %45 = arith.addf %42, %44 : vector<4x128xf32>
    %c0_44 = arith.constant 0 : index
    %c0_45 = arith.constant 0 : index
    %c0_46 = arith.constant 0 : index
    %46 = vector.load %arg6[%c0_44, %c0_45, %c0_46] : memref<1x4x128xf32, #tpu.memory_space<vmem>>, vector<1x4x128xf32>
    %47 = vector.shape_cast %46 : vector<1x4x128xf32> to vector<4x128xf32>
    %48 = vector.shape_cast %45 : vector<4x128xf32> to vector<1x4x128xf32>
    tpu.vector_store %arg6[%c0_44, %c0_45, %c0_46], %48 {strides = array<i32>} : memref<1x4x128xf32, #tpu.memory_space<vmem>>, vector<1x4x128xf32>,
    return
  }
  func.func @transform_0(%arg0: i32, %arg1: i32) -> (i32, i32, i32) {
    %c0_i32 = arith.constant 0 : i32
    %c0_i32_0 = arith.constant 0 : i32
    %c0_i32_1 = arith.constant 0 : i32
    return %arg0, %c0_i32, %c0_i32_0 : i32, i32, i32
  }
  func.func @transform_1(%arg0: i32, %arg1: i32) -> (i32, i32, i32) {
    %c0_i32 = arith.constant 0 : i32
    %c0_i32_0 = arith.constant 0 : i32
    %c0_i32_1 = arith.constant 0 : i32
    return %arg0, %c0_i32, %c0_i32_0 : i32, i32, i32
  }
  func.func @transform_2(%arg0: i32, %arg1: i32) -> (i32, i32, i32) {
    %c0_i32 = arith.constant 0 : i32
    %c0_i32_0 = arith.constant 0 : i32
    %c0_i32_1 = arith.constant 0 : i32
    %c0_i32_2 = arith.constant 0 : i32
    return %c0_i32, %c0_i32_0, %c0_i32_1 : i32, i32, i32
  }
  func.func @transform_3(%arg0: i32, %arg1: i32) -> (i32, i32) {
    %c0_i32 = arith.constant 0 : i32
    %c0_i32_0 = arith.constant 0 : i32
    %c0_i32_1 = arith.constant 0 : i32
    return %c0_i32, %c0_i32_0 : i32, i32
  }
  func.func @transform_4(%arg0: i32, %arg1: i32) -> (i32, i32, i32) {
    %c0_i32 = arith.constant 0 : i32
    %c0_i32_0 = arith.constant 0 : i32
    return %arg0, %arg1, %c0_i32 : i32, i32, i32
  }
}

</mosaic_0001>

<llo_original>
// kernel: conv_maxpool2d_forward.4
$region0: #{conv_maxpool2d_forward.4}
  #allocation0 [shape = 'u32[]', space=smem, size = 0x4, offset = 0x4, fixed_abs, tag = 'smem constant byte address 0x4 - core index']
  #allocation1 [shape = 'u32[144,128]{1,0:T(1,128)}', space=vmem, size = 0x12000, scoped, tag = 'internal scratch']
  %s0 = inlined_call_operand.vmem [shape: bf16[2,4,4,128], index: 0, kind: input, shape index: {}]
  %s1 = inlined_call_operand.vmem [shape: bf16[2,4,5,128], index: 1, kind: input, shape index: {}]
  %s2 = inlined_call_operand.vmem [shape: bf16[2,5,4,128], index: 2, kind: input, shape index: {}]
  %s3 = inlined_call_operand.vmem [shape: bf16[2,5,5,128], index: 3, kind: input, shape index: {}]
  %s4 = inlined_call_operand.vmem [shape: bf16[2,4,4,128], index: 4, kind: output, shape index: {}]
  %s5 = sld [smem:[#allocation0]]
  $region49: #{conv_maxpool2d_forward.4} parent=0
    _
  %s7 = ssub.s32 1, %s5
  %s8 = scalar_select 0, %s7, %s5
  loop: start=0, step=1, limit=4
  $region2: #{conv_maxpool2d_forward.4} parent=0 // loop_pre_header
    _
  $region3: #{conv_maxpool2d_forward.4} parent=0 // loop_header
    %s10 = sphi 0, %s14
    %p11 = scmp.ge.s32.totalorder %s10, 4
    %s20 = sphi 0, %s22
    %s23 = sphi 0, %s20
    %s24 = sphi 0, %s23
    %s40 = sphi 0, %s24
    %s46 = sphi 0, %s48
    %s49 = sphi 0, %s46
    %s50 = sphi 0, %s49
    %s66 = sphi 0, %s50
    %s72 = sphi 0, %s74
    %s75 = sphi 0, %s72
    %s76 = sphi 0, %s75
    %s92 = sphi 0, %s76
    %s98 = sphi 0, %s100
    %s101 = sphi 0, %s98
    %s102 = sphi 0, %s101
    %s118 = sphi 0, %s102
    %s124 = sphi 0, %s126
    %s127 = sphi 0, %s124
    %s128 = sphi 0, %s127
    %s144 = sphi 0, %s128
  $region4: #{conv_maxpool2d_forward.4} parent=0 // loop_header_branch
    %13 = sbr.rel (%p11) target = $region8
  $region5: #{conv_maxpool2d_forward.4} parent=0 // loop_body
    %s15 = ssub.s32 %s10, 1
    %s16 = ssub.s32 %s10, 2
    %s17 = sadd.s32 %s10, 1
    %s18 = ssub.s32 %s10, %s17
    %p19 = scmp.eq.s32.totalorder %s18, 0
    %s21 = sadd.s32 %s20, 1
    %s22 = scalar_select %p19, %s20, %s21
    %p25 = pneg %p19
    %p26 = scmp.eq.s32.totalorder %s10, 1
    %p27 = por %p25, %p26
    %p28 = scmp.ne.s32.totalorder %s20, %s23
    %p29 = scmp.eq.s32.totalorder %s10, 0
    %p30 = por %p28, %p29
    %p31 = scmp.ne.s32.totalorder %s20, %s23
    %p32 = scmp.eq.s32.totalorder %s15, 1
    %p33 = por %p31, %p32
    %p34 = scmp.ne.s32.totalorder %s23, %s24
    %p35 = scmp.eq.s32.totalorder %s15, 0
    %p36 = por %p34, %p35
    %p37 = scmp.ne.s32.totalorder %s23, %s24
    %p38 = scmp.eq.s32.totalorder %s16, 1
    %p39 = por %p37, %p38
    %p41 = scmp.ne.s32.totalorder %s24, %s40
    %p42 = scmp.eq.s32.totalorder %s16, 0
    %p43 = por %p41, %p42
    %s44 = ssub.s32 %s10, %s17
    %p45 = scmp.eq.s32.totalorder %s44, 0
    %s47 = sadd.s32 %s46, 1
    %s48 = scalar_select %p45, %s46, %s47
    %p51 = pneg %p45
    %p52 = scmp.eq.s32.totalorder %s10, 1
    %p53 = por %p51, %p52
    %p54 = scmp.ne.s32.totalorder %s46, %s49
    %p55 = scmp.eq.s32.totalorder %s10, 0
    %p56 = por %p54, %p55
    %p57 = scmp.ne.s32.totalorder %s46, %s49
    %p58 = scmp.eq.s32.totalorder %s15, 1
    %p59 = por %p57, %p58
    %p60 = scmp.ne.s32.totalorder %s49, %s50
    %p61 = scmp.eq.s32.totalorder %s15, 0
    %p62 = por %p60, %p61
    %p63 = scmp.ne.s32.totalorder %s49, %s50
    %p64 = scmp.eq.s32.totalorder %s16, 1
    %p65 = por %p63, %p64
    %p67 = scmp.ne.s32.totalorder %s50, %s66
    %p68 = scmp.eq.s32.totalorder %s16, 0
    %p69 = por %p67, %p68
    %s70 = ssub.s32 %s10, %s17
    %p71 = scmp.eq.s32.totalorder %s70, 0
    %s73 = sadd.s32 %s72, 1
    %s74 = scalar_select %p71, %s72, %s73
    %p77 = pneg %p71
    %p78 = scmp.eq.s32.totalorder %s10, 1
    %p79 = por %p77, %p78
    %p80 = scmp.ne.s32.totalorder %s72, %s75
    %p81 = scmp.eq.s32.totalorder %s10, 0
    %p82 = por %p80, %p81
    %p83 = scmp.ne.s32.totalorder %s72, %s75
    %p84 = scmp.eq.s32.totalorder %s15, 1
    %p85 = por %p83, %p84
    %p86 = scmp.ne.s32.totalorder %s75, %s76
    %p87 = scmp.eq.s32.totalorder %s15, 0
    %p88 = por %p86, %p87
    %p89 = scmp.ne.s32.totalorder %s75, %s76
    %p90 = scmp.eq.s32.totalorder %s16, 1
    %p91 = por %p89, %p90
    %p93 = scmp.ne.s32.totalorder %s76, %s92
    %p94 = scmp.eq.s32.totalorder %s16, 0
    %p95 = por %p93, %p94
    %s96 = ssub.s32 %s10, %s17
    %p97 = scmp.eq.s32.totalorder %s96, 0
    %s99 = sadd.s32 %s98, 1
    %s100 = scalar_select %p97, %s98, %s99
    %p103 = pneg %p97
    %p104 = scmp.eq.s32.totalorder %s10, 1
    %p105 = por %p103, %p104
    %p106 = scmp.ne.s32.totalorder %s98, %s101
    %p107 = scmp.eq.s32.totalorder %s10, 0
    %p108 = por %p106, %p107
    %p109 = scmp.ne.s32.totalorder %s98, %s101
    %p110 = scmp.eq.s32.totalorder %s15, 1
    %p111 = por %p109, %p110
    %p112 = scmp.ne.s32.totalorder %s101, %s102
    %p113 = scmp.eq.s32.totalorder %s15, 0
    %p114 = por %p112, %p113
    %p115 = scmp.ne.s32.totalorder %s101, %s102
    %p116 = scmp.eq.s32.totalorder %s16, 1
    %p117 = por %p115, %p116
    %p119 = scmp.ne.s32.totalorder %s102, %s118
    %p120 = scmp.eq.s32.totalorder %s16, 0
    %p121 = por %p119, %p120
    %s122 = ssub.s32 %s10, %s17
    %p123 = scmp.eq.s32.totalorder %s122, 0
    %s125 = sadd.s32 %s124, 1
    %s126 = scalar_select %p123, %s124, %s125
    %p129 = pneg %p123
    %p130 = scmp.eq.s32.totalorder %s10, 1
    %p131 = por %p129, %p130
    %p132 = scmp.ne.s32.totalorder %s124, %s127
    %p133 = scmp.eq.s32.totalorder %s10, 0
    %p134 = por %p132, %p133
    %p135 = scmp.ne.s32.totalorder %s124, %s127
    %p136 = scmp.eq.s32.totalorder %s15, 1
    %p137 = por %p135, %p136
    %p138 = scmp.ne.s32.totalorder %s127, %s128
    %p139 = scmp.eq.s32.totalorder %s15, 0
    %p140 = por %p138, %p139
    %p141 = scmp.ne.s32.totalorder %s127, %s128
    %p142 = scmp.eq.s32.totalorder %s16, 1
    %p143 = por %p141, %p142
    %p145 = scmp.ne.s32.totalorder %s128, %s144
    %p146 = scmp.eq.s32.totalorder %s16, 0
    %p147 = por %p145, %p146
    %p148 = scmp.le.s32.totalorder 1, %s10
    %p149 = scmp.lt.s32.totalorder %s10, 3
    %p150 = pnand %p148, %p149
    %p151 = pneg %p150
    // Predicated region
    $region9: #{conv_maxpool2d_forward.4} parent=5 // pred_check
      _
    $region10: #{conv_maxpool2d_forward.4} parent=5 // pred_check_branch
      %153 = sbr.rel (%p150) target = $region12
    $region11: #{conv_maxpool2d_forward.4} parent=5 // pred_region
      %s154 = ssub.s32 %s10, 1
    $region12: #{conv_maxpool2d_forward.4} parent=5 // pred_fallthru
      _
    %p155 = scmp.lt.s32.totalorder %s10, 2
    // Predicated region
    $region13: #{conv_maxpool2d_forward.4} parent=5 // pred_check
      %p156 = pneg %p155
    $region14: #{conv_maxpool2d_forward.4} parent=5 // pred_check_branch
      %158 = sbr.rel (%p156) target = $region16
    $region15: #{conv_maxpool2d_forward.4} parent=5 // pred_region
      // Predicated region
      $region17: #{conv_maxpool2d_forward.4} parent=15 // pred_check
        %p159 = pneg %p30
      $region18: #{conv_maxpool2d_forward.4} parent=15 // pred_check_branch
        %161 = sbr.rel (%p159) target = $region20
      $region19: #{conv_maxpool2d_forward.4} parent=15 // pred_region
        %p162 = scmp.lt.s32.totalorder %s10, 1
        %s163 = scalar_select %p162, %s10, 1
        %s164 = smul.addr %s163, 4
        %s165 = smul.addr %s164, 2
        %s166 = scalar_lea.vmem %s0, %s165
      $region20: #{conv_maxpool2d_forward.4} parent=15 // pred_fallthru
        _
      // Predicated region
      $region21: #{conv_maxpool2d_forward.4} parent=15 // pred_check
        %p167 = pneg %p56
      $region22: #{conv_maxpool2d_forward.4} parent=15 // pred_check_branch
        %169 = sbr.rel (%p167) target = $region24
      $region23: #{conv_maxpool2d_forward.4} parent=15 // pred_region
        %p170 = scmp.lt.s32.totalorder %s10, 1
        %s171 = scalar_select %p170, %s10, 1
        %s172 = smul.addr %s171, 4
        %s173 = smul.addr %s172, 4
        %s174 = scalar_lea.vmem %s1, %s173
      $region24: #{conv_maxpool2d_forward.4} parent=15 // pred_fallthru
        _
      // Predicated region
      $region25: #{conv_maxpool2d_forward.4} parent=15 // pred_check
        %p175 = pneg %p82
      $region26: #{conv_maxpool2d_forward.4} parent=15 // pred_check_branch
        %177 = sbr.rel (%p175) target = $region28
      $region27: #{conv_maxpool2d_forward.4} parent=15 // pred_region
        %p178 = scmp.lt.s32.totalorder %s10, 1
        %s179 = scalar_select %p178, %s10, 1
        %s180 = smul.addr %s179, 5
        %s181 = smul.addr %s180, 2
        %s182 = scalar_lea.vmem %s2, %s181
      $region28: #{conv_maxpool2d_forward.4} parent=15 // pred_fallthru
        _
      // Predicated region
      $region29: #{conv_maxpool2d_forward.4} parent=15 // pred_check
        %p183 = pneg %p108
      $region30: #{conv_maxpool2d_forward.4} parent=15 // pred_check_branch
        %185 = sbr.rel (%p183) target = $region32
      $region31: #{conv_maxpool2d_forward.4} parent=15 // pred_region
        %p186 = scmp.lt.s32.totalorder %s10, 1
        %s187 = scalar_select %p186, %s10, 1
        %s188 = smul.addr %s187, 5
        %s189 = smul.addr %s188, 4
        %s190 = scalar_lea.vmem %s3, %s189
      $region32: #{conv_maxpool2d_forward.4} parent=15 // pred_fallthru
        _
    $region16: #{conv_maxpool2d_forward.4} parent=5 // pred_fallthru
      _
    %p191 = scmp.le.s32.totalorder 1, %s10
    %p192 = scmp.lt.s32.totalorder %s10, 3
    %p193 = pnand %p191, %p192
    %p194 = pneg %p193
    // Predicated region
    $region33: #{conv_maxpool2d_forward.4} parent=5 // pred_check
      _
    $region34: #{conv_maxpool2d_forward.4} parent=5 // pred_check_branch
      %196 = sbr.rel (%p193) target = $region36
    $region35: #{conv_maxpool2d_forward.4} parent=5 // pred_region
      %s197 = ssub.s32 %s10, 1
      %p198 = scmp.lt.s32.totalorder %s15, 1
      %s199 = scalar_select %p198, %s15, 1
      %s200 = smul.addr %s199, 4
      %s201 = smul.addr %s200, 2
      %s202 = scalar_lea.vmem %s0, %s201
      %p203 = pneg %p36
      %p204 = pneg %p33
      %p205 = scmp.lt.s32.totalorder %s15, 1
      %s206 = scalar_select %p205, %s15, 1
      %s207 = smul.addr %s206, 4
      %s208 = smul.addr %s207, 4
      %s209 = scalar_lea.vmem %s1, %s208
      %p210 = pneg %p62
      %p211 = pneg %p59
      %p212 = scmp.lt.s32.totalorder %s15, 1
      %s213 = scalar_select %p212, %s15, 1
      %s214 = smul.addr %s213, 5
      %s215 = smul.addr %s214, 2
      %s216 = scalar_lea.vmem %s2, %s215
      %p217 = pneg %p88
      %p218 = pneg %p85
      %p219 = scmp.lt.s32.totalorder %s15, 1
      %s220 = scalar_select %p219, %s15, 1
      %s221 = smul.addr %s220, 5
      %s222 = smul.addr %s221, 4
      %s223 = scalar_lea.vmem %s3, %s222
      %p224 = pneg %p114
      %p225 = pneg %p111
      %p226 = pneg %p140
      %p227 = pneg %p137
      %p228 = scmp.lt.s32.totalorder %s15, 1
      %s229 = scalar_select %p228, %s15, 1
      %s230 = smul.addr %s229, 4
      %s231 = smul.addr %s230, 2
      %s232 = scalar_lea.vmem %s4, %s231
      %p233 = scmp.lt.s32.totalorder %s15, 1
      %s234 = scalar_select %p233, %s15, 1
      %s235 = smul.addr %s234, 4
      %s236 = smul.addr %s235, 2
      %s237 = scalar_lea.vmem %s0, %s236
      %p238 = scmp.lt.s32.totalorder %s15, 1
      %s239 = scalar_select %p238, %s15, 1
      %s240 = smul.addr %s239, 4
      %s241 = smul.addr %s240, 4
      %s242 = scalar_lea.vmem %s1, %s241
      %p243 = scmp.lt.s32.totalorder %s15, 1
      %s244 = scalar_select %p243, %s15, 1
      %s245 = smul.addr %s244, 5
      %s246 = smul.addr %s245, 2
      %s247 = scalar_lea.vmem %s2, %s246
      %p248 = scmp.lt.s32.totalorder %s15, 1
      %s249 = scalar_select %p248, %s15, 1
      %s250 = smul.addr %s249, 5
      %s251 = smul.addr %s250, 4
      %s252 = scalar_lea.vmem %s3, %s251
      %p253 = scmp.lt.s32.totalorder %s15, 1
      %s254 = scalar_select %p253, %s15, 1
      %s255 = smul.addr %s254, 4
      %s256 = smul.addr %s255, 2
      %s257 = scalar_lea.vmem %s4, %s256
      %v258 = vld [vmem:[%s237] sm:$0x3]
      %v259 = vld [vmem:[%s237 + $0x2] sm:$0x3]
      %v260 = vld [vmem:[%s237 + $0x4] sm:$0x3]
      %v261 = vld [vmem:[%s237 + $0x6] sm:$0x3]
      %v262 = vunpack.c.l.bf16 %v258
      %v263 = vunpack.c.l.bf16 %v259
      %v264 = vunpack.c.l.bf16 %v260
      %v265 = vunpack.c.l.bf16 %v261
      %v266 = vld [vmem:[%s242] sm:$0x7]
      %v267 = vld [vmem:[%s242 + $0x4] sm:$0x7]
      %v268 = vld [vmem:[%s242 + $0x8] sm:$0x7]
      %v269 = vld [vmem:[%s242 + $0xc] sm:$0x7]
      %v270 = vunpack.c.l.bf16 %v266
      %v271 = vunpack.c.l.bf16 %v267
      %v272 = vunpack.c.l.bf16 %v268
      %v273 = vunpack.c.l.bf16 %v269
      %v274 = vld [vmem:[%s247] sm:$0x3]
      %v275 = vld [vmem:[%s247 + $0x2] sm:$0x3]
      %v276 = vld [vmem:[%s247 + $0x4] sm:$0x3]
      %v277 = vld [vmem:[%s247 + $0x6] sm:$0x3]
      %v278 = vld [vmem:[%s247 + $0x8] sm:$0x3]
      %v279 = vunpack.c.l.bf16 %v274
      %v280 = vunpack.c.l.bf16 %v275
      %v281 = vunpack.c.l.bf16 %v276
      %v282 = vunpack.c.l.bf16 %v277
      %v283 = vunpack.c.l.bf16 %v278
      %v284 = vld [vmem:[%s252] sm:$0x7]
      %v285 = vld [vmem:[%s252 + $0x4] sm:$0x7]
      %v286 = vld [vmem:[%s252 + $0x8] sm:$0x7]
      %v287 = vld [vmem:[%s252 + $0xc] sm:$0x7]
      %v288 = vld [vmem:[%s252 + $0x10] sm:$0x7]
      %v289 = vunpack.c.l.bf16 %v284
      %v290 = vunpack.c.l.bf16 %v285
      %v291 = vunpack.c.l.bf16 %v286
      %v292 = vunpack.c.l.bf16 %v287
      %v293 = vunpack.c.l.bf16 %v288
      %v298 = vcombine.high %v270, %v270
      %v299 = vcombine.high %v271, %v271
      %v300 = vcombine.high %v272, %v272
      %v301 = vcombine.high %v273, %v273
      %vm302 = vcmask 1042432
      %vm303 = vcmask 1046532
      %vm304 = vmor %vm302, %vm303
      %v305 = vrot.slane %v270, 5
      %v306 = vrot.slane %v305, 4
      %v307 = vrot.slane %v298, 5
      %v308 = vsel %vm304, %v306, %v307
      %v309 = vrot.slane %v271, 5
      %v310 = vrot.slane %v309, 4
      %v311 = vrot.slane %v299, 5
      %v312 = vsel %vm304, %v310, %v311
      %v313 = vrot.slane %v272, 5
      %v314 = vrot.slane %v313, 4
      %v315 = vrot.slane %v300, 5
      %v316 = vsel %vm304, %v314, %v315
      %v317 = vrot.slane %v273, 5
      %v318 = vrot.slane %v317, 4
      %v319 = vrot.slane %v301, 5
      %v320 = vsel %vm304, %v318, %v319
      %v325 = vmax.f32 %v262, %v308
      %v326 = vmax.f32 %v263, %v312
      %v327 = vmax.f32 %v264, %v316
      %v328 = vmax.f32 %v265, %v320
      %v329 = vmax.f32 %v325, %v270
      %v330 = vmax.f32 %v326, %v271
      %v331 = vmax.f32 %v327, %v272
      %v332 = vmax.f32 %v328, %v273
      %v333 = vmax.f32 %v329, %v280
      %v334 = vmax.f32 %v330, %v281
      %v335 = vmax.f32 %v331, %v282
      %v336 = vmax.f32 %v332, %v283
      %v337 = vmax.f32 %v333, %v279
      %v338 = vmax.f32 %v334, %v280
      %v339 = vmax.f32 %v335, %v281
      %v340 = vmax.f32 %v336, %v282
      %v345 = vcombine.high %v290, %v290
      %v346 = vcombine.high %v291, %v291
      %v347 = vcombine.high %v292, %v292
      %v348 = vcombine.high %v293, %v293
      %v349 = vrot.slane %v290, 5
      %v350 = vrot.slane %v349, 4
      %v351 = vrot.slane %v345, 5
      %v352 = vsel %vm304, %v350, %v351
      %v353 = vrot.slane %v291, 5
      %v354 = vrot.slane %v353, 4
      %v355 = vrot.slane %v346, 5
      %v356 = vsel %vm304, %v354, %v355
      %v357 = vrot.slane %v292, 5
      %v358 = vrot.slane %v357, 4
      %v359 = vrot.slane %v347, 5
      %v360 = vsel %vm304, %v358, %v359
      %v361 = vrot.slane %v293, 5
      %v362 = vrot.slane %v361, 4
      %v363 = vrot.slane %v348, 5
      %v364 = vsel %vm304, %v362, %v363
      %v369 = vmax.f32 %v337, %v352
      %v370 = vmax.f32 %v338, %v356
      %v371 = vmax.f32 %v339, %v360
      %v372 = vmax.f32 %v340, %v364
      %v373 = vmax.f32 %v369, %v290
      %v374 = vmax.f32 %v370, %v291
      %v375 = vmax.f32 %v371, %v292
      %v376 = vmax.f32 %v372, %v293
      %v378 = vcombine.high %v289, %v289
      %v379 = vrot.slane %v289, 5
      %v380 = vrot.slane %v379, 4
      %v381 = vrot.slane %v378, 5
      %v382 = vsel %vm304, %v380, %v381
      %v384 = vmax.f32 %v373, %v382
      %v385 = vmax.f32 %v374, %v352
      %v386 = vmax.f32 %v375, %v356
      %v387 = vmax.f32 %v376, %v360
      %v388 = vmax.f32 %v384, %v289
      %v389 = vmax.f32 %v385, %v290
      %v390 = vmax.f32 %v386, %v291
      %v391 = vmax.f32 %v387, %v292
      %v392 = vpack.c.bf16 %v388, %v388
      %v393 = vpack.c.bf16 %v389, %v389
      %v394 = vpack.c.bf16 %v390, %v390
      %v395 = vpack.c.bf16 %v391, %v391
      %396 = vst [vmem:[%s257] sm:$0x3] %v392
      %397 = vst [vmem:[%s257 + $0x2] sm:$0x3] %v393
      %398 = vst [vmem:[%s257 + $0x4] sm:$0x3] %v394
      %399 = vst [vmem:[%s257 + $0x6] sm:$0x3] %v395
      %p400 = scmp.lt.s32.totalorder %s15, 1
      %s401 = scalar_select %p400, %s15, 1
      %s402 = smul.addr %s401, 4
      %s403 = smul.addr %s402, 2
      %s404 = scalar_lea.vmem %s4, %s403
      // Predicated region
      $region37: #{conv_maxpool2d_forward.4} parent=35 // pred_check
        %p405 = pneg %p137
      $region38: #{conv_maxpool2d_forward.4} parent=35 // pred_check_branch
        %407 = sbr.rel (%p405) target = $region40
      $region39: #{conv_maxpool2d_forward.4} parent=35 // pred_region
        _
      $region40: #{conv_maxpool2d_forward.4} parent=35 // pred_fallthru
        _
    $region36: #{conv_maxpool2d_forward.4} parent=5 // pred_fallthru
      _
    %p408 = scmp.le.s32.totalorder 2, %s10
    // Predicated region
    $region41: #{conv_maxpool2d_forward.4} parent=5 // pred_check
      %p409 = pneg %p408
    $region42: #{conv_maxpool2d_forward.4} parent=5 // pred_check_branch
      %411 = sbr.rel (%p409) target = $region44
    $region43: #{conv_maxpool2d_forward.4} parent=5 // pred_region
      %s412 = ssub.s32 %s10, 2
      // Predicated region
      $region45: #{conv_maxpool2d_forward.4} parent=43 // pred_check
        %p413 = pneg %p143
      $region46: #{conv_maxpool2d_forward.4} parent=43 // pred_check_branch
        %415 = sbr.rel (%p413) target = $region48
      $region47: #{conv_maxpool2d_forward.4} parent=43 // pred_region
        %p416 = scmp.lt.s32.totalorder %s16, 1
        %s417 = scalar_select %p416, %s16, 1
        %s418 = smul.addr %s417, 4
        %s419 = smul.addr %s418, 2
        %s420 = scalar_lea.vmem %s4, %s419
      $region48: #{conv_maxpool2d_forward.4} parent=43 // pred_fallthru
        _
    $region44: #{conv_maxpool2d_forward.4} parent=5 // pred_fallthru
      _
  $region6: #{conv_maxpool2d_forward.4} parent=0 // loop_footer
    %s14 = sadd.s32 1, %s10
  $region7: #{conv_maxpool2d_forward.4} parent=0 // loop_footer_branch
    %9 = sbr.rel target = $region3
  $region8: #{conv_maxpool2d_forward.4} parent=0 // loop_exit
    _

// kernel: conv_maxpool2d_forward.3
$region0: #{conv_maxpool2d_forward.3}
  #allocation0 [shape = 'u32[]', space=smem, size = 0x4, offset = 0x4, fixed_abs, tag = 'smem constant byte address 0x4 - core index']
  #allocation1 [shape = 'u32[144,128]{1,0:T(1,128)}', space=vmem, size = 0x12000, scoped, tag = 'internal scratch']
  %s0 = inlined_call_operand.vmem [shape: bf16[2,88,128], index: 0, kind: input, shape index: {}]
  %s1 = inlined_call_operand.vmem [shape: bf16[2,88,128], index: 1, kind: input, shape index: {}]
  %s2 = inlined_call_operand.vmem [shape: bf16[7,128,128], index: 2, kind: input, shape index: {}]
  %s3 = inlined_call_operand.vmem [shape: f32[1,128], index: 3, kind: input, shape index: {}]
  %s4 = inlined_call_operand.vmem [shape: bf16[2,64,128], index: 4, kind: output, shape index: {}]
  %s5 = sld [smem:[#allocation0]]
  $region49: #{conv_maxpool2d_forward.3} parent=0
    _
  %s7 = ssub.s32 1, %s5
  %s8 = scalar_select 0, %s7, %s5
  loop: start=0, step=1, limit=4
  $region2: #{conv_maxpool2d_forward.3} parent=0 // loop_pre_header
    _
  $region3: #{conv_maxpool2d_forward.3} parent=0 // loop_header
    %s10 = sphi 0, %s14
    %p11 = scmp.ge.s32.totalorder %s10, 4
    %s17 = sphi 0, %s29
    %s18 = sphi 0, %s25
    %s19 = sphi 0, %s17
    %s20 = sphi 0, %s18
    %s21 = sphi 0, %s19
    %s22 = sphi 0, %s20
    %s32 = sphi 0, %s34
    %s35 = sphi 0, %s32
    %s36 = sphi 0, %s35
    %s52 = sphi 0, %s36
    %s58 = sphi 0, %s60
    %s61 = sphi 0, %s58
    %s62 = sphi 0, %s61
    %s78 = sphi 0, %s62
    %s82 = sphi 0, %s82
    %s84 = sphi 0, %s82
    %s85 = sphi 0, %s84
    %s99 = sphi 0, %s85
    %s103 = sphi 0, %s103
    %s105 = sphi 0, %s103
    %s106 = sphi 0, %s105
    %s120 = sphi 0, %s106
    %s128 = sphi 0, %s130
    %s131 = sphi 0, %s128
    %s132 = sphi 0, %s131
    %s148 = sphi 0, %s132
  $region4: #{conv_maxpool2d_forward.3} parent=0 // loop_header_branch
    %13 = sbr.rel (%p11) target = $region8
  $region5: #{conv_maxpool2d_forward.3} parent=0 // loop_body
    %s15 = ssub.s32 %s10, 1
    %s16 = ssub.s32 %s10, 2
    %s23 = sadd.s32 1, %s18
    %p24 = scmp.ge.s32.totalorder %s23, 1
    %s25 = scalar_select %p24, 0, %s23
    %s26 = sadd.s32 1, %s17
    %s27 = scalar_select %p24, %s26, %s17
    %p28 = scmp.ge.s32.totalorder %s27, 2
    %s29 = scalar_select %p28, 0, %s27
    %s30 = ssub.s32 %s17, %s29
    %p31 = scmp.eq.s32.totalorder %s30, 0
    %s33 = sadd.s32 %s32, 1
    %s34 = scalar_select %p31, %s32, %s33
    %p37 = pneg %p31
    %p38 = scmp.eq.s32.totalorder %s10, 1
    %p39 = por %p37, %p38
    %p40 = scmp.ne.s32.totalorder %s32, %s35
    %p41 = scmp.eq.s32.totalorder %s10, 0
    %p42 = por %p40, %p41
    %p43 = scmp.ne.s32.totalorder %s32, %s35
    %p44 = scmp.eq.s32.totalorder %s15, 1
    %p45 = por %p43, %p44
    %p46 = scmp.ne.s32.totalorder %s35, %s36
    %p47 = scmp.eq.s32.totalorder %s15, 0
    %p48 = por %p46, %p47
    %p49 = scmp.ne.s32.totalorder %s35, %s36
    %p50 = scmp.eq.s32.totalorder %s16, 1
    %p51 = por %p49, %p50
    %p53 = scmp.ne.s32.totalorder %s36, %s52
    %p54 = scmp.eq.s32.totalorder %s16, 0
    %p55 = por %p53, %p54
    %s56 = ssub.s32 %s17, %s29
    %p57 = scmp.eq.s32.totalorder %s56, 0
    %s59 = sadd.s32 %s58, 1
    %s60 = scalar_select %p57, %s58, %s59
    %p63 = pneg %p57
    %p64 = scmp.eq.s32.totalorder %s10, 1
    %p65 = por %p63, %p64
    %p66 = scmp.ne.s32.totalorder %s58, %s61
    %p67 = scmp.eq.s32.totalorder %s10, 0
    %p68 = por %p66, %p67
    %p69 = scmp.ne.s32.totalorder %s58, %s61
    %p70 = scmp.eq.s32.totalorder %s15, 1
    %p71 = por %p69, %p70
    %p72 = scmp.ne.s32.totalorder %s61, %s62
    %p73 = scmp.eq.s32.totalorder %s15, 0
    %p74 = por %p72, %p73
    %p75 = scmp.ne.s32.totalorder %s61, %s62
    %p76 = scmp.eq.s32.totalorder %s16, 1
    %p77 = por %p75, %p76
    %p79 = scmp.ne.s32.totalorder %s62, %s78
    %p80 = scmp.eq.s32.totalorder %s16, 0
    %p81 = por %p79, %p80
    %s83 = sadd.s32 %s82, 1
    %p86 = scmp.eq.s32.totalorder %s10, 1
    %p87 = scmp.ne.s32.totalorder %s82, %s84
    %p88 = scmp.eq.s32.totalorder %s10, 0
    %p89 = por %p87, %p88
    %p90 = scmp.ne.s32.totalorder %s82, %s84
    %p91 = scmp.eq.s32.totalorder %s15, 1
    %p92 = por %p90, %p91
    %p93 = scmp.ne.s32.totalorder %s84, %s85
    %p94 = scmp.eq.s32.totalorder %s15, 0
    %p95 = por %p93, %p94
    %p96 = scmp.ne.s32.totalorder %s84, %s85
    %p97 = scmp.eq.s32.totalorder %s16, 1
    %p98 = por %p96, %p97
    %p100 = scmp.ne.s32.totalorder %s85, %s99
    %p101 = scmp.eq.s32.totalorder %s16, 0
    %p102 = por %p100, %p101
    %s104 = sadd.s32 %s103, 1
    %p107 = scmp.eq.s32.totalorder %s10, 1
    %p108 = scmp.ne.s32.totalorder %s103, %s105
    %p109 = scmp.eq.s32.totalorder %s10, 0
    %p110 = por %p108, %p109
    %p111 = scmp.ne.s32.totalorder %s103, %s105
    %p112 = scmp.eq.s32.totalorder %s15, 1
    %p113 = por %p111, %p112
    %p114 = scmp.ne.s32.totalorder %s105, %s106
    %p115 = scmp.eq.s32.totalorder %s15, 0
    %p116 = por %p114, %p115
    %p117 = scmp.ne.s32.totalorder %s105, %s106
    %p118 = scmp.eq.s32.totalorder %s16, 1
    %p119 = por %p117, %p118
    %p121 = scmp.ne.s32.totalorder %s106, %s120
    %p122 = scmp.eq.s32.totalorder %s16, 0
    %p123 = por %p121, %p122
    %s124 = ssub.s32 %s17, %s29
    %s125 = ssub.s32 %s18, %s25
    %s126 = sor.u32 %s124, %s125
    %p127 = scmp.eq.s32.totalorder %s126, 0
    %s129 = sadd.s32 %s128, 1
    %s130 = scalar_select %p127, %s128, %s129
    %p133 = pneg %p127
    %p134 = scmp.eq.s32.totalorder %s10, 1
    %p135 = por %p133, %p134
    %p136 = scmp.ne.s32.totalorder %s128, %s131
    %p137 = scmp.eq.s32.totalorder %s10, 0
    %p138 = por %p136, %p137
    %p139 = scmp.ne.s32.totalorder %s128, %s131
    %p140 = scmp.eq.s32.totalorder %s15, 1
    %p141 = por %p139, %p140
    %p142 = scmp.ne.s32.totalorder %s131, %s132
    %p143 = scmp.eq.s32.totalorder %s15, 0
    %p144 = por %p142, %p143
    %p145 = scmp.ne.s32.totalorder %s131, %s132
    %p146 = scmp.eq.s32.totalorder %s16, 1
    %p147 = por %p145, %p146
    %p149 = scmp.ne.s32.totalorder %s132, %s148
    %p150 = scmp.eq.s32.totalorder %s16, 0
    %p151 = por %p149, %p150
    %p152 = scmp.le.s32.totalorder 1, %s10
    %p153 = scmp.lt.s32.totalorder %s10, 3
    %p154 = pnand %p152, %p153
    %p155 = pneg %p154
    // Predicated region
    $region9: #{conv_maxpool2d_forward.3} parent=5 // pred_check
      _
    $region10: #{conv_maxpool2d_forward.3} parent=5 // pred_check_branch
      %157 = sbr.rel (%p154) target = $region12
    $region11: #{conv_maxpool2d_forward.3} parent=5 // pred_region
      %s158 = ssub.s32 %s10, 1
      // Predicated region
      $region13: #{conv_maxpool2d_forward.3} parent=11 // pred_check
        %p159 = pneg %p95
      $region14: #{conv_maxpool2d_forward.3} parent=11 // pred_check_branch
        %161 = sbr.rel (%p159) target = $region16
      $region15: #{conv_maxpool2d_forward.3} parent=11 // pred_region
        _
      $region16: #{conv_maxpool2d_forward.3} parent=11 // pred_fallthru
        _
      // Predicated region
      $region17: #{conv_maxpool2d_forward.3} parent=11 // pred_check
        %p162 = pneg %p116
      $region18: #{conv_maxpool2d_forward.3} parent=11 // pred_check_branch
        %164 = sbr.rel (%p162) target = $region20
      $region19: #{conv_maxpool2d_forward.3} parent=11 // pred_region
        _
      $region20: #{conv_maxpool2d_forward.3} parent=11 // pred_fallthru
        _
    $region12: #{conv_maxpool2d_forward.3} parent=5 // pred_fallthru
      _
    %p165 = scmp.lt.s32.totalorder %s10, 2
    // Predicated region
    $region21: #{conv_maxpool2d_forward.3} parent=5 // pred_check
      %p166 = pneg %p165
    $region22: #{conv_maxpool2d_forward.3} parent=5 // pred_check_branch
      %168 = sbr.rel (%p166) target = $region24
    $region23: #{conv_maxpool2d_forward.3} parent=5 // pred_region
      // Predicated region
      $region25: #{conv_maxpool2d_forward.3} parent=23 // pred_check
        %p169 = pneg %p42
      $region26: #{conv_maxpool2d_forward.3} parent=23 // pred_check_branch
        %171 = sbr.rel (%p169) target = $region28
      $region27: #{conv_maxpool2d_forward.3} parent=23 // pred_region
        %p172 = scmp.lt.s32.totalorder %s17, 1
        %s173 = scalar_select %p172, %s17, 1
        %s174 = smul.addr %s173, 11
        %s175 = smul.addr %s174, 4
        %s176 = scalar_lea.vmem %s0, %s175
      $region28: #{conv_maxpool2d_forward.3} parent=23 // pred_fallthru
        _
      // Predicated region
      $region29: #{conv_maxpool2d_forward.3} parent=23 // pred_check
        %p177 = pneg %p68
      $region30: #{conv_maxpool2d_forward.3} parent=23 // pred_check_branch
        %179 = sbr.rel (%p177) target = $region32
      $region31: #{conv_maxpool2d_forward.3} parent=23 // pred_region
        %p180 = scmp.lt.s32.totalorder %s17, 1
        %s181 = scalar_select %p180, %s17, 1
        %s182 = smul.addr %s181, 11
        %s183 = smul.addr %s182, 4
        %s184 = scalar_lea.vmem %s1, %s183
      $region32: #{conv_maxpool2d_forward.3} parent=23 // pred_fallthru
        _
    $region24: #{conv_maxpool2d_forward.3} parent=5 // pred_fallthru
      _
    %p185 = scmp.le.s32.totalorder 1, %s10
    %p186 = scmp.lt.s32.totalorder %s10, 3
    %p187 = pnand %p185, %p186
    %p188 = pneg %p187
    // Predicated region
    $region33: #{conv_maxpool2d_forward.3} parent=5 // pred_check
      _
    $region34: #{conv_maxpool2d_forward.3} parent=5 // pred_check_branch
      %190 = sbr.rel (%p187) target = $region36
    $region35: #{conv_maxpool2d_forward.3} parent=5 // pred_region
      %s191 = ssub.s32 %s10, 1
      %p192 = scmp.lt.s32.totalorder %s19, 1
      %s193 = scalar_select %p192, %s19, 1
      %s194 = smul.addr %s193, 11
      %s195 = smul.addr %s194, 4
      %s196 = scalar_lea.vmem %s0, %s195
      %p197 = pneg %p48
      %p198 = pneg %p45
      %p199 = scmp.lt.s32.totalorder %s19, 1
      %s200 = scalar_select %p199, %s19, 1
      %s201 = smul.addr %s200, 11
      %s202 = smul.addr %s201, 4
      %s203 = scalar_lea.vmem %s1, %s202
      %p204 = pneg %p74
      %p205 = pneg %p71
      %p206 = pneg %p95
      %p207 = pneg %p92
      %p208 = pneg %p116
      %p209 = pneg %p113
      %p210 = pneg %p144
      %p211 = pneg %p141
      %s212 = smul.u32 8, %s20
      %p213 = scmp.lt.s32.totalorder %s19, 1
      %s214 = scalar_select %p213, %s19, 1
      %p215 = scmp.lt.s32.totalorder %s212, 7
      %s216 = scalar_select %p215, %s212, 7
      %s217 = smul.addr %s214, 8
      %s218 = sadd.s32 %s216, %s217
      %s219 = smul.addr %s218, 4
      %s220 = scalar_lea.vmem %s4, %s219
      %p221 = scmp.lt.s32.totalorder %s19, 1
      %s222 = scalar_select %p221, %s19, 1
      %s223 = smul.addr %s222, 11
      %s224 = smul.addr %s223, 4
      %s225 = scalar_lea.vmem %s0, %s224
      %p226 = scmp.lt.s32.totalorder %s19, 1
      %s227 = scalar_select %p226, %s19, 1
      %s228 = smul.addr %s227, 11
      %s229 = smul.addr %s228, 4
      %s230 = scalar_lea.vmem %s1, %s229
      %s231 = smul.u32 8, %s20
      %p232 = scmp.lt.s32.totalorder %s19, 1
      %s233 = scalar_select %p232, %s19, 1
      %p234 = scmp.lt.s32.totalorder %s231, 7
      %s235 = scalar_select %p234, %s231, 7
      %s236 = smul.addr %s233, 8
      %s237 = sadd.s32 %s235, %s236
      %s238 = smul.addr %s237, 4
      %s239 = scalar_lea.vmem %s4, %s238
      %s240 = smul.u32 8, %s20
      %v242 = vld [vmem:[%s225] sm:$0xf]
      %v243 = vld [vmem:[%s225 + $0x4] sm:$0xf]
      %v244 = vld [vmem:[%s225 + $0x8] sm:$0xf]
      %v245 = vld [vmem:[%s225 + $0xc] sm:$0xf]
      %v246 = vld [vmem:[%s225 + $0x10] sm:$0xf]
      %v247 = vld [vmem:[%s225 + $0x14] sm:$0xf]
      %v248 = vld [vmem:[%s225 + $0x18] sm:$0xf]
      %v249 = vld [vmem:[%s225 + $0x1c] sm:$0xf]
      %v250 = vld [vmem:[%s2] sm:$0xf]
      %v251 = vld [vmem:[%s2 + $0x4] sm:$0xf]
      %v252 = vld [vmem:[%s2 + $0x8] sm:$0xf]
      %v253 = vld [vmem:[%s2 + $0xc] sm:$0xf]
      %v254 = vld [vmem:[%s2 + $0x10] sm:$0xf]
      %v255 = vld [vmem:[%s2 + $0x14] sm:$0xf]
      %v256 = vld [vmem:[%s2 + $0x18] sm:$0xf]
      %v257 = vld [vmem:[%s2 + $0x1c] sm:$0xf]
      %v258 = vld [vmem:[%s2 + $0x20] sm:$0xf]
      %v259 = vld [vmem:[%s2 + $0x24] sm:$0xf]
      %v260 = vld [vmem:[%s2 + $0x28] sm:$0xf]
      %v261 = vld [vmem:[%s2 + $0x2c] sm:$0xf]
      %v262 = vld [vmem:[%s2 + $0x30] sm:$0xf]
      %v263 = vld [vmem:[%s2 + $0x34] sm:$0xf]
      %v264 = vld [vmem:[%s2 + $0x38] sm:$0xf]
      %v265 = vld [vmem:[%s2 + $0x3c] sm:$0xf]
      %v266 = vld [vmem:[%s230] sm:$0xf]
      %v267 = vld [vmem:[%s230 + $0x4] sm:$0xf]
      %v268 = vld [vmem:[%s230 + $0x8] sm:$0xf]
      %v269 = vld [vmem:[%s230 + $0xc] sm:$0xf]
      %v270 = vld [vmem:[%s230 + $0x10] sm:$0xf]
      %v271 = vld [vmem:[%s230 + $0x14] sm:$0xf]
      %v272 = vld [vmem:[%s230 + $0x18] sm:$0xf]
      %v273 = vld [vmem:[%s230 + $0x1c] sm:$0xf]
      %s274 = scalar_lea.vmem %s2, 64
      %v275 = vld [vmem:[%s274] sm:$0xf]
      %v276 = vld [vmem:[%s274 + $0x4] sm:$0xf]
      %v277 = vld [vmem:[%s274 + $0x8] sm:$0xf]
      %v278 = vld [vmem:[%s274 + $0xc] sm:$0xf]
      %v279 = vld [vmem:[%s274 + $0x10] sm:$0xf]
      %v280 = vld [vmem:[%s274 + $0x14] sm:$0xf]
      %v281 = vld [vmem:[%s274 + $0x18] sm:$0xf]
      %v282 = vld [vmem:[%s274 + $0x1c] sm:$0xf]
      %v283 = vld [vmem:[%s274 + $0x20] sm:$0xf]
      %v284 = vld [vmem:[%s274 + $0x24] sm:$0xf]
      %v285 = vld [vmem:[%s274 + $0x28] sm:$0xf]
      %v286 = vld [vmem:[%s274 + $0x2c] sm:$0xf]
      %v287 = vld [vmem:[%s274 + $0x30] sm:$0xf]
      %v288 = vld [vmem:[%s274 + $0x34] sm:$0xf]
      %v289 = vld [vmem:[%s274 + $0x38] sm:$0xf]
      %v290 = vld [vmem:[%s274 + $0x3c] sm:$0xf]
      %v299 = vunpack.c.l.b16 %v266
      %v300 = vunpack.c.l.b16 %v267
      %v301 = vunpack.c.l.b16 %v268
      %v302 = vunpack.c.l.b16 %v269
      %v303 = vunpack.c.l.b16 %v270
      %v304 = vunpack.c.l.b16 %v271
      %v305 = vunpack.c.l.b16 %v272
      %v306 = vunpack.c.l.b16 %v273
      %v307 = vpack.c.b16 %v300, %v299
      %v308 = vpack.c.b16 %v302, %v301
      %v309 = vpack.c.b16 %v304, %v303
      %v310 = vpack.c.b16 %v306, %v305
      %v331 = vunpack.c.l.b16 %v275
      %v332 = vunpack.c.l.b16 %v276
      %v333 = vunpack.c.l.b16 %v277
      %v334 = vunpack.c.l.b16 %v278
      %v335 = vunpack.c.l.b16 %v279
      %v336 = vunpack.c.l.b16 %v280
      %v337 = vunpack.c.l.b16 %v281
      %v338 = vunpack.c.l.b16 %v282
      %v339 = vunpack.c.l.b16 %v283
      %v340 = vunpack.c.l.b16 %v284
      %v341 = vunpack.c.l.b16 %v285
      %v342 = vunpack.c.l.b16 %v286
      %v343 = vunpack.c.l.b16 %v287
      %v344 = vunpack.c.l.b16 %v288
      %v345 = vunpack.c.l.b16 %v289
      %v346 = vunpack.c.l.b16 %v290
      %v347 = vpack.c.b16 %v332, %v331
      %v348 = vpack.c.b16 %v334, %v333
      %v349 = vpack.c.b16 %v336, %v335
      %v350 = vpack.c.b16 %v338, %v337
      %v351 = vpack.c.b16 %v340, %v339
      %v352 = vpack.c.b16 %v342, %v341
      %v353 = vpack.c.b16 %v344, %v343
      %v354 = vpack.c.b16 %v346, %v345
      %363 = vmatprep.subr.bf16.mxu0 0
      %364 = vmatpush1.bf16.msra.mxu0 %v347
      %365 = vmatprep.subr.bf16.mxu0 0
      %366 = vmatpush1.bf16.msra.mxu0 %v348
      %367 = vmatprep.subr.bf16.mxu0 0
      %368 = vmatpush1.bf16.msra.mxu0 %v349
      %369 = vmatprep.subr.bf16.mxu0 0
      %370 = vmatpush1.bf16.msra.mxu0 %v350
      %371 = vmatprep.subr.bf16.mxu0 0
      %372 = vmatpush1.bf16.msra.mxu0 %v351
      %373 = vmatprep.subr.bf16.mxu0 0
      %374 = vmatpush1.bf16.msra.mxu0 %v352
      %375 = vmatprep.subr.bf16.mxu0 0
      %376 = vmatpush1.bf16.msra.mxu0 %v353
      %377 = vmatprep.subr.bf16.mxu0 0
      %378 = vmatpush1.bf16.msra.mxu0 %v354
      %379 = vmatprep.subr.bf16.mxu0 0
      %380 = vmatpush1.bf16.msra.mxu0 0
      %381 = vmatprep.subr.bf16.mxu0 0
      %382 = vmatpush1.bf16.msra.mxu0 0
      %383 = vmatprep.subr.bf16.mxu0 0
      %384 = vmatpush1.bf16.msra.mxu0 0
      %385 = vmatprep.subr.bf16.mxu0 0
      %386 = vmatpush1.bf16.msra.mxu0 0
      %387 = vmatprep.subr.bf16.mxu0 0
      %388 = vmatpush1.bf16.msra.mxu0 0
      %389 = vmatprep.subr.bf16.mxu0 0
      %390 = vmatpush1.bf16.msra.mxu0 0
      %391 = vmatprep.subr.bf16.mxu0 0
      %392 = vmatpush1.bf16.msra.mxu0 0
      %393 = vmatprep.subr.bf16.mxu0 0
      %394 = vmatpush1.bf16.msra.mxu0 0
      %395 = vmatprep.mubr.bf16.mxu0 0
      %396 = vmatmul.mubr.bf16.gmra.mrb[0].mxu0 %v307
      %v397 = vpop.f32.mrb[0].mxu0
      %v398 = vadd.f32 0.0, %v397
      %v399 = vpop.f32.mrb[0].mxu0
      %v400 = vpop.f32.mrb[0].mxu0
      %v401 = vadd.f32 0.0, %v400
      %v402 = vpop.f32.mrb[0].mxu0
      %403 = vmatprep.mubr.bf16.mxu0 0
      %404 = vmatmul.mubr.bf16.gmra.mrb[0].mxu0 %v308
      %v405 = vpop.f32.mrb[0].mxu0
      %v406 = vadd.f32 0.0, %v405
      %v407 = vpop.f32.mrb[0].mxu0
      %v408 = vpop.f32.mrb[0].mxu0
      %v409 = vadd.f32 0.0, %v408
      %v410 = vpop.f32.mrb[0].mxu0
      %411 = vmatprep.mubr.bf16.mxu0 0
      %412 = vmatmul.mubr.bf16.gmra.mrb[0].mxu0 %v309
      %v413 = vpop.f32.mrb[0].mxu0
      %v414 = vadd.f32 0.0, %v413
      %v415 = vpop.f32.mrb[0].mxu0
      %v416 = vpop.f32.mrb[0].mxu0
      %v417 = vadd.f32 0.0, %v416
      %v418 = vpop.f32.mrb[0].mxu0
      %419 = vmatprep.mubr.bf16.mxu0 0
      %420 = vmatmul.mubr.bf16.gmra.mrb[0].mxu0 %v310
      %v421 = vpop.f32.mrb[0].mxu0
      %v422 = vadd.f32 0.0, %v421
      %v423 = vpop.f32.mrb[0].mxu0
      %v424 = vpop.f32.mrb[0].mxu0
      %v425 = vadd.f32 0.0, %v424
      %v426 = vpop.f32.mrb[0].mxu0
      %427 = vdwg.mxu0
      %v436 = vunpack.c.l.b16 %v242
      %v437 = vunpack.c.l.b16 %v243
      %v438 = vunpack.c.l.b16 %v244
      %v439 = vunpack.c.l.b16 %v245
      %v440 = vunpack.c.l.b16 %v246
      %v441 = vunpack.c.l.b16 %v247
      %v442 = vunpack.c.l.b16 %v248
      %v443 = vunpack.c.l.b16 %v249
      %v444 = vpack.c.b16 %v437, %v436
      %v445 = vpack.c.b16 %v439, %v438
      %v446 = vpack.c.b16 %v441, %v440
      %v447 = vpack.c.b16 %v443, %v442
      %v468 = vunpack.c.l.b16 %v250
      %v469 = vunpack.c.l.b16 %v251
      %v470 = vunpack.c.l.b16 %v252
      %v471 = vunpack.c.l.b16 %v253
      %v472 = vunpack.c.l.b16 %v254
      %v473 = vunpack.c.l.b16 %v255
      %v474 = vunpack.c.l.b16 %v256
      %v475 = vunpack.c.l.b16 %v257
      %v476 = vunpack.c.l.b16 %v258
      %v477 = vunpack.c.l.b16 %v259
      %v478 = vunpack.c.l.b16 %v260
      %v479 = vunpack.c.l.b16 %v261
      %v480 = vunpack.c.l.b16 %v262
      %v481 = vunpack.c.l.b16 %v263
      %v482 = vunpack.c.l.b16 %v264
      %v483 = vunpack.c.l.b16 %v265
      %v484 = vpack.c.b16 %v469, %v468
      %v485 = vpack.c.b16 %v471, %v470
      %v486 = vpack.c.b16 %v473, %v472
      %v487 = vpack.c.b16 %v475, %v474
      %v488 = vpack.c.b16 %v477, %v476
      %v489 = vpack.c.b16 %v479, %v478
      %v490 = vpack.c.b16 %v481, %v480
      %v491 = vpack.c.b16 %v483, %v482
      %500 = vmatprep.subr.bf16.mxu0 0
      %501 = vmatpush1.bf16.msra.mxu0 %v484
      %502 = vmatprep.subr.bf16.mxu0 0
      %503 = vmatpush1.bf16.msra.mxu0 %v485
      %504 = vmatprep.subr.bf16.mxu0 0
      %505 = vmatpush1.bf16.msra.mxu0 %v486
      %506 = vmatprep.subr.bf16.mxu0 0
      %507 = vmatpush1.bf16.msra.mxu0 %v487
      %508 = vmatprep.subr.bf16.mxu0 0
      %509 = vmatpush1.bf16.msra.mxu0 %v488
      %510 = vmatprep.subr.bf16.mxu0 0
      %511 = vmatpush1.bf16.msra.mxu0 %v489
      %512 = vmatprep.subr.bf16.mxu0 0
      %513 = vmatpush1.bf16.msra.mxu0 %v490
      %514 = vmatprep.subr.bf16.mxu0 0
      %515 = vmatpush1.bf16.msra.mxu0 %v491
      %516 = vmatprep.subr.bf16.mxu0 0
      %517 = vmatpush1.bf16.msra.mxu0 0
      %518 = vmatprep.subr.bf16.mxu0 0
      %519 = vmatpush1.bf16.msra.mxu0 0
      %520 = vmatprep.subr.bf16.mxu0 0
      %521 = vmatpush1.bf16.msra.mxu0 0
      %522 = vmatprep.subr.bf16.mxu0 0
      %523 = vmatpush1.bf16.msra.mxu0 0
      %524 = vmatprep.subr.bf16.mxu0 0
      %525 = vmatpush1.bf16.msra.mxu0 0
      %526 = vmatprep.subr.bf16.mxu0 0
      %527 = vmatpush1.bf16.msra.mxu0 0
      %528 = vmatprep.subr.bf16.mxu0 0
      %529 = vmatpush1.bf16.msra.mxu0 0
      %530 = vmatprep.subr.bf16.mxu0 0
      %531 = vmatpush1.bf16.msra.mxu0 0
      %532 = vmatprep.mubr.bf16.mxu0 0
      %533 = vmatmul.mubr.bf16.gmra.mrb[0].mxu0 %v444
      %v534 = vpop.f32.mrb[0].mxu0
      %v535 = vadd.f32 %v398, %v534
      %v536 = vpop.f32.mrb[0].mxu0
      %v537 = vpop.f32.mrb[0].mxu0
      %v538 = vadd.f32 %v401, %v537
      %v539 = vpop.f32.mrb[0].mxu0
      %540 = vmatprep.mubr.bf16.mxu0 0
      %541 = vmatmul.mubr.bf16.gmra.mrb[0].mxu0 %v445
      %v542 = vpop.f32.mrb[0].mxu0
      %v543 = vadd.f32 %v406, %v542
      %v544 = vpop.f32.mrb[0].mxu0
      %v545 = vpop.f32.mrb[0].mxu0
      %v546 = vadd.f32 %v409, %v545
      %v547 = vpop.f32.mrb[0].mxu0
      %548 = vmatprep.mubr.bf16.mxu0 0
      %549 = vmatmul.mubr.bf16.gmra.mrb[0].mxu0 %v446
      %v550 = vpop.f32.mrb[0].mxu0
      %v551 = vadd.f32 %v414, %v550
      %v552 = vpop.f32.mrb[0].mxu0
      %v553 = vpop.f32.mrb[0].mxu0
      %v554 = vadd.f32 %v417, %v553
      %v555 = vpop.f32.mrb[0].mxu0
      %556 = vmatprep.mubr.bf16.mxu0 0
      %557 = vmatmul.mubr.bf16.gmra.mrb[0].mxu0 %v447
      %v558 = vpop.f32.mrb[0].mxu0
      %v559 = vadd.f32 %v422, %v558
      %v560 = vpop.f32.mrb[0].mxu0
      %v561 = vpop.f32.mrb[0].mxu0
      %v562 = vadd.f32 %v425, %v561
      %v563 = vpop.f32.mrb[0].mxu0
      %564 = vdwg.mxu0
      %v565 = vld [vmem:[%s225 + $0x4] sm:$0xf]
      %v566 = vld [vmem:[%s225 + $0x8] sm:$0xf]
      %v567 = vld [vmem:[%s225 + $0xc] sm:$0xf]
      %v568 = vld [vmem:[%s225 + $0x10] sm:$0xf]
      %v569 = vld [vmem:[%s225 + $0x14] sm:$0xf]
      %v570 = vld [vmem:[%s225 + $0x18] sm:$0xf]
      %v571 = vld [vmem:[%s225 + $0x1c] sm:$0xf]
      %v572 = vld [vmem:[%s225 + $0x20] sm:$0xf]
      %s573 = scalar_lea.vmem %s2, 128
      %v574 = vld [vmem:[%s573] sm:$0xf]
      %v575 = vld [vmem:[%s573 + $0x4] sm:$0xf]
      %v576 = vld [vmem:[%s573 + $0x8] sm:$0xf]
      %v577 = vld [vmem:[%s573 + $0xc] sm:$0xf]
      %v578 = vld [vmem:[%s573 + $0x10] sm:$0xf]
      %v579 = vld [vmem:[%s573 + $0x14] sm:$0xf]
      %v580 = vld [vmem:[%s573 + $0x18] sm:$0xf]
      %v581 = vld [vmem:[%s573 + $0x1c] sm:$0xf]
      %v582 = vld [vmem:[%s573 + $0x20] sm:$0xf]
      %v583 = vld [vmem:[%s573 + $0x24] sm:$0xf]
      %v584 = vld [vmem:[%s573 + $0x28] sm:$0xf]
      %v585 = vld [vmem:[%s573 + $0x2c] sm:$0xf]
      %v586 = vld [vmem:[%s573 + $0x30] sm:$0xf]
      %v587 = vld [vmem:[%s573 + $0x34] sm:$0xf]
      %v588 = vld [vmem:[%s573 + $0x38] sm:$0xf]
      %v589 = vld [vmem:[%s573 + $0x3c] sm:$0xf]
      %v598 = vunpack.c.l.b16 %v565
      %v599 = vunpack.c.l.b16 %v566
      %v600 = vunpack.c.l.b16 %v567
      %v601 = vunpack.c.l.b16 %v568
      %v602 = vunpack.c.l.b16 %v569
      %v603 = vunpack.c.l.b16 %v570
      %v604 = vunpack.c.l.b16 %v571
      %v605 = vunpack.c.l.b16 %v572
      %v606 = vpack.c.b16 %v599, %v598
      %v607 = vpack.c.b16 %v601, %v600
      %v608 = vpack.c.b16 %v603, %v602
      %v609 = vpack.c.b16 %v605, %v604
      %v630 = vunpack.c.l.b16 %v574
      %v631 = vunpack.c.l.b16 %v575
      %v632 = vunpack.c.l.b16 %v576
      %v633 = vunpack.c.l.b16 %v577
      %v634 = vunpack.c.l.b16 %v578
      %v635 = vunpack.c.l.b16 %v579
      %v636 = vunpack.c.l.b16 %v580
      %v637 = vunpack.c.l.b16 %v581
      %v638 = vunpack.c.l.b16 %v582
      %v639 = vunpack.c.l.b16 %v583
      %v640 = vunpack.c.l.b16 %v584
      %v641 = vunpack.c.l.b16 %v585
      %v642 = vunpack.c.l.b16 %v586
      %v643 = vunpack.c.l.b16 %v587
      %v644 = vunpack.c.l.b16 %v588
      %v645 = vunpack.c.l.b16 %v589
      %v646 = vpack.c.b16 %v631, %v630
      %v647 = vpack.c.b16 %v633, %v632
      %v648 = vpack.c.b16 %v635, %v634
      %v649 = vpack.c.b16 %v637, %v636
      %v650 = vpack.c.b16 %v639, %v638
      %v651 = vpack.c.b16 %v641, %v640
      %v652 = vpack.c.b16 %v643, %v642
      %v653 = vpack.c.b16 %v645, %v644
      %662 = vmatprep.subr.bf16.mxu0 0
      %663 = vmatpush1.bf16.msra.mxu0 %v646
      %664 = vmatprep.subr.bf16.mxu0 0
      %665 = vmatpush1.bf16.msra.mxu0 %v647
      %666 = vmatprep.subr.bf16.mxu0 0
      %667 = vmatpush1.bf16.msra.mxu0 %v648
      %668 = vmatprep.subr.bf16.mxu0 0
      %669 = vmatpush1.bf16.msra.mxu0 %v649
      %670 = vmatprep.subr.bf16.mxu0 0
      %671 = vmatpush1.bf16.msra.mxu0 %v650
      %672 = vmatprep.subr.bf16.mxu0 0
      %673 = vmatpush1.bf16.msra.mxu0 %v651
      %674 = vmatprep.subr.bf16.mxu0 0
      %675 = vmatpush1.bf16.msra.mxu0 %v652
      %676 = vmatprep.subr.bf16.mxu0 0
      %677 = vmatpush1.bf16.msra.mxu0 %v653
      %678 = vmatprep.subr.bf16.mxu0 0
      %679 = vmatpush1.bf16.msra.mxu0 0
      %680 = vmatprep.subr.bf16.mxu0 0
      %681 = vmatpush1.bf16.msra.mxu0 0
      %682 = vmatprep.subr.bf16.mxu0 0
      %683 = vmatpush1.bf16.msra.mxu0 0
      %684 = vmatprep.subr.bf16.mxu0 0
      %685 = vmatpush1.bf16.msra.mxu0 0
      %686 = vmatprep.subr.bf16.mxu0 0
      %687 = vmatpush1.bf16.msra.mxu0 0
      %688 = vmatprep.subr.bf16.mxu0 0
      %689 = vmatpush1.bf16.msra.mxu0 0
      %690 = vmatprep.subr.bf16.mxu0 0
      %691 = vmatpush1.bf16.msra.mxu0 0
      %692 = vmatprep.subr.bf16.mxu0 0
      %693 = vmatpush1.bf16.msra.mxu0 0
      %694 = vmatprep.mubr.bf16.mxu0 0
      %695 = vmatmul.mubr.bf16.gmra.mrb[0].mxu0 %v606
      %v696 = vpop.f32.mrb[0].mxu0
      %v697 = vadd.f32 0.0, %v696
      %v698 = vpop.f32.mrb[0].mxu0
      %v699 = vpop.f32.mrb[0].mxu0
      %v700 = vadd.f32 0.0, %v699
      %v701 = vpop.f32.mrb[0].mxu0
      %702 = vmatprep.mubr.bf16.mxu0 0
      %703 = vmatmul.mubr.bf16.gmra.mrb[0].mxu0 %v607
      %v704 = vpop.f32.mrb[0].mxu0
      %v705 = vadd.f32 0.0, %v704
      %v706 = vpop.f32.mrb[0].mxu0
      %v707 = vpop.f32.mrb[0].mxu0
      %v708 = vadd.f32 0.0, %v707
      %v709 = vpop.f32.mrb[0].mxu0
      %710 = vmatprep.mubr.bf16.mxu0 0
      %711 = vmatmul.mubr.bf16.gmra.mrb[0].mxu0 %v608
      %v712 = vpop.f32.mrb[0].mxu0
      %v713 = vadd.f32 0.0, %v712
      %v714 = vpop.f32.mrb[0].mxu0
      %v715 = vpop.f32.mrb[0].mxu0
      %v716 = vadd.f32 0.0, %v715
      %v717 = vpop.f32.mrb[0].mxu0
      %718 = vmatprep.mubr.bf16.mxu0 0
      %719 = vmatmul.mubr.bf16.gmra.mrb[0].mxu0 %v609
      %v720 = vpop.f32.mrb[0].mxu0
      %v721 = vadd.f32 0.0, %v720
      %v722 = vpop.f32.mrb[0].mxu0
      %v723 = vpop.f32.mrb[0].mxu0
      %v724 = vadd.f32 0.0, %v723
      %v725 = vpop.f32.mrb[0].mxu0
      %726 = vdwg.mxu0
      %v727 = vadd.f32 %v535, %v697
      %v728 = vadd.f32 %v538, %v700
      %v729 = vadd.f32 %v543, %v705
      %v730 = vadd.f32 %v546, %v708
      %v731 = vadd.f32 %v551, %v713
      %v732 = vadd.f32 %v554, %v716
      %v733 = vadd.f32 %v559, %v721
      %v734 = vadd.f32 %v562, %v724
      %v735 = vld [vmem:[%s230 + $0x4] sm:$0xf]
      %v736 = vld [vmem:[%s230 + $0x8] sm:$0xf]
      %v737 = vld [vmem:[%s230 + $0xc] sm:$0xf]
      %v738 = vld [vmem:[%s230 + $0x10] sm:$0xf]
      %v739 = vld [vmem:[%s230 + $0x14] sm:$0xf]
      %v740 = vld [vmem:[%s230 + $0x18] sm:$0xf]
      %v741 = vld [vmem:[%s230 + $0x1c] sm:$0xf]
      %v742 = vld [vmem:[%s230 + $0x20] sm:$0xf]
      %s743 = scalar_lea.vmem %s2, 192
      %v744 = vld [vmem:[%s743] sm:$0xf]
      %v745 = vld [vmem:[%s743 + $0x4] sm:$0xf]
      %v746 = vld [vmem:[%s743 + $0x8] sm:$0xf]
      %v747 = vld [vmem:[%s743 + $0xc] sm:$0xf]
      %v748 = vld [vmem:[%s743 + $0x10] sm:$0xf]
      %v749 = vld [vmem:[%s743 + $0x14] sm:$0xf]
      %v750 = vld [vmem:[%s743 + $0x18] sm:$0xf]
      %v751 = vld [vmem:[%s743 + $0x1c] sm:$0xf]
      %v752 = vld [vmem:[%s743 + $0x20] sm:$0xf]
      %v753 = vld [vmem:[%s743 + $0x24] sm:$0xf]
      %v754 = vld [vmem:[%s743 + $0x28] sm:$0xf]
      %v755 = vld [vmem:[%s743 + $0x2c] sm:$0xf]
      %v756 = vld [vmem:[%s743 + $0x30] sm:$0xf]
      %v757 = vld [vmem:[%s743 + $0x34] sm:$0xf]
      %v758 = vld [vmem:[%s743 + $0x38] sm:$0xf]
      %v759 = vld [vmem:[%s743 + $0x3c] sm:$0xf]
      %v768 = vunpack.c.l.b16 %v735
      %v769 = vunpack.c.l.b16 %v736
      %v770 = vunpack.c.l.b16 %v737
      %v771 = vunpack.c.l.b16 %v738
      %v772 = vunpack.c.l.b16 %v739
      %v773 = vunpack.c.l.b16 %v740
      %v774 = vunpack.c.l.b16 %v741
      %v775 = vunpack.c.l.b16 %v742
      %v776 = vpack.c.b16 %v769, %v768
      %v777 = vpack.c.b16 %v771, %v770
      %v778 = vpack.c.b16 %v773, %v772
      %v779 = vpack.c.b16 %v775, %v774
      %v800 = vunpack.c.l.b16 %v744
      %v801 = vunpack.c.l.b16 %v745
      %v802 = vunpack.c.l.b16 %v746
      %v803 = vunpack.c.l.b16 %v747
      %v804 = vunpack.c.l.b16 %v748
      %v805 = vunpack.c.l.b16 %v749
      %v806 = vunpack.c.l.b16 %v750
      %v807 = vunpack.c.l.b16 %v751
      %v808 = vunpack.c.l.b16 %v752
      %v809 = vunpack.c.l.b16 %v753
      %v810 = vunpack.c.l.b16 %v754
      %v811 = vunpack.c.l.b16 %v755
      %v812 = vunpack.c.l.b16 %v756
      %v813 = vunpack.c.l.b16 %v757
      %v814 = vunpack.c.l.b16 %v758
      %v815 = vunpack.c.l.b16 %v759
      %v816 = vpack.c.b16 %v801, %v800
      %v817 = vpack.c.b16 %v803, %v802
      %v818 = vpack.c.b16 %v805, %v804
      %v819 = vpack.c.b16 %v807, %v806
      %v820 = vpack.c.b16 %v809, %v808
      %v821 = vpack.c.b16 %v811, %v810
      %v822 = vpack.c.b16 %v813, %v812
      %v823 = vpack.c.b16 %v815, %v814
      %832 = vmatprep.subr.bf16.mxu0 0
      %833 = vmatpush1.bf16.msra.mxu0 %v816
      %834 = vmatprep.subr.bf16.mxu0 0
      %835 = vmatpush1.bf16.msra.mxu0 %v817
      %836 = vmatprep.subr.bf16.mxu0 0
      %837 = vmatpush1.bf16.msra.mxu0 %v818
      %838 = vmatprep.subr.bf16.mxu0 0
      %839 = vmatpush1.bf16.msra.mxu0 %v819
      %840 = vmatprep.subr.bf16.mxu0 0
      %841 = vmatpush1.bf16.msra.mxu0 %v820
      %842 = vmatprep.subr.bf16.mxu0 0
      %843 = vmatpush1.bf16.msra.mxu0 %v821
      %844 = vmatprep.subr.bf16.mxu0 0
      %845 = vmatpush1.bf16.msra.mxu0 %v822
      %846 = vmatprep.subr.bf16.mxu0 0
      %847 = vmatpush1.bf16.msra.mxu0 %v823
      %848 = vmatprep.subr.bf16.mxu0 0
      %849 = vmatpush1.bf16.msra.mxu0 0
      %850 = vmatprep.subr.bf16.mxu0 0
      %851 = vmatpush1.bf16.msra.mxu0 0
      %852 = vmatprep.subr.bf16.mxu0 0
      %853 = vmatpush1.bf16.msra.mxu0 0
      %854 = vmatprep.subr.bf16.mxu0 0
      %855 = vmatpush1.bf16.msra.mxu0 0
      %856 = vmatprep.subr.bf16.mxu0 0
      %857 = vmatpush1.bf16.msra.mxu0 0
      %858 = vmatprep.subr.bf16.mxu0 0
      %859 = vmatpush1.bf16.msra.mxu0 0
      %860 = vmatprep.subr.bf16.mxu0 0
      %861 = vmatpush1.bf16.msra.mxu0 0
      %862 = vmatprep.subr.bf16.mxu0 0
      %863 = vmatpush1.bf16.msra.mxu0 0
      %864 = vmatprep.mubr.bf16.mxu0 0
      %865 = vmatmul.mubr.bf16.gmra.mrb[0].mxu0 %v776
      %v866 = vpop.f32.mrb[0].mxu0
      %v867 = vadd.f32 0.0, %v866
      %v868 = vpop.f32.mrb[0].mxu0
      %v869 = vpop.f32.mrb[0].mxu0
      %v870 = vadd.f32 0.0, %v869
      %v871 = vpop.f32.mrb[0].mxu0
      %872 = vmatprep.mubr.bf16.mxu0 0
      %873 = vmatmul.mubr.bf16.gmra.mrb[0].mxu0 %v777
      %v874 = vpop.f32.mrb[0].mxu0
      %v875 = vadd.f32 0.0, %v874
      %v876 = vpop.f32.mrb[0].mxu0
      %v877 = vpop.f32.mrb[0].mxu0
      %v878 = vadd.f32 0.0, %v877
      %v879 = vpop.f32.mrb[0].mxu0
      %880 = vmatprep.mubr.bf16.mxu0 0
      %881 = vmatmul.mubr.bf16.gmra.mrb[0].mxu0 %v778
      %v882 = vpop.f32.mrb[0].mxu0
      %v883 = vadd.f32 0.0, %v882
      %v884 = vpop.f32.mrb[0].mxu0
      %v885 = vpop.f32.mrb[0].mxu0
      %v886 = vadd.f32 0.0, %v885
      %v887 = vpop.f32.mrb[0].mxu0
      %888 = vmatprep.mubr.bf16.mxu0 0
      %889 = vmatmul.mubr.bf16.gmra.mrb[0].mxu0 %v779
      %v890 = vpop.f32.mrb[0].mxu0
      %v891 = vadd.f32 0.0, %v890
      %v892 = vpop.f32.mrb[0].mxu0
      %v893 = vpop.f32.mrb[0].mxu0
      %v894 = vadd.f32 0.0, %v893
      %v895 = vpop.f32.mrb[0].mxu0
      %896 = vdwg.mxu0
      %v897 = vadd.f32 %v727, %v867
      %v898 = vadd.f32 %v728, %v870
      %v899 = vadd.f32 %v729, %v875
      %v900 = vadd.f32 %v730, %v878
      %v901 = vadd.f32 %v731, %v883
      %v902 = vadd.f32 %v732, %v886
      %v903 = vadd.f32 %v733, %v891
      %v904 = vadd.f32 %v734, %v894
      %v905 = vld [vmem:[%s225 + $0x8] sm:$0xf]
      %v906 = vld [vmem:[%s225 + $0xc] sm:$0xf]
      %v907 = vld [vmem:[%s225 + $0x10] sm:$0xf]
      %v908 = vld [vmem:[%s225 + $0x14] sm:$0xf]
      %v909 = vld [vmem:[%s225 + $0x18] sm:$0xf]
      %v910 = vld [vmem:[%s225 + $0x1c] sm:$0xf]
      %v911 = vld [vmem:[%s225 + $0x20] sm:$0xf]
      %v912 = vld [vmem:[%s225 + $0x24] sm:$0xf]
      %s913 = scalar_lea.vmem %s2, 256
      %v914 = vld [vmem:[%s913] sm:$0xf]
      %v915 = vld [vmem:[%s913 + $0x4] sm:$0xf]
      %v916 = vld [vmem:[%s913 + $0x8] sm:$0xf]
      %v917 = vld [vmem:[%s913 + $0xc] sm:$0xf]
      %v918 = vld [vmem:[%s913 + $0x10] sm:$0xf]
      %v919 = vld [vmem:[%s913 + $0x14] sm:$0xf]
      %v920 = vld [vmem:[%s913 + $0x18] sm:$0xf]
      %v921 = vld [vmem:[%s913 + $0x1c] sm:$0xf]
      %v922 = vld [vmem:[%s913 + $0x20] sm:$0xf]
      %v923 = vld [vmem:[%s913 + $0x24] sm:$0xf]
      %v924 = vld [vmem:[%s913 + $0x28] sm:$0xf]
      %v925 = vld [vmem:[%s913 + $0x2c] sm:$0xf]
      %v926 = vld [vmem:[%s913 + $0x30] sm:$0xf]
      %v927 = vld [vmem:[%s913 + $0x34] sm:$0xf]
      %v928 = vld [vmem:[%s913 + $0x38] sm:$0xf]
      %v929 = vld [vmem:[%s913 + $0x3c] sm:$0xf]
      %v938 = vunpack.c.l.b16 %v905
      %v939 = vunpack.c.l.b16 %v906
      %v940 = vunpack.c.l.b16 %v907
      %v941 = vunpack.c.l.b16 %v908
      %v942 = vunpack.c.l.b16 %v909
      %v943 = vunpack.c.l.b16 %v910
      %v944 = vunpack.c.l.b16 %v911
      %v945 = vunpack.c.l.b16 %v912
      %v946 = vpack.c.b16 %v939, %v938
      %v947 = vpack.c.b16 %v941, %v940
      %v948 = vpack.c.b16 %v943, %v942
      %v949 = vpack.c.b16 %v945, %v944
      %v970 = vunpack.c.l.b16 %v914
      %v971 = vunpack.c.l.b16 %v915
      %v972 = vunpack.c.l.b16 %v916
      %v973 = vunpack.c.l.b16 %v917
      %v974 = vunpack.c.l.b16 %v918
      %v975 = vunpack.c.l.b16 %v919
      %v976 = vunpack.c.l.b16 %v920
      %v977 = vunpack.c.l.b16 %v921
      %v978 = vunpack.c.l.b16 %v922
      %v979 = vunpack.c.l.b16 %v923
      %v980 = vunpack.c.l.b16 %v924
      %v981 = vunpack.c.l.b16 %v925
      %v982 = vunpack.c.l.b16 %v926
      %v983 = vunpack.c.l.b16 %v927
      %v984 = vunpack.c.l.b16 %v928
      %v985 = vunpack.c.l.b16 %v929
      %v986 = vpack.c.b16 %v971, %v970
      %v987 = vpack.c.b16 %v973, %v972
      %v988 = vpack.c.b16 %v975, %v974
      %v989 = vpack.c.b16 %v977, %v976
      %v990 = vpack.c.b16 %v979, %v978
      %v991 = vpack.c.b16 %v981, %v980
      %v992 = vpack.c.b16 %v983, %v982
      %v993 = vpack.c.b16 %v985, %v984
      %1002 = vmatprep.subr.bf16.mxu0 0
      %1003 = vmatpush1.bf16.msra.mxu0 %v986
      %1004 = vmatprep.subr.bf16.mxu0 0
      %1005 = vmatpush1.bf16.msra.mxu0 %v987
      %1006 = vmatprep.subr.bf16.mxu0 0
      %1007 = vmatpush1.bf16.msra.mxu0 %v988
      %1008 = vmatprep.subr.bf16.mxu0 0
      %1009 = vmatpush1.bf16.msra.mxu0 %v989
      %1010 = vmatprep.subr.bf16.mxu0 0
      %1011 = vmatpush1.bf16.msra.mxu0 %v990
      %1012 = vmatprep.subr.bf16.mxu0 0
      %1013 = vmatpush1.bf16.msra.mxu0 %v991
      %1014 = vmatprep.subr.bf16.mxu0 0
      %1015 = vmatpush1.bf16.msra.mxu0 %v992
      %1016 = vmatprep.subr.bf16.mxu0 0
      %1017 = vmatpush1.bf16.msra.mxu0 %v993
      %1018 = vmatprep.subr.bf16.mxu0 0
      %1019 = vmatpush1.bf16.msra.mxu0 0
      %1020 = vmatprep.subr.bf16.mxu0 0
      %1021 = vmatpush1.bf16.msra.mxu0 0
      %1022 = vmatprep.subr.bf16.mxu0 0
      %1023 = vmatpush1.bf16.msra.mxu0 0
      %1024 = vmatprep.subr.bf16.mxu0 0
      %1025 = vmatpush1.bf16.msra.mxu0 0
      %1026 = vmatprep.subr.bf16.mxu0 0
      %1027 = vmatpush1.bf16.msra.mxu0 0
      %1028 = vmatprep.subr.bf16.mxu0 0
      %1029 = vmatpush1.bf16.msra.mxu0 0
      %1030 = vmatprep.subr.bf16.mxu0 0
      %1031 = vmatpush1.bf16.msra.mxu0 0
      %1032 = vmatprep.subr.bf16.mxu0 0
      %1033 = vmatpush1.bf16.msra.mxu0 0
      %1034 = vmatprep.mubr.bf16.mxu0 0
      %1035 = vmatmul.mubr.bf16.gmra.mrb[0].mxu0 %v946
      %v1036 = vpop.f32.mrb[0].mxu0
      %v1037 = vadd.f32 0.0, %v1036
      %v1038 = vpop.f32.mrb[0].mxu0
      %v1039 = vpop.f32.mrb[0].mxu0
      %v1040 = vadd.f32 0.0, %v1039
      %v1041 = vpop.f32.mrb[0].mxu0
      %1042 = vmatprep.mubr.bf16.mxu0 0
      %1043 = vmatmul.mubr.bf16.gmra.mrb[0].mxu0 %v947
      %v1044 = vpop.f32.mrb[0].mxu0
      %v1045 = vadd.f32 0.0, %v1044
      %v1046 = vpop.f32.mrb[0].mxu0
      %v1047 = vpop.f32.mrb[0].mxu0
      %v1048 = vadd.f32 0.0, %v1047
      %v1049 = vpop.f32.mrb[0].mxu0
      %1050 = vmatprep.mubr.bf16.mxu0 0
      %1051 = vmatmul.mubr.bf16.gmra.mrb[0].mxu0 %v948
      %v1052 = vpop.f32.mrb[0].mxu0
      %v1053 = vadd.f32 0.0, %v1052
      %v1054 = vpop.f32.mrb[0].mxu0
      %v1055 = vpop.f32.mrb[0].mxu0
      %v1056 = vadd.f32 0.0, %v1055
      %v1057 = vpop.f32.mrb[0].mxu0
      %1058 = vmatprep.mubr.bf16.mxu0 0
      %1059 = vmatmul.mubr.bf16.gmra.mrb[0].mxu0 %v949
      %v1060 = vpop.f32.mrb[0].mxu0
      %v1061 = vadd.f32 0.0, %v1060
      %v1062 = vpop.f32.mrb[0].mxu0
      %v1063 = vpop.f32.mrb[0].mxu0
      %v1064 = vadd.f32 0.0, %v1063
      %v1065 = vpop.f32.mrb[0].mxu0
      %1066 = vdwg.mxu0
      %v1067 = vadd.f32 %v897, %v1037
      %v1068 = vadd.f32 %v898, %v1040
      %v1069 = vadd.f32 %v899, %v1045
      %v1070 = vadd.f32 %v900, %v1048
      %v1071 = vadd.f32 %v901, %v1053
      %v1072 = vadd.f32 %v902, %v1056
      %v1073 = vadd.f32 %v903, %v1061
      %v1074 = vadd.f32 %v904, %v1064
      %v1075 = vld [vmem:[%s230 + $0x8] sm:$0xf]
      %v1076 = vld [vmem:[%s230 + $0xc] sm:$0xf]
      %v1077 = vld [vmem:[%s230 + $0x10] sm:$0xf]
      %v1078 = vld [vmem:[%s230 + $0x14] sm:$0xf]
      %v1079 = vld [vmem:[%s230 + $0x18] sm:$0xf]
      %v1080 = vld [vmem:[%s230 + $0x1c] sm:$0xf]
      %v1081 = vld [vmem:[%s230 + $0x20] sm:$0xf]
      %v1082 = vld [vmem:[%s230 + $0x24] sm:$0xf]
      %s1083 = scalar_lea.vmem %s2, 320
      %v1084 = vld [vmem:[%s1083] sm:$0xf]
      %v1085 = vld [vmem:[%s1083 + $0x4] sm:$0xf]
      %v1086 = vld [vmem:[%s1083 + $0x8] sm:$0xf]
      %v1087 = vld [vmem:[%s1083 + $0xc] sm:$0xf]
      %v1088 = vld [vmem:[%s1083 + $0x10] sm:$0xf]
      %v1089 = vld [vmem:[%s1083 + $0x14] sm:$0xf]
      %v1090 = vld [vmem:[%s1083 + $0x18] sm:$0xf]
      %v1091 = vld [vmem:[%s1083 + $0x1c] sm:$0xf]
      %v1092 = vld [vmem:[%s1083 + $0x20] sm:$0xf]
      %v1093 = vld [vmem:[%s1083 + $0x24] sm:$0xf]
      %v1094 = vld [vmem:[%s1083 + $0x28] sm:$0xf]
      %v1095 = vld [vmem:[%s1083 + $0x2c] sm:$0xf]
      %v1096 = vld [vmem:[%s1083 + $0x30] sm:$0xf]
      %v1097 = vld [vmem:[%s1083 + $0x34] sm:$0xf]
      %v1098 = vld [vmem:[%s1083 + $0x38] sm:$0xf]
      %v1099 = vld [vmem:[%s1083 + $0x3c] sm:$0xf]
      %v1108 = vunpack.c.l.b16 %v1075
      %v1109 = vunpack.c.l.b16 %v1076
      %v1110 = vunpack.c.l.b16 %v1077
      %v1111 = vunpack.c.l.b16 %v1078
      %v1112 = vunpack.c.l.b16 %v1079
      %v1113 = vunpack.c.l.b16 %v1080
      %v1114 = vunpack.c.l.b16 %v1081
      %v1115 = vunpack.c.l.b16 %v1082
      %v1116 = vpack.c.b16 %v1109, %v1108
      %v1117 = vpack.c.b16 %v1111, %v1110
      %v1118 = vpack.c.b16 %v1113, %v1112
      %v1119 = vpack.c.b16 %v1115, %v1114
      %v1140 = vunpack.c.l.b16 %v1084
      %v1141 = vunpack.c.l.b16 %v1085
      %v1142 = vunpack.c.l.b16 %v1086
      %v1143 = vunpack.c.l.b16 %v1087
      %v1144 = vunpack.c.l.b16 %v1088
      %v1145 = vunpack.c.l.b16 %v1089
      %v1146 = vunpack.c.l.b16 %v1090
      %v1147 = vunpack.c.l.b16 %v1091
      %v1148 = vunpack.c.l.b16 %v1092
      %v1149 = vunpack.c.l.b16 %v1093
      %v1150 = vunpack.c.l.b16 %v1094
      %v1151 = vunpack.c.l.b16 %v1095
      %v1152 = vunpack.c.l.b16 %v1096
      %v1153 = vunpack.c.l.b16 %v1097
      %v1154 = vunpack.c.l.b16 %v1098
      %v1155 = vunpack.c.l.b16 %v1099
      %v1156 = vpack.c.b16 %v1141, %v1140
      %v1157 = vpack.c.b16 %v1143, %v1142
      %v1158 = vpack.c.b16 %v1145, %v1144
      %v1159 = vpack.c.b16 %v1147, %v1146
      %v1160 = vpack.c.b16 %v1149, %v1148
      %v1161 = vpack.c.b16 %v1151, %v1150
      %v1162 = vpack.c.b16 %v1153, %v1152
      %v1163 = vpack.c.b16 %v1155, %v1154
      %1172 = vmatprep.subr.bf16.mxu0 0
      %1173 = vmatpush1.bf16.msra.mxu0 %v1156
      %1174 = vmatprep.subr.bf16.mxu0 0
      %1175 = vmatpush1.bf16.msra.mxu0 %v1157
      %1176 = vmatprep.subr.bf16.mxu0 0
      %1177 = vmatpush1.bf16.msra.mxu0 %v1158
      %1178 = vmatprep.subr.bf16.mxu0 0
      %1179 = vmatpush1.bf16.msra.mxu0 %v1159
      %1180 = vmatprep.subr.bf16.mxu0 0
      %1181 = vmatpush1.bf16.msra.mxu0 %v1160
      %1182 = vmatprep.subr.bf16.mxu0 0
      %1183 = vmatpush1.bf16.msra.mxu0 %v1161
      %1184 = vmatprep.subr.bf16.mxu0 0
      %1185 = vmatpush1.bf16.msra.mxu0 %v1162
      %1186 = vmatprep.subr.bf16.mxu0 0
      %1187 = vmatpush1.bf16.msra.mxu0 %v1163
      %1188 = vmatprep.subr.bf16.mxu0 0
      %1189 = vmatpush1.bf16.msra.mxu0 0
      %1190 = vmatprep.subr.bf16.mxu0 0
      %1191 = vmatpush1.bf16.msra.mxu0 0
      %1192 = vmatprep.subr.bf16.mxu0 0
      %1193 = vmatpush1.bf16.msra.mxu0 0
      %1194 = vmatprep.subr.bf16.mxu0 0
      %1195 = vmatpush1.bf16.msra.mxu0 0
      %1196 = vmatprep.subr.bf16.mxu0 0
      %1197 = vmatpush1.bf16.msra.mxu0 0
      %1198 = vmatprep.subr.bf16.mxu0 0
      %1199 = vmatpush1.bf16.msra.mxu0 0
      %1200 = vmatprep.subr.bf16.mxu0 0
      %1201 = vmatpush1.bf16.msra.mxu0 0
      %1202 = vmatprep.subr.bf16.mxu0 0
      %1203 = vmatpush1.bf16.msra.mxu0 0
      %1204 = vmatprep.mubr.bf16.mxu0 0
      %1205 = vmatmul.mubr.bf16.gmra.mrb[0].mxu0 %v1116
      %v1206 = vpop.f32.mrb[0].mxu0
      %v1207 = vadd.f32 0.0, %v1206
      %v1208 = vpop.f32.mrb[0].mxu0
      %v1209 = vpop.f32.mrb[0].mxu0
      %v1210 = vadd.f32 0.0, %v1209
      %v1211 = vpop.f32.mrb[0].mxu0
      %1212 = vmatprep.mubr.bf16.mxu0 0
      %1213 = vmatmul.mubr.bf16.gmra.mrb[0].mxu0 %v1117
      %v1214 = vpop.f32.mrb[0].mxu0
      %v1215 = vadd.f32 0.0, %v1214
      %v1216 = vpop.f32.mrb[0].mxu0
      %v1217 = vpop.f32.mrb[0].mxu0
      %v1218 = vadd.f32 0.0, %v1217
      %v1219 = vpop.f32.mrb[0].mxu0
      %1220 = vmatprep.mubr.bf16.mxu0 0
      %1221 = vmatmul.mubr.bf16.gmra.mrb[0].mxu0 %v1118
      %v1222 = vpop.f32.mrb[0].mxu0
      %v1223 = vadd.f32 0.0, %v1222
      %v1224 = vpop.f32.mrb[0].mxu0
      %v1225 = vpop.f32.mrb[0].mxu0
      %v1226 = vadd.f32 0.0, %v1225
      %v1227 = vpop.f32.mrb[0].mxu0
      %1228 = vmatprep.mubr.bf16.mxu0 0
      %1229 = vmatmul.mubr.bf16.gmra.mrb[0].mxu0 %v1119
      %v1230 = vpop.f32.mrb[0].mxu0
      %v1231 = vadd.f32 0.0, %v1230
      %v1232 = vpop.f32.mrb[0].mxu0
      %v1233 = vpop.f32.mrb[0].mxu0
      %v1234 = vadd.f32 0.0, %v1233
      %v1235 = vpop.f32.mrb[0].mxu0
      %1236 = vdwg.mxu0
      %v1237 = vadd.f32 %v1067, %v1207
      %v1238 = vadd.f32 %v1068, %v1210
      %v1239 = vadd.f32 %v1069, %v1215
      %v1240 = vadd.f32 %v1070, %v1218
      %v1241 = vadd.f32 %v1071, %v1223
      %v1242 = vadd.f32 %v1072, %v1226
      %v1243 = vadd.f32 %v1073, %v1231
      %v1244 = vadd.f32 %v1074, %v1234
      %v1245 = vld [vmem:[%s225 + $0xc] sm:$0xf]
      %v1246 = vld [vmem:[%s225 + $0x10] sm:$0xf]
      %v1247 = vld [vmem:[%s225 + $0x14] sm:$0xf]
      %v1248 = vld [vmem:[%s225 + $0x18] sm:$0xf]
      %v1249 = vld [vmem:[%s225 + $0x1c] sm:$0xf]
      %v1250 = vld [vmem:[%s225 + $0x20] sm:$0xf]
      %v1251 = vld [vmem:[%s225 + $0x24] sm:$0xf]
      %v1252 = vld [vmem:[%s225 + $0x28] sm:$0xf]
      %s1253 = scalar_lea.vmem %s2, 384
      %v1254 = vld [vmem:[%s1253] sm:$0xf]
      %v1255 = vld [vmem:[%s1253 + $0x4] sm:$0xf]
      %v1256 = vld [vmem:[%s1253 + $0x8] sm:$0xf]
      %v1257 = vld [vmem:[%s1253 + $0xc] sm:$0xf]
      %v1258 = vld [vmem:[%s1253 + $0x10] sm:$0xf]
      %v1259 = vld [vmem:[%s1253 + $0x14] sm:$0xf]
      %v1260 = vld [vmem:[%s1253 + $0x18] sm:$0xf]
      %v1261 = vld [vmem:[%s1253 + $0x1c] sm:$0xf]
      %v1262 = vld [vmem:[%s1253 + $0x20] sm:$0xf]
      %v1263 = vld [vmem:[%s1253 + $0x24] sm:$0xf]
      %v1264 = vld [vmem:[%s1253 + $0x28] sm:$0xf]
      %v1265 = vld [vmem:[%s1253 + $0x2c] sm:$0xf]
      %v1266 = vld [vmem:[%s1253 + $0x30] sm:$0xf]
      %v1267 = vld [vmem:[%s1253 + $0x34] sm:$0xf]
      %v1268 = vld [vmem:[%s1253 + $0x38] sm:$0xf]
      %v1269 = vld [vmem:[%s1253 + $0x3c] sm:$0xf]
      %v1278 = vunpack.c.l.b16 %v1245
      %v1279 = vunpack.c.l.b16 %v1246
      %v1280 = vunpack.c.l.b16 %v1247
      %v1281 = vunpack.c.l.b16 %v1248
      %v1282 = vunpack.c.l.b16 %v1249
      %v1283 = vunpack.c.l.b16 %v1250
      %v1284 = vunpack.c.l.b16 %v1251
      %v1285 = vunpack.c.l.b16 %v1252
      %v1286 = vpack.c.b16 %v1279, %v1278
      %v1287 = vpack.c.b16 %v1281, %v1280
      %v1288 = vpack.c.b16 %v1283, %v1282
      %v1289 = vpack.c.b16 %v1285, %v1284
      %v1310 = vunpack.c.l.b16 %v1254
      %v1311 = vunpack.c.l.b16 %v1255
      %v1312 = vunpack.c.l.b16 %v1256
      %v1313 = vunpack.c.l.b16 %v1257
      %v1314 = vunpack.c.l.b16 %v1258
      %v1315 = vunpack.c.l.b16 %v1259
      %v1316 = vunpack.c.l.b16 %v1260
      %v1317 = vunpack.c.l.b16 %v1261
      %v1318 = vunpack.c.l.b16 %v1262
      %v1319 = vunpack.c.l.b16 %v1263
      %v1320 = vunpack.c.l.b16 %v1264
      %v1321 = vunpack.c.l.b16 %v1265
      %v1322 = vunpack.c.l.b16 %v1266
      %v1323 = vunpack.c.l.b16 %v1267
      %v1324 = vunpack.c.l.b16 %v1268
      %v1325 = vunpack.c.l.b16 %v1269
      %v1326 = vpack.c.b16 %v1311, %v1310
      %v1327 = vpack.c.b16 %v1313, %v1312
      %v1328 = vpack.c.b16 %v1315, %v1314
      %v1329 = vpack.c.b16 %v1317, %v1316
      %v1330 = vpack.c.b16 %v1319, %v1318
      %v1331 = vpack.c.b16 %v1321, %v1320
      %v1332 = vpack.c.b16 %v1323, %v1322
      %v1333 = vpack.c.b16 %v1325, %v1324
      %1342 = vmatprep.subr.bf16.mxu0 0
      %1343 = vmatpush1.bf16.msra.mxu0 %v1326
      %1344 = vmatprep.subr.bf16.mxu0 0
      %1345 = vmatpush1.bf16.msra.mxu0 %v1327
      %1346 = vmatprep.subr.bf16.mxu0 0
      %1347 = vmatpush1.bf16.msra.mxu0 %v1328
      %1348 = vmatprep.subr.bf16.mxu0 0
      %1349 = vmatpush1.bf16.msra.mxu0 %v1329
      %1350 = vmatprep.subr.bf16.mxu0 0
      %1351 = vmatpush1.bf16.msra.mxu0 %v1330
      %1352 = vmatprep.subr.bf16.mxu0 0
      %1353 = vmatpush1.bf16.msra.mxu0 %v1331
      %1354 = vmatprep.subr.bf16.mxu0 0
      %1355 = vmatpush1.bf16.msra.mxu0 %v1332
      %1356 = vmatprep.subr.bf16.mxu0 0
      %1357 = vmatpush1.bf16.msra.mxu0 %v1333
      %1358 = vmatprep.subr.bf16.mxu0 0
      %1359 = vmatpush1.bf16.msra.mxu0 0
      %1360 = vmatprep.subr.bf16.mxu0 0
      %1361 = vmatpush1.bf16.msra.mxu0 0
      %1362 = vmatprep.subr.bf16.mxu0 0
      %1363 = vmatpush1.bf16.msra.mxu0 0
      %1364 = vmatprep.subr.bf16.mxu0 0
      %1365 = vmatpush1.bf16.msra.mxu0 0
      %1366 = vmatprep.subr.bf16.mxu0 0
      %1367 = vmatpush1.bf16.msra.mxu0 0
      %1368 = vmatprep.subr.bf16.mxu0 0
      %1369 = vmatpush1.bf16.msra.mxu0 0
      %1370 = vmatprep.subr.bf16.mxu0 0
      %1371 = vmatpush1.bf16.msra.mxu0 0
      %1372 = vmatprep.subr.bf16.mxu0 0
      %1373 = vmatpush1.bf16.msra.mxu0 0
      %1374 = vmatprep.mubr.bf16.mxu0 0
      %1375 = vmatmul.mubr.bf16.gmra.mrb[0].mxu0 %v1286
      %v1376 = vpop.f32.mrb[0].mxu0
      %v1377 = vadd.f32 0.0, %v1376
      %v1378 = vpop.f32.mrb[0].mxu0
      %v1379 = vpop.f32.mrb[0].mxu0
      %v1380 = vadd.f32 0.0, %v1379
      %v1381 = vpop.f32.mrb[0].mxu0
      %1382 = vmatprep.mubr.bf16.mxu0 0
      %1383 = vmatmul.mubr.bf16.gmra.mrb[0].mxu0 %v1287
      %v1384 = vpop.f32.mrb[0].mxu0
      %v1385 = vadd.f32 0.0, %v1384
      %v1386 = vpop.f32.mrb[0].mxu0
      %v1387 = vpop.f32.mrb[0].mxu0
      %v1388 = vadd.f32 0.0, %v1387
      %v1389 = vpop.f32.mrb[0].mxu0
      %1390 = vmatprep.mubr.bf16.mxu0 0
      %1391 = vmatmul.mubr.bf16.gmra.mrb[0].mxu0 %v1288
      %v1392 = vpop.f32.mrb[0].mxu0
      %v1393 = vadd.f32 0.0, %v1392
      %v1394 = vpop.f32.mrb[0].mxu0
      %v1395 = vpop.f32.mrb[0].mxu0
      %v1396 = vadd.f32 0.0, %v1395
      %v1397 = vpop.f32.mrb[0].mxu0
      %1398 = vmatprep.mubr.bf16.mxu0 0
      %1399 = vmatmul.mubr.bf16.gmra.mrb[0].mxu0 %v1289
      %v1400 = vpop.f32.mrb[0].mxu0
      %v1401 = vadd.f32 0.0, %v1400
      %v1402 = vpop.f32.mrb[0].mxu0
      %v1403 = vpop.f32.mrb[0].mxu0
      %v1404 = vadd.f32 0.0, %v1403
      %v1405 = vpop.f32.mrb[0].mxu0
      %1406 = vdwg.mxu0
      %v1407 = vadd.f32 %v1237, %v1377
      %v1408 = vadd.f32 %v1238, %v1380
      %v1409 = vadd.f32 %v1239, %v1385
      %v1410 = vadd.f32 %v1240, %v1388
      %v1411 = vadd.f32 %v1241, %v1393
      %v1412 = vadd.f32 %v1242, %v1396
      %v1413 = vadd.f32 %v1243, %v1401
      %v1414 = vadd.f32 %v1244, %v1404
      %v1415 = vld [vmem:[%s3] sm:$0x1]
      %v1417 = vlaneseq
      %v1418 = vshrl.u32 %v1417, 7
      %v1419 = vsub.s32 0, %v1418
      %v1420 = vrot.slane %v1415, %v1419
      %v1422 = vadd.f32 %v1407, %v1420
      %v1423 = vadd.f32 %v1408, %v1420
      %v1424 = vadd.f32 %v1409, %v1420
      %v1425 = vadd.f32 %v1410, %v1420
      %v1426 = vadd.f32 %v1411, %v1420
      %v1427 = vadd.f32 %v1412, %v1420
      %v1428 = vadd.f32 %v1413, %v1420
      %v1429 = vadd.f32 %v1414, %v1420
      %v1430 = vlaneseq
      %v1431 = vand.u32 %v1430, 127
      %vm1432 = vcmp.lt.s32.totalorder %v1431, 64
      %v1433 = vmax.f32 %v1422, 0.0
      %v1434 = vmax.f32 %v1423, 0.0
      %v1435 = vmax.f32 %v1424, 0.0
      %v1436 = vmax.f32 %v1425, 0.0
      %v1437 = vmax.f32 %v1426, 0.0
      %v1438 = vmax.f32 %v1427, 0.0
      %v1439 = vmax.f32 %v1428, 0.0
      %v1440 = vmax.f32 %v1429, 0.0
      %v1441 = vsel %vm1432, %v1433, %v1422
      %v1442 = vsel %vm1432, %v1434, %v1423
      %v1443 = vsel %vm1432, %v1435, %v1424
      %v1444 = vsel %vm1432, %v1436, %v1425
      %v1445 = vsel %vm1432, %v1437, %v1426
      %v1446 = vsel %vm1432, %v1438, %v1427
      %v1447 = vsel %vm1432, %v1439, %v1428
      %v1448 = vsel %vm1432, %v1440, %v1429
      %v1449 = vpack.c.bf16 %v1442, %v1441
      %v1450 = vpack.c.bf16 %v1444, %v1443
      %v1451 = vpack.c.bf16 %v1446, %v1445
      %v1452 = vpack.c.bf16 %v1448, %v1447
      %v1457 = vunpack.c.l.b16 %v1449
      %v1458 = vunpack.c.h.b16 %v1449
      %v1459 = vunpack.c.l.b16 %v1450
      %v1460 = vunpack.c.h.b16 %v1450
      %v1461 = vunpack.c.l.b16 %v1451
      %v1462 = vunpack.c.h.b16 %v1451
      %v1463 = vunpack.c.l.b16 %v1452
      %v1464 = vunpack.c.h.b16 %v1452
      %v1465 = vpack.c.b16 %v1457, %v1457
      %v1466 = vpack.c.b16 %v1458, %v1458
      %v1467 = vpack.c.b16 %v1459, %v1459
      %v1468 = vpack.c.b16 %v1460, %v1460
      %v1469 = vpack.c.b16 %v1461, %v1461
      %v1470 = vpack.c.b16 %v1462, %v1462
      %v1471 = vpack.c.b16 %v1463, %v1463
      %v1472 = vpack.c.b16 %v1464, %v1464
      %1481 = vst [vmem:[%s239] sm:$0xf] %v1465
      %1482 = vst [vmem:[%s239 + $0x4] sm:$0xf] %v1466
      %1483 = vst [vmem:[%s239 + $0x8] sm:$0xf] %v1467
      %1484 = vst [vmem:[%s239 + $0xc] sm:$0xf] %v1468
      %1485 = vst [vmem:[%s239 + $0x10] sm:$0xf] %v1469
      %1486 = vst [vmem:[%s239 + $0x14] sm:$0xf] %v1470
      %1487 = vst [vmem:[%s239 + $0x18] sm:$0xf] %v1471
      %1488 = vst [vmem:[%s239 + $0x1c] sm:$0xf] %v1472
      %s1489 = smul.u32 8, %s20
      %p1490 = scmp.lt.s32.totalorder %s19, 1
      %s1491 = scalar_select %p1490, %s19, 1
      %p1492 = scmp.lt.s32.totalorder %s1489, 7
      %s1493 = scalar_select %p1492, %s1489, 7
      %s1494 = smul.addr %s1491, 8
      %s1495 = sadd.s32 %s1493, %s1494
      %s1496 = smul.addr %s1495, 4
      %s1497 = scalar_lea.vmem %s4, %s1496
      // Predicated region
      $region37: #{conv_maxpool2d_forward.3} parent=35 // pred_check
        %p1498 = pneg %p141
      $region38: #{conv_maxpool2d_forward.3} parent=35 // pred_check_branch
        %1500 = sbr.rel (%p1498) target = $region40
      $region39: #{conv_maxpool2d_forward.3} parent=35 // pred_region
        %s1501 = smul.u32 8, %s20
      $region40: #{conv_maxpool2d_forward.3} parent=35 // pred_fallthru
        _
    $region36: #{conv_maxpool2d_forward.3} parent=5 // pred_fallthru
      _
    %p1502 = scmp.le.s32.totalorder 2, %s10
    // Predicated region
    $region41: #{conv_maxpool2d_forward.3} parent=5 // pred_check
      %p1503 = pneg %p1502
    $region42: #{conv_maxpool2d_forward.3} parent=5 // pred_check_branch
      %1505 = sbr.rel (%p1503) target = $region44
    $region43: #{conv_maxpool2d_forward.3} parent=5 // pred_region
      %s1506 = ssub.s32 %s10, 2
      // Predicated region
      $region45: #{conv_maxpool2d_forward.3} parent=43 // pred_check
        %p1507 = pneg %p147
      $region46: #{conv_maxpool2d_forward.3} parent=43 // pred_check_branch
        %1509 = sbr.rel (%p1507) target = $region48
      $region47: #{conv_maxpool2d_forward.3} parent=43 // pred_region
        %s1510 = smul.u32 8, %s22
        %p1511 = scmp.lt.s32.totalorder %s21, 1
        %s1512 = scalar_select %p1511, %s21, 1
        %p1513 = scmp.lt.s32.totalorder %s1510, 7
        %s1514 = scalar_select %p1513, %s1510, 7
        %s1515 = smul.addr %s1512, 8
        %s1516 = sadd.s32 %s1514, %s1515
        %s1517 = smul.addr %s1516, 4
        %s1518 = scalar_lea.vmem %s4, %s1517
      $region48: #{conv_maxpool2d_forward.3} parent=43 // pred_fallthru
        _
    $region44: #{conv_maxpool2d_forward.3} parent=5 // pred_fallthru
      _
  $region6: #{conv_maxpool2d_forward.3} parent=0 // loop_footer
    %s14 = sadd.s32 1, %s10
  $region7: #{conv_maxpool2d_forward.3} parent=0 // loop_footer_branch
    %9 = sbr.rel target = $region3
  $region8: #{conv_maxpool2d_forward.3} parent=0 // loop_exit
    _

// kernel: conv_maxpool2d_forward.5
$region0: #{conv_maxpool2d_forward.5}
  #allocation0 [shape = 'u32[]', space=smem, size = 0x4, offset = 0x4, fixed_abs, tag = 'smem constant byte address 0x4 - core index']
  #allocation1 [shape = 'u32[144,128]{1,0:T(1,128)}', space=vmem, size = 0x12000, scoped, tag = 'internal scratch']
  %s0 = inlined_call_operand.vmem [shape: bf16[2,10,896], index: 0, kind: input, shape index: {}]
  %s1 = inlined_call_operand.vmem [shape: bf16[2,10,896], index: 1, kind: input, shape index: {}]
  %s2 = inlined_call_operand.vmem [shape: bf16[7,896,128], index: 2, kind: input, shape index: {}]
  %s3 = inlined_call_operand.vmem [shape: f32[1,128], index: 3, kind: input, shape index: {}]
  %s4 = inlined_call_operand.hbm [shape: f32[2,4,128], index: 4, kind: output, shape index: {}]
  %s5 = sld [smem:[#allocation0]]
  $region49: #{conv_maxpool2d_forward.5} parent=0
    _
  %s7 = ssub.s32 1, %s5
  %s8 = scalar_select 0, %s7, %s5
  $region1: #{conv_maxpool2d_forward.5} parent=0
    #allocation2 [shape = 'u8[4096]{0}', space=vmem, size = 0x1000, scoped, tag = 'output window, operand 0']
    #allocation3 [shape = 's32[2]{0}', space=sflag, size = 0x8, scoped, tag = 'scoped memory for conv_maxpool2d_forward.5']
    %9 = vsyncpa [#allocation3], 0
    %s10 = scalar_lea.sflag [#allocation3], 1
    %11 = vsyncpa %s10, 0
    loop: start=0, step=1, limit=4
    $region2: #{conv_maxpool2d_forward.5} parent=1 // loop_pre_header
      _
    $region3: #{conv_maxpool2d_forward.5} parent=1 // loop_header
      %s13 = sphi 0, %s17
      %p14 = scmp.ge.s32.totalorder %s13, 4
      %s20 = sphi 0, %s32
      %s21 = sphi 0, %s28
      %s22 = sphi 0, %s20
      %s23 = sphi 0, %s21
      %s24 = sphi 0, %s22
      %s25 = sphi 0, %s23
      %s35 = sphi 0, %s37
      %s38 = sphi 0, %s35
      %s39 = sphi 0, %s38
      %s55 = sphi 0, %s39
      %s61 = sphi 0, %s63
      %s64 = sphi 0, %s61
      %s65 = sphi 0, %s64
      %s81 = sphi 0, %s65
      %s85 = sphi 0, %s85
      %s87 = sphi 0, %s85
      %s88 = sphi 0, %s87
      %s102 = sphi 0, %s88
      %s106 = sphi 0, %s106
      %s108 = sphi 0, %s106
      %s109 = sphi 0, %s108
      %s123 = sphi 0, %s109
      %s131 = sphi 0, %s133
      %s134 = sphi 0, %s131
      %s135 = sphi 0, %s134
      %s151 = sphi 0, %s135
    $region4: #{conv_maxpool2d_forward.5} parent=1 // loop_header_branch
      %16 = sbr.rel (%p14) target = $region8
    $region5: #{conv_maxpool2d_forward.5} parent=1 // loop_body
      %s18 = ssub.s32 %s13, 1
      %s19 = ssub.s32 %s13, 2
      %s26 = sadd.s32 1, %s21
      %p27 = scmp.ge.s32.totalorder %s26, 1
      %s28 = scalar_select %p27, 0, %s26
      %s29 = sadd.s32 1, %s20
      %s30 = scalar_select %p27, %s29, %s20
      %p31 = scmp.ge.s32.totalorder %s30, 2
      %s32 = scalar_select %p31, 0, %s30
      %s33 = ssub.s32 %s20, %s32
      %p34 = scmp.eq.s32.totalorder %s33, 0
      %s36 = sadd.s32 %s35, 1
      %s37 = scalar_select %p34, %s35, %s36
      %p40 = pneg %p34
      %p41 = scmp.eq.s32.totalorder %s13, 1
      %p42 = por %p40, %p41
      %p43 = scmp.ne.s32.totalorder %s35, %s38
      %p44 = scmp.eq.s32.totalorder %s13, 0
      %p45 = por %p43, %p44
      %p46 = scmp.ne.s32.totalorder %s35, %s38
      %p47 = scmp.eq.s32.totalorder %s18, 1
      %p48 = por %p46, %p47
      %p49 = scmp.ne.s32.totalorder %s38, %s39
      %p50 = scmp.eq.s32.totalorder %s18, 0
      %p51 = por %p49, %p50
      %p52 = scmp.ne.s32.totalorder %s38, %s39
      %p53 = scmp.eq.s32.totalorder %s19, 1
      %p54 = por %p52, %p53
      %p56 = scmp.ne.s32.totalorder %s39, %s55
      %p57 = scmp.eq.s32.totalorder %s19, 0
      %p58 = por %p56, %p57
      %s59 = ssub.s32 %s20, %s32
      %p60 = scmp.eq.s32.totalorder %s59, 0
      %s62 = sadd.s32 %s61, 1
      %s63 = scalar_select %p60, %s61, %s62
      %p66 = pneg %p60
      %p67 = scmp.eq.s32.totalorder %s13, 1
      %p68 = por %p66, %p67
      %p69 = scmp.ne.s32.totalorder %s61, %s64
      %p70 = scmp.eq.s32.totalorder %s13, 0
      %p71 = por %p69, %p70
      %p72 = scmp.ne.s32.totalorder %s61, %s64
      %p73 = scmp.eq.s32.totalorder %s18, 1
      %p74 = por %p72, %p73
      %p75 = scmp.ne.s32.totalorder %s64, %s65
      %p76 = scmp.eq.s32.totalorder %s18, 0
      %p77 = por %p75, %p76
      %p78 = scmp.ne.s32.totalorder %s64, %s65
      %p79 = scmp.eq.s32.totalorder %s19, 1
      %p80 = por %p78, %p79
      %p82 = scmp.ne.s32.totalorder %s65, %s81
      %p83 = scmp.eq.s32.totalorder %s19, 0
      %p84 = por %p82, %p83
      %s86 = sadd.s32 %s85, 1
      %p89 = scmp.eq.s32.totalorder %s13, 1
      %p90 = scmp.ne.s32.totalorder %s85, %s87
      %p91 = scmp.eq.s32.totalorder %s13, 0
      %p92 = por %p90, %p91
      %p93 = scmp.ne.s32.totalorder %s85, %s87
      %p94 = scmp.eq.s32.totalorder %s18, 1
      %p95 = por %p93, %p94
      %p96 = scmp.ne.s32.totalorder %s87, %s88
      %p97 = scmp.eq.s32.totalorder %s18, 0
      %p98 = por %p96, %p97
      %p99 = scmp.ne.s32.totalorder %s87, %s88
      %p100 = scmp.eq.s32.totalorder %s19, 1
      %p101 = por %p99, %p100
      %p103 = scmp.ne.s32.totalorder %s88, %s102
      %p104 = scmp.eq.s32.totalorder %s19, 0
      %p105 = por %p103, %p104
      %s107 = sadd.s32 %s106, 1
      %p110 = scmp.eq.s32.totalorder %s13, 1
      %p111 = scmp.ne.s32.totalorder %s106, %s108
      %p112 = scmp.eq.s32.totalorder %s13, 0
      %p113 = por %p111, %p112
      %p114 = scmp.ne.s32.totalorder %s106, %s108
      %p115 = scmp.eq.s32.totalorder %s18, 1
      %p116 = por %p114, %p115
      %p117 = scmp.ne.s32.totalorder %s108, %s109
      %p118 = scmp.eq.s32.totalorder %s18, 0
      %p119 = por %p117, %p118
      %p120 = scmp.ne.s32.totalorder %s108, %s109
      %p121 = scmp.eq.s32.totalorder %s19, 1
      %p122 = por %p120, %p121
      %p124 = scmp.ne.s32.totalorder %s109, %s123
      %p125 = scmp.eq.s32.totalorder %s19, 0
      %p126 = por %p124, %p125
      %s127 = ssub.s32 %s20, %s32
      %s128 = ssub.s32 %s21, %s28
      %s129 = sor.u32 %s127, %s128
      %p130 = scmp.eq.s32.totalorder %s129, 0
      %s132 = sadd.s32 %s131, 1
      %s133 = scalar_select %p130, %s131, %s132
      %p136 = pneg %p130
      %p137 = scmp.eq.s32.totalorder %s13, 1
      %p138 = por %p136, %p137
      %p139 = scmp.ne.s32.totalorder %s131, %s134
      %p140 = scmp.eq.s32.totalorder %s13, 0
      %p141 = por %p139, %p140
      %p142 = scmp.ne.s32.totalorder %s131, %s134
      %p143 = scmp.eq.s32.totalorder %s18, 1
      %p144 = por %p142, %p143
      %p145 = scmp.ne.s32.totalorder %s134, %s135
      %p146 = scmp.eq.s32.totalorder %s18, 0
      %p147 = por %p145, %p146
      %p148 = scmp.ne.s32.totalorder %s134, %s135
      %p149 = scmp.eq.s32.totalorder %s19, 1
      %p150 = por %p148, %p149
      %p152 = scmp.ne.s32.totalorder %s135, %s151
      %p153 = scmp.eq.s32.totalorder %s19, 0
      %p154 = por %p152, %p153
      %p155 = scmp.le.s32.totalorder 1, %s13
      %p156 = scmp.lt.s32.totalorder %s13, 3
      %p157 = pnand %p155, %p156
      %p158 = pneg %p157
      // Predicated region
      $region9: #{conv_maxpool2d_forward.5} parent=5 // pred_check
        _
      $region10: #{conv_maxpool2d_forward.5} parent=5 // pred_check_branch
        %160 = sbr.rel (%p157) target = $region12
      $region11: #{conv_maxpool2d_forward.5} parent=5 // pred_region
        %s161 = ssub.s32 %s13, 1
        // Predicated region
        $region13: #{conv_maxpool2d_forward.5} parent=11 // pred_check
          %p162 = pneg %p98
        $region14: #{conv_maxpool2d_forward.5} parent=11 // pred_check_branch
          %164 = sbr.rel (%p162) target = $region16
        $region15: #{conv_maxpool2d_forward.5} parent=11 // pred_region
          _
        $region16: #{conv_maxpool2d_forward.5} parent=11 // pred_fallthru
          _
        // Predicated region
        $region17: #{conv_maxpool2d_forward.5} parent=11 // pred_check
          %p165 = pneg %p119
        $region18: #{conv_maxpool2d_forward.5} parent=11 // pred_check_branch
          %167 = sbr.rel (%p165) target = $region20
        $region19: #{conv_maxpool2d_forward.5} parent=11 // pred_region
          _
        $region20: #{conv_maxpool2d_forward.5} parent=11 // pred_fallthru
          _
      $region12: #{conv_maxpool2d_forward.5} parent=5 // pred_fallthru
        _
      %p168 = scmp.lt.s32.totalorder %s13, 2
      // Predicated region
      $region21: #{conv_maxpool2d_forward.5} parent=5 // pred_check
        %p169 = pneg %p168
      $region22: #{conv_maxpool2d_forward.5} parent=5 // pred_check_branch
        %171 = sbr.rel (%p169) target = $region24
      $region23: #{conv_maxpool2d_forward.5} parent=5 // pred_region
        // Predicated region
        $region25: #{conv_maxpool2d_forward.5} parent=23 // pred_check
          %p172 = pneg %p45
        $region26: #{conv_maxpool2d_forward.5} parent=23 // pred_check_branch
          %174 = sbr.rel (%p172) target = $region28
        $region27: #{conv_maxpool2d_forward.5} parent=23 // pred_region
          %p175 = scmp.lt.s32.totalorder %s20, 1
          %s176 = scalar_select %p175, %s20, 1
          %s177 = smul.addr %s176, 14
          %s178 = smul.addr %s177, 4
          %s179 = scalar_lea.vmem %s0, %s178
        $region28: #{conv_maxpool2d_forward.5} parent=23 // pred_fallthru
          _
        // Predicated region
        $region29: #{conv_maxpool2d_forward.5} parent=23 // pred_check
          %p180 = pneg %p71
        $region30: #{conv_maxpool2d_forward.5} parent=23 // pred_check_branch
          %182 = sbr.rel (%p180) target = $region32
        $region31: #{conv_maxpool2d_forward.5} parent=23 // pred_region
          %p183 = scmp.lt.s32.totalorder %s20, 1
          %s184 = scalar_select %p183, %s20, 1
          %s185 = smul.addr %s184, 14
          %s186 = smul.addr %s185, 4
          %s187 = scalar_lea.vmem %s1, %s186
        $region32: #{conv_maxpool2d_forward.5} parent=23 // pred_fallthru
          _
      $region24: #{conv_maxpool2d_forward.5} parent=5 // pred_fallthru
        _
      %p188 = scmp.le.s32.totalorder 1, %s13
      %p189 = scmp.lt.s32.totalorder %s13, 3
      %p190 = pnand %p188, %p189
      %p191 = pneg %p190
      // Predicated region
      $region33: #{conv_maxpool2d_forward.5} parent=5 // pred_check
        _
      $region34: #{conv_maxpool2d_forward.5} parent=5 // pred_check_branch
        %193 = sbr.rel (%p190) target = $region36
      $region35: #{conv_maxpool2d_forward.5} parent=5 // pred_region
        %s194 = ssub.s32 %s13, 1
        %p195 = scmp.lt.s32.totalorder %s22, 1
        %s196 = scalar_select %p195, %s22, 1
        %s197 = smul.addr %s196, 14
        %s198 = smul.addr %s197, 4
        %s199 = scalar_lea.vmem %s0, %s198
        %p200 = pneg %p51
        %p201 = pneg %p48
        %p202 = scmp.lt.s32.totalorder %s22, 1
        %s203 = scalar_select %p202, %s22, 1
        %s204 = smul.addr %s203, 14
        %s205 = smul.addr %s204, 4
        %s206 = scalar_lea.vmem %s1, %s205
        %p207 = pneg %p77
        %p208 = pneg %p74
        %p209 = pneg %p98
        %p210 = pneg %p95
        %p211 = pneg %p119
        %p212 = pneg %p116
        %p213 = pneg %p147
        %p214 = pneg %p144
        %s215 = sand.u32 %s134, 1
        %s216 = scalar_lea.sflag [#allocation3], %s215
        %s217 = sand.u32 %s134, 1
        %s218 = smul.addr %s217, 4
        %s219 = scalar_lea.vmem [#allocation2], %s218
        %p220 = scmp.lt.s32.totalorder %s22, 1
        %s221 = scalar_select %p220, %s22, 1
        %s222 = smul.addr %s221, 14
        %s223 = smul.addr %s222, 4
        %s224 = scalar_lea.vmem %s0, %s223
        %p225 = scmp.lt.s32.totalorder %s22, 1
        %s226 = scalar_select %p225, %s22, 1
        %s227 = smul.addr %s226, 14
        %s228 = smul.addr %s227, 4
        %s229 = scalar_lea.vmem %s1, %s228
        %v231 = vld [vmem:[%s224] sm:$0x33]
        %v232 = vld [vmem:[%s224 + $0x8] sm:$0x33]
        %v233 = vld [vmem:[%s224 + $0x10] sm:$0x33]
        %v234 = vld [vmem:[%s224 + $0x18] sm:$0x3]
        %v235 = vld [vmem:[%s2] sm:$0xf]
        %v236 = vld [vmem:[%s2 + $0x4] sm:$0xf]
        %v237 = vld [vmem:[%s2 + $0x8] sm:$0xf]
        %v238 = vld [vmem:[%s2 + $0xc] sm:$0xf]
        %v239 = vld [vmem:[%s2 + $0x10] sm:$0xf]
        %v240 = vld [vmem:[%s2 + $0x14] sm:$0xf]
        %v241 = vld [vmem:[%s2 + $0x18] sm:$0xf]
        %v242 = vld [vmem:[%s2 + $0x1c] sm:$0xf]
        %v243 = vld [vmem:[%s2 + $0x20] sm:$0xf]
        %v244 = vld [vmem:[%s2 + $0x24] sm:$0xf]
        %v245 = vld [vmem:[%s2 + $0x28] sm:$0xf]
        %v246 = vld [vmem:[%s2 + $0x2c] sm:$0xf]
        %v247 = vld [vmem:[%s2 + $0x30] sm:$0xf]
        %v248 = vld [vmem:[%s2 + $0x34] sm:$0xf]
        %v249 = vld [vmem:[%s2 + $0x38] sm:$0xf]
        %v250 = vld [vmem:[%s2 + $0x3c] sm:$0xf]
        %v251 = vld [vmem:[%s2 + $0x40] sm:$0xf]
        %v252 = vld [vmem:[%s2 + $0x44] sm:$0xf]
        %v253 = vld [vmem:[%s2 + $0x48] sm:$0xf]
        %v254 = vld [vmem:[%s2 + $0x4c] sm:$0xf]
        %v255 = vld [vmem:[%s2 + $0x50] sm:$0xf]
        %v256 = vld [vmem:[%s2 + $0x54] sm:$0xf]
        %v257 = vld [vmem:[%s2 + $0x58] sm:$0xf]
        %v258 = vld [vmem:[%s2 + $0x5c] sm:$0xf]
        %v259 = vld [vmem:[%s2 + $0x60] sm:$0xf]
        %v260 = vld [vmem:[%s2 + $0x64] sm:$0xf]
        %v261 = vld [vmem:[%s2 + $0x68] sm:$0xf]
        %v262 = vld [vmem:[%s2 + $0x6c] sm:$0xf]
        %v263 = vld [vmem:[%s2 + $0x70] sm:$0xf]
        %v264 = vld [vmem:[%s2 + $0x74] sm:$0xf]
        %v265 = vld [vmem:[%s2 + $0x78] sm:$0xf]
        %v266 = vld [vmem:[%s2 + $0x7c] sm:$0xf]
        %v267 = vld [vmem:[%s2 + $0x80] sm:$0xf]
        %v268 = vld [vmem:[%s2 + $0x84] sm:$0xf]
        %v269 = vld [vmem:[%s2 + $0x88] sm:$0xf]
        %v270 = vld [vmem:[%s2 + $0x8c] sm:$0xf]
        %v271 = vld [vmem:[%s2 + $0x90] sm:$0xf]
        %v272 = vld [vmem:[%s2 + $0x94] sm:$0xf]
        %v273 = vld [vmem:[%s2 + $0x98] sm:$0xf]
        %v274 = vld [vmem:[%s2 + $0x9c] sm:$0xf]
        %v275 = vld [vmem:[%s2 + $0xa0] sm:$0xf]
        %v276 = vld [vmem:[%s2 + $0xa4] sm:$0xf]
        %v277 = vld [vmem:[%s2 + $0xa8] sm:$0xf]
        %v278 = vld [vmem:[%s2 + $0xac] sm:$0xf]
        %v279 = vld [vmem:[%s2 + $0xb0] sm:$0xf]
        %v280 = vld [vmem:[%s2 + $0xb4] sm:$0xf]
        %v281 = vld [vmem:[%s2 + $0xb8] sm:$0xf]
        %v282 = vld [vmem:[%s2 + $0xbc] sm:$0xf]
        %v283 = vld [vmem:[%s2 + $0xc0] sm:$0xf]
        %v284 = vld [vmem:[%s2 + $0xc4] sm:$0xf]
        %v285 = vld [vmem:[%s2 + $0xc8] sm:$0xf]
        %v286 = vld [vmem:[%s2 + $0xcc] sm:$0xf]
        %v287 = vld [vmem:[%s2 + $0xd0] sm:$0xf]
        %v288 = vld [vmem:[%s2 + $0xd4] sm:$0xf]
        %v289 = vld [vmem:[%s2 + $0xd8] sm:$0xf]
        %v290 = vld [vmem:[%s2 + $0xdc] sm:$0xf]
        %v291 = vld [vmem:[%s2 + $0xe0] sm:$0xf]
        %v292 = vld [vmem:[%s2 + $0xe4] sm:$0xf]
        %v293 = vld [vmem:[%s2 + $0xe8] sm:$0xf]
        %v294 = vld [vmem:[%s2 + $0xec] sm:$0xf]
        %v295 = vld [vmem:[%s2 + $0xf0] sm:$0xf]
        %v296 = vld [vmem:[%s2 + $0xf4] sm:$0xf]
        %v297 = vld [vmem:[%s2 + $0xf8] sm:$0xf]
        %v298 = vld [vmem:[%s2 + $0xfc] sm:$0xf]
        %v299 = vld [vmem:[%s2 + $0x100] sm:$0xf]
        %v300 = vld [vmem:[%s2 + $0x104] sm:$0xf]
        %v301 = vld [vmem:[%s2 + $0x108] sm:$0xf]
        %v302 = vld [vmem:[%s2 + $0x10c] sm:$0xf]
        %v303 = vld [vmem:[%s2 + $0x110] sm:$0xf]
        %v304 = vld [vmem:[%s2 + $0x114] sm:$0xf]
        %v305 = vld [vmem:[%s2 + $0x118] sm:$0xf]
        %v306 = vld [vmem:[%s2 + $0x11c] sm:$0xf]
        %v307 = vld [vmem:[%s2 + $0x120] sm:$0xf]
        %v308 = vld [vmem:[%s2 + $0x124] sm:$0xf]
        %v309 = vld [vmem:[%s2 + $0x128] sm:$0xf]
        %v310 = vld [vmem:[%s2 + $0x12c] sm:$0xf]
        %v311 = vld [vmem:[%s2 + $0x130] sm:$0xf]
        %v312 = vld [vmem:[%s2 + $0x134] sm:$0xf]
        %v313 = vld [vmem:[%s2 + $0x138] sm:$0xf]
        %v314 = vld [vmem:[%s2 + $0x13c] sm:$0xf]
        %v315 = vld [vmem:[%s2 + $0x140] sm:$0xf]
        %v316 = vld [vmem:[%s2 + $0x144] sm:$0xf]
        %v317 = vld [vmem:[%s2 + $0x148] sm:$0xf]
        %v318 = vld [vmem:[%s2 + $0x14c] sm:$0xf]
        %v319 = vld [vmem:[%s2 + $0x150] sm:$0xf]
        %v320 = vld [vmem:[%s2 + $0x154] sm:$0xf]
        %v321 = vld [vmem:[%s2 + $0x158] sm:$0xf]
        %v322 = vld [vmem:[%s2 + $0x15c] sm:$0xf]
        %v323 = vld [vmem:[%s2 + $0x160] sm:$0xf]
        %v324 = vld [vmem:[%s2 + $0x164] sm:$0xf]
        %v325 = vld [vmem:[%s2 + $0x168] sm:$0xf]
        %v326 = vld [vmem:[%s2 + $0x16c] sm:$0xf]
        %v327 = vld [vmem:[%s2 + $0x170] sm:$0xf]
        %v328 = vld [vmem:[%s2 + $0x174] sm:$0xf]
        %v329 = vld [vmem:[%s2 + $0x178] sm:$0xf]
        %v330 = vld [vmem:[%s2 + $0x17c] sm:$0xf]
        %v331 = vld [vmem:[%s2 + $0x180] sm:$0xf]
        %v332 = vld [vmem:[%s2 + $0x184] sm:$0xf]
        %v333 = vld [vmem:[%s2 + $0x188] sm:$0xf]
        %v334 = vld [vmem:[%s2 + $0x18c] sm:$0xf]
        %v335 = vld [vmem:[%s2 + $0x190] sm:$0xf]
        %v336 = vld [vmem:[%s2 + $0x194] sm:$0xf]
        %v337 = vld [vmem:[%s2 + $0x198] sm:$0xf]
        %v338 = vld [vmem:[%s2 + $0x19c] sm:$0xf]
        %v339 = vld [vmem:[%s2 + $0x1a0] sm:$0xf]
        %v340 = vld [vmem:[%s2 + $0x1a4] sm:$0xf]
        %v341 = vld [vmem:[%s2 + $0x1a8] sm:$0xf]
        %v342 = vld [vmem:[%s2 + $0x1ac] sm:$0xf]
        %v343 = vld [vmem:[%s2 + $0x1b0] sm:$0xf]
        %v344 = vld [vmem:[%s2 + $0x1b4] sm:$0xf]
        %v345 = vld [vmem:[%s2 + $0x1b8] sm:$0xf]
        %v346 = vld [vmem:[%s2 + $0x1bc] sm:$0xf]
        %v347 = vld [vmem:[%s229] sm:$0x33]
        %v348 = vld [vmem:[%s229 + $0x8] sm:$0x33]
        %v349 = vld [vmem:[%s229 + $0x10] sm:$0x33]
        %v350 = vld [vmem:[%s229 + $0x18] sm:$0x3]
        %s351 = scalar_lea.vmem %s2, 448
        %v352 = vld [vmem:[%s351] sm:$0xf]
        %v353 = vld [vmem:[%s351 + $0x4] sm:$0xf]
        %v354 = vld [vmem:[%s351 + $0x8] sm:$0xf]
        %v355 = vld [vmem:[%s351 + $0xc] sm:$0xf]
        %v356 = vld [vmem:[%s351 + $0x10] sm:$0xf]
        %v357 = vld [vmem:[%s351 + $0x14] sm:$0xf]
        %v358 = vld [vmem:[%s351 + $0x18] sm:$0xf]
        %v359 = vld [vmem:[%s351 + $0x1c] sm:$0xf]
        %v360 = vld [vmem:[%s351 + $0x20] sm:$0xf]
        %v361 = vld [vmem:[%s351 + $0x24] sm:$0xf]
        %v362 = vld [vmem:[%s351 + $0x28] sm:$0xf]
        %v363 = vld [vmem:[%s351 + $0x2c] sm:$0xf]
        %v364 = vld [vmem:[%s351 + $0x30] sm:$0xf]
        %v365 = vld [vmem:[%s351 + $0x34] sm:$0xf]
        %v366 = vld [vmem:[%s351 + $0x38] sm:$0xf]
        %v367 = vld [vmem:[%s351 + $0x3c] sm:$0xf]
        %v368 = vld [vmem:[%s351 + $0x40] sm:$0xf]
        %v369 = vld [vmem:[%s351 + $0x44] sm:$0xf]
        %v370 = vld [vmem:[%s351 + $0x48] sm:$0xf]
        %v371 = vld [vmem:[%s351 + $0x4c] sm:$0xf]
        %v372 = vld [vmem:[%s351 + $0x50] sm:$0xf]
        %v373 = vld [vmem:[%s351 + $0x54] sm:$0xf]
        %v374 = vld [vmem:[%s351 + $0x58] sm:$0xf]
        %v375 = vld [vmem:[%s351 + $0x5c] sm:$0xf]
        %v376 = vld [vmem:[%s351 + $0x60] sm:$0xf]
        %v377 = vld [vmem:[%s351 + $0x64] sm:$0xf]
        %v378 = vld [vmem:[%s351 + $0x68] sm:$0xf]
        %v379 = vld [vmem:[%s351 + $0x6c] sm:$0xf]
        %v380 = vld [vmem:[%s351 + $0x70] sm:$0xf]
        %v381 = vld [vmem:[%s351 + $0x74] sm:$0xf]
        %v382 = vld [vmem:[%s351 + $0x78] sm:$0xf]
        %v383 = vld [vmem:[%s351 + $0x7c] sm:$0xf]
        %v384 = vld [vmem:[%s351 + $0x80] sm:$0xf]
        %v385 = vld [vmem:[%s351 + $0x84] sm:$0xf]
        %v386 = vld [vmem:[%s351 + $0x88] sm:$0xf]
        %v387 = vld [vmem:[%s351 + $0x8c] sm:$0xf]
        %v388 = vld [vmem:[%s351 + $0x90] sm:$0xf]
        %v389 = vld [vmem:[%s351 + $0x94] sm:$0xf]
        %v390 = vld [vmem:[%s351 + $0x98] sm:$0xf]
        %v391 = vld [vmem:[%s351 + $0x9c] sm:$0xf]
        %v392 = vld [vmem:[%s351 + $0xa0] sm:$0xf]
        %v393 = vld [vmem:[%s351 + $0xa4] sm:$0xf]
        %v394 = vld [vmem:[%s351 + $0xa8] sm:$0xf]
        %v395 = vld [vmem:[%s351 + $0xac] sm:$0xf]
        %v396 = vld [vmem:[%s351 + $0xb0] sm:$0xf]
        %v397 = vld [vmem:[%s351 + $0xb4] sm:$0xf]
        %v398 = vld [vmem:[%s351 + $0xb8] sm:$0xf]
        %v399 = vld [vmem:[%s351 + $0xbc] sm:$0xf]
        %v400 = vld [vmem:[%s351 + $0xc0] sm:$0xf]
        %v401 = vld [vmem:[%s351 + $0xc4] sm:$0xf]
        %v402 = vld [vmem:[%s351 + $0xc8] sm:$0xf]
        %v403 = vld [vmem:[%s351 + $0xcc] sm:$0xf]
        %v404 = vld [vmem:[%s351 + $0xd0] sm:$0xf]
        %v405 = vld [vmem:[%s351 + $0xd4] sm:$0xf]
        %v406 = vld [vmem:[%s351 + $0xd8] sm:$0xf]
        %v407 = vld [vmem:[%s351 + $0xdc] sm:$0xf]
        %v408 = vld [vmem:[%s351 + $0xe0] sm:$0xf]
        %v409 = vld [vmem:[%s351 + $0xe4] sm:$0xf]
        %v410 = vld [vmem:[%s351 + $0xe8] sm:$0xf]
        %v411 = vld [vmem:[%s351 + $0xec] sm:$0xf]
        %v412 = vld [vmem:[%s351 + $0xf0] sm:$0xf]
        %v413 = vld [vmem:[%s351 + $0xf4] sm:$0xf]
        %v414 = vld [vmem:[%s351 + $0xf8] sm:$0xf]
        %v415 = vld [vmem:[%s351 + $0xfc] sm:$0xf]
        %v416 = vld [vmem:[%s351 + $0x100] sm:$0xf]
        %v417 = vld [vmem:[%s351 + $0x104] sm:$0xf]
        %v418 = vld [vmem:[%s351 + $0x108] sm:$0xf]
        %v419 = vld [vmem:[%s351 + $0x10c] sm:$0xf]
        %v420 = vld [vmem:[%s351 + $0x110] sm:$0xf]
        %v421 = vld [vmem:[%s351 + $0x114] sm:$0xf]
        %v422 = vld [vmem:[%s351 + $0x118] sm:$0xf]
        %v423 = vld [vmem:[%s351 + $0x11c] sm:$0xf]
        %v424 = vld [vmem:[%s351 + $0x120] sm:$0xf]
        %v425 = vld [vmem:[%s351 + $0x124] sm:$0xf]
        %v426 = vld [vmem:[%s351 + $0x128] sm:$0xf]
        %v427 = vld [vmem:[%s351 + $0x12c] sm:$0xf]
        %v428 = vld [vmem:[%s351 + $0x130] sm:$0xf]
        %v429 = vld [vmem:[%s351 + $0x134] sm:$0xf]
        %v430 = vld [vmem:[%s351 + $0x138] sm:$0xf]
        %v431 = vld [vmem:[%s351 + $0x13c] sm:$0xf]
        %v432 = vld [vmem:[%s351 + $0x140] sm:$0xf]
        %v433 = vld [vmem:[%s351 + $0x144] sm:$0xf]
        %v434 = vld [vmem:[%s351 + $0x148] sm:$0xf]
        %v435 = vld [vmem:[%s351 + $0x14c] sm:$0xf]
        %v436 = vld [vmem:[%s351 + $0x150] sm:$0xf]
        %v437 = vld [vmem:[%s351 + $0x154] sm:$0xf]
        %v438 = vld [vmem:[%s351 + $0x158] sm:$0xf]
        %v439 = vld [vmem:[%s351 + $0x15c] sm:$0xf]
        %v440 = vld [vmem:[%s351 + $0x160] sm:$0xf]
        %v441 = vld [vmem:[%s351 + $0x164] sm:$0xf]
        %v442 = vld [vmem:[%s351 + $0x168] sm:$0xf]
        %v443 = vld [vmem:[%s351 + $0x16c] sm:$0xf]
        %v444 = vld [vmem:[%s351 + $0x170] sm:$0xf]
        %v445 = vld [vmem:[%s351 + $0x174] sm:$0xf]
        %v446 = vld [vmem:[%s351 + $0x178] sm:$0xf]
        %v447 = vld [vmem:[%s351 + $0x17c] sm:$0xf]
        %v448 = vld [vmem:[%s351 + $0x180] sm:$0xf]
        %v449 = vld [vmem:[%s351 + $0x184] sm:$0xf]
        %v450 = vld [vmem:[%s351 + $0x188] sm:$0xf]
        %v451 = vld [vmem:[%s351 + $0x18c] sm:$0xf]
        %v452 = vld [vmem:[%s351 + $0x190] sm:$0xf]
        %v453 = vld [vmem:[%s351 + $0x194] sm:$0xf]
        %v454 = vld [vmem:[%s351 + $0x198] sm:$0xf]
        %v455 = vld [vmem:[%s351 + $0x19c] sm:$0xf]
        %v456 = vld [vmem:[%s351 + $0x1a0] sm:$0xf]
        %v457 = vld [vmem:[%s351 + $0x1a4] sm:$0xf]
        %v458 = vld [vmem:[%s351 + $0x1a8] sm:$0xf]
        %v459 = vld [vmem:[%s351 + $0x1ac] sm:$0xf]
        %v460 = vld [vmem:[%s351 + $0x1b0] sm:$0xf]
        %v461 = vld [vmem:[%s351 + $0x1b4] sm:$0xf]
        %v462 = vld [vmem:[%s351 + $0x1b8] sm:$0xf]
        %v463 = vld [vmem:[%s351 + $0x1bc] sm:$0xf]
        %v468 = vunpack.c.l.b16 %v347
        %v469 = vunpack.c.h.b16 %v347
        %v470 = vunpack.c.l.b16 %v348
        %v471 = vunpack.c.h.b16 %v348
        %v472 = vunpack.c.l.b16 %v349
        %v473 = vunpack.c.h.b16 %v349
        %v474 = vunpack.c.l.b16 %v350
        %v475 = vpack.c.b16 %v468, %v468
        %v476 = vpack.c.b16 %v469, %v469
        %v477 = vpack.c.b16 %v470, %v470
        %v478 = vpack.c.b16 %v471, %v471
        %v479 = vpack.c.b16 %v472, %v472
        %v480 = vpack.c.b16 %v473, %v473
        %v481 = vpack.c.b16 %v474, %v474
        %v601 = vunpack.c.l.b16 %v352
        %v602 = vunpack.c.l.b16 %v353
        %v603 = vunpack.c.l.b16 %v354
        %v604 = vunpack.c.l.b16 %v355
        %v605 = vunpack.c.l.b16 %v356
        %v606 = vunpack.c.l.b16 %v357
        %v607 = vunpack.c.l.b16 %v358
        %v608 = vunpack.c.l.b16 %v359
        %v609 = vunpack.c.l.b16 %v360
        %v610 = vunpack.c.l.b16 %v361
        %v611 = vunpack.c.l.b16 %v362
        %v612 = vunpack.c.l.b16 %v363
        %v613 = vunpack.c.l.b16 %v364
        %v614 = vunpack.c.l.b16 %v365
        %v615 = vunpack.c.l.b16 %v366
        %v616 = vunpack.c.l.b16 %v367
        %v617 = vunpack.c.l.b16 %v368
        %v618 = vunpack.c.l.b16 %v369
        %v619 = vunpack.c.l.b16 %v370
        %v620 = vunpack.c.l.b16 %v371
        %v621 = vunpack.c.l.b16 %v372
        %v622 = vunpack.c.l.b16 %v373
        %v623 = vunpack.c.l.b16 %v374
        %v624 = vunpack.c.l.b16 %v375
        %v625 = vunpack.c.l.b16 %v376
        %v626 = vunpack.c.l.b16 %v377
        %v627 = vunpack.c.l.b16 %v378
        %v628 = vunpack.c.l.b16 %v379
        %v629 = vunpack.c.l.b16 %v380
        %v630 = vunpack.c.l.b16 %v381
        %v631 = vunpack.c.l.b16 %v382
        %v632 = vunpack.c.l.b16 %v383
        %v633 = vunpack.c.l.b16 %v384
        %v634 = vunpack.c.l.b16 %v385
        %v635 = vunpack.c.l.b16 %v386
        %v636 = vunpack.c.l.b16 %v387
        %v637 = vunpack.c.l.b16 %v388
        %v638 = vunpack.c.l.b16 %v389
        %v639 = vunpack.c.l.b16 %v390
        %v640 = vunpack.c.l.b16 %v391
        %v641 = vunpack.c.l.b16 %v392
        %v642 = vunpack.c.l.b16 %v393
        %v643 = vunpack.c.l.b16 %v394
        %v644 = vunpack.c.l.b16 %v395
        %v645 = vunpack.c.l.b16 %v396
        %v646 = vunpack.c.l.b16 %v397
        %v647 = vunpack.c.l.b16 %v398
        %v648 = vunpack.c.l.b16 %v399
        %v649 = vunpack.c.l.b16 %v400
        %v650 = vunpack.c.l.b16 %v401
        %v651 = vunpack.c.l.b16 %v402
        %v652 = vunpack.c.l.b16 %v403
        %v653 = vunpack.c.l.b16 %v404
        %v654 = vunpack.c.l.b16 %v405
        %v655 = vunpack.c.l.b16 %v406
        %v656 = vunpack.c.l.b16 %v407
        %v657 = vunpack.c.l.b16 %v408
        %v658 = vunpack.c.l.b16 %v409
        %v659 = vunpack.c.l.b16 %v410
        %v660 = vunpack.c.l.b16 %v411
        %v661 = vunpack.c.l.b16 %v412
        %v662 = vunpack.c.l.b16 %v413
        %v663 = vunpack.c.l.b16 %v414
        %v664 = vunpack.c.l.b16 %v415
        %v665 = vunpack.c.l.b16 %v416
        %v666 = vunpack.c.l.b16 %v417
        %v667 = vunpack.c.l.b16 %v418
        %v668 = vunpack.c.l.b16 %v419
        %v669 = vunpack.c.l.b16 %v420
        %v670 = vunpack.c.l.b16 %v421
        %v671 = vunpack.c.l.b16 %v422
        %v672 = vunpack.c.l.b16 %v423
        %v673 = vunpack.c.l.b16 %v424
        %v674 = vunpack.c.l.b16 %v425
        %v675 = vunpack.c.l.b16 %v426
        %v676 = vunpack.c.l.b16 %v427
        %v677 = vunpack.c.l.b16 %v428
        %v678 = vunpack.c.l.b16 %v429
        %v679 = vunpack.c.l.b16 %v430
        %v680 = vunpack.c.l.b16 %v431
        %v681 = vunpack.c.l.b16 %v432
        %v682 = vunpack.c.l.b16 %v433
        %v683 = vunpack.c.l.b16 %v434
        %v684 = vunpack.c.l.b16 %v435
        %v685 = vunpack.c.l.b16 %v436
        %v686 = vunpack.c.l.b16 %v437
        %v687 = vunpack.c.l.b16 %v438
        %v688 = vunpack.c.l.b16 %v439
        %v689 = vunpack.c.l.b16 %v440
        %v690 = vunpack.c.l.b16 %v441
        %v691 = vunpack.c.l.b16 %v442
        %v692 = vunpack.c.l.b16 %v443
        %v693 = vunpack.c.l.b16 %v444
        %v694 = vunpack.c.l.b16 %v445
        %v695 = vunpack.c.l.b16 %v446
        %v696 = vunpack.c.l.b16 %v447
        %v697 = vunpack.c.l.b16 %v448
        %v698 = vunpack.c.l.b16 %v449
        %v699 = vunpack.c.l.b16 %v450
        %v700 = vunpack.c.l.b16 %v451
        %v701 = vunpack.c.l.b16 %v452
        %v702 = vunpack.c.l.b16 %v453
        %v703 = vunpack.c.l.b16 %v454
        %v704 = vunpack.c.l.b16 %v455
        %v705 = vunpack.c.l.b16 %v456
        %v706 = vunpack.c.l.b16 %v457
        %v707 = vunpack.c.l.b16 %v458
        %v708 = vunpack.c.l.b16 %v459
        %v709 = vunpack.c.l.b16 %v460
        %v710 = vunpack.c.l.b16 %v461
        %v711 = vunpack.c.l.b16 %v462
        %v712 = vunpack.c.l.b16 %v463
        %v713 = vpack.c.b16 %v602, %v601
        %v714 = vpack.c.b16 %v604, %v603
        %v715 = vpack.c.b16 %v606, %v605
        %v716 = vpack.c.b16 %v608, %v607
        %v717 = vpack.c.b16 %v610, %v609
        %v718 = vpack.c.b16 %v612, %v611
        %v719 = vpack.c.b16 %v614, %v613
        %v720 = vpack.c.b16 %v616, %v615
        %v721 = vpack.c.b16 %v618, %v617
        %v722 = vpack.c.b16 %v620, %v619
        %v723 = vpack.c.b16 %v622, %v621
        %v724 = vpack.c.b16 %v624, %v623
        %v725 = vpack.c.b16 %v626, %v625
        %v726 = vpack.c.b16 %v628, %v627
        %v727 = vpack.c.b16 %v630, %v629
        %v728 = vpack.c.b16 %v632, %v631
        %v729 = vpack.c.b16 %v634, %v633
        %v730 = vpack.c.b16 %v636, %v635
        %v731 = vpack.c.b16 %v638, %v637
        %v732 = vpack.c.b16 %v640, %v639
        %v733 = vpack.c.b16 %v642, %v641
        %v734 = vpack.c.b16 %v644, %v643
        %v735 = vpack.c.b16 %v646, %v645
        %v736 = vpack.c.b16 %v648, %v647
        %v737 = vpack.c.b16 %v650, %v649
        %v738 = vpack.c.b16 %v652, %v651
        %v739 = vpack.c.b16 %v654, %v653
        %v740 = vpack.c.b16 %v656, %v655
        %v741 = vpack.c.b16 %v658, %v657
        %v742 = vpack.c.b16 %v660, %v659
        %v743 = vpack.c.b16 %v662, %v661
        %v744 = vpack.c.b16 %v664, %v663
        %v745 = vpack.c.b16 %v666, %v665
        %v746 = vpack.c.b16 %v668, %v667
        %v747 = vpack.c.b16 %v670, %v669
        %v748 = vpack.c.b16 %v672, %v671
        %v749 = vpack.c.b16 %v674, %v673
        %v750 = vpack.c.b16 %v676, %v675
        %v751 = vpack.c.b16 %v678, %v677
        %v752 = vpack.c.b16 %v680, %v679
        %v753 = vpack.c.b16 %v682, %v681
        %v754 = vpack.c.b16 %v684, %v683
        %v755 = vpack.c.b16 %v686, %v685
        %v756 = vpack.c.b16 %v688, %v687
        %v757 = vpack.c.b16 %v690, %v689
        %v758 = vpack.c.b16 %v692, %v691
        %v759 = vpack.c.b16 %v694, %v693
        %v760 = vpack.c.b16 %v696, %v695
        %v761 = vpack.c.b16 %v698, %v697
        %v762 = vpack.c.b16 %v700, %v699
        %v763 = vpack.c.b16 %v702, %v701
        %v764 = vpack.c.b16 %v704, %v703
        %v765 = vpack.c.b16 %v706, %v705
        %v766 = vpack.c.b16 %v708, %v707
        %v767 = vpack.c.b16 %v710, %v709
        %v768 = vpack.c.b16 %v712, %v711
        %825 = vmatprep.subr.bf16.mxu0 0
        %826 = vmatpush1.bf16.msra.mxu0 %v713
        %827 = vmatprep.subr.bf16.mxu0 0
        %828 = vmatpush1.bf16.msra.mxu0 %v714
        %829 = vmatprep.subr.bf16.mxu0 0
        %830 = vmatpush1.bf16.msra.mxu0 %v715
        %831 = vmatprep.subr.bf16.mxu0 0
        %832 = vmatpush1.bf16.msra.mxu0 %v716
        %833 = vmatprep.subr.bf16.mxu0 0
        %834 = vmatpush1.bf16.msra.mxu0 %v717
        %835 = vmatprep.subr.bf16.mxu0 0
        %836 = vmatpush1.bf16.msra.mxu0 %v718
        %837 = vmatprep.subr.bf16.mxu0 0
        %838 = vmatpush1.bf16.msra.mxu0 %v719
        %839 = vmatprep.subr.bf16.mxu0 0
        %840 = vmatpush1.bf16.msra.mxu0 %v720
        %841 = vmatprep.subr.bf16.mxu0 0
        %842 = vmatpush1.bf16.msra.mxu0 %v721
        %843 = vmatprep.subr.bf16.mxu0 0
        %844 = vmatpush1.bf16.msra.mxu0 %v722
        %845 = vmatprep.subr.bf16.mxu0 0
        %846 = vmatpush1.bf16.msra.mxu0 %v723
        %847 = vmatprep.subr.bf16.mxu0 0
        %848 = vmatpush1.bf16.msra.mxu0 %v724
        %849 = vmatprep.subr.bf16.mxu0 0
        %850 = vmatpush1.bf16.msra.mxu0 %v725
        %851 = vmatprep.subr.bf16.mxu0 0
        %852 = vmatpush1.bf16.msra.mxu0 %v726
        %853 = vmatprep.subr.bf16.mxu0 0
        %854 = vmatpush1.bf16.msra.mxu0 %v727
        %855 = vmatprep.subr.bf16.mxu0 0
        %856 = vmatpush1.bf16.msra.mxu0 %v728
        %857 = vmatprep.mubr.bf16.mxu0 %v476
        %858 = vmatmul.mubr.bf16.gmra.mrb[0].mxu0 %v475
        %v859 = vpop.f32.mrb[0].mxu0
        %v860 = vadd.f32 0.0, %v859
        %v861 = vpop.f32.mrb[0].mxu0
        %v862 = vpop.f32.mrb[0].mxu0
        %v863 = vpop.f32.mrb[0].mxu0
        %864 = vdwg.mxu0
        %865 = vmatprep.subr.bf16.mxu0 0
        %866 = vmatpush1.bf16.msra.mxu0 %v729
        %867 = vmatprep.subr.bf16.mxu0 0
        %868 = vmatpush1.bf16.msra.mxu0 %v730
        %869 = vmatprep.subr.bf16.mxu0 0
        %870 = vmatpush1.bf16.msra.mxu0 %v731
        %871 = vmatprep.subr.bf16.mxu0 0
        %872 = vmatpush1.bf16.msra.mxu0 %v732
        %873 = vmatprep.subr.bf16.mxu0 0
        %874 = vmatpush1.bf16.msra.mxu0 %v733
        %875 = vmatprep.subr.bf16.mxu0 0
        %876 = vmatpush1.bf16.msra.mxu0 %v734
        %877 = vmatprep.subr.bf16.mxu0 0
        %878 = vmatpush1.bf16.msra.mxu0 %v735
        %879 = vmatprep.subr.bf16.mxu0 0
        %880 = vmatpush1.bf16.msra.mxu0 %v736
        %881 = vmatprep.subr.bf16.mxu0 0
        %882 = vmatpush1.bf16.msra.mxu0 %v737
        %883 = vmatprep.subr.bf16.mxu0 0
        %884 = vmatpush1.bf16.msra.mxu0 %v738
        %885 = vmatprep.subr.bf16.mxu0 0
        %886 = vmatpush1.bf16.msra.mxu0 %v739
        %887 = vmatprep.subr.bf16.mxu0 0
        %888 = vmatpush1.bf16.msra.mxu0 %v740
        %889 = vmatprep.subr.bf16.mxu0 0
        %890 = vmatpush1.bf16.msra.mxu0 %v741
        %891 = vmatprep.subr.bf16.mxu0 0
        %892 = vmatpush1.bf16.msra.mxu0 %v742
        %893 = vmatprep.subr.bf16.mxu0 0
        %894 = vmatpush1.bf16.msra.mxu0 %v743
        %895 = vmatprep.subr.bf16.mxu0 0
        %896 = vmatpush1.bf16.msra.mxu0 %v744
        %897 = vmatprep.mubr.bf16.mxu0 %v478
        %898 = vmatmul.mubr.bf16.gmra.mrb[0].mxu0 %v477
        %v899 = vpop.f32.mrb[0].mxu0
        %v900 = vadd.f32 %v860, %v899
        %v901 = vpop.f32.mrb[0].mxu0
        %v902 = vpop.f32.mrb[0].mxu0
        %v903 = vpop.f32.mrb[0].mxu0
        %904 = vdwg.mxu0
        %905 = vmatprep.subr.bf16.mxu0 0
        %906 = vmatpush1.bf16.msra.mxu0 %v745
        %907 = vmatprep.subr.bf16.mxu0 0
        %908 = vmatpush1.bf16.msra.mxu0 %v746
        %909 = vmatprep.subr.bf16.mxu0 0
        %910 = vmatpush1.bf16.msra.mxu0 %v747
        %911 = vmatprep.subr.bf16.mxu0 0
        %912 = vmatpush1.bf16.msra.mxu0 %v748
        %913 = vmatprep.subr.bf16.mxu0 0
        %914 = vmatpush1.bf16.msra.mxu0 %v749
        %915 = vmatprep.subr.bf16.mxu0 0
        %916 = vmatpush1.bf16.msra.mxu0 %v750
        %917 = vmatprep.subr.bf16.mxu0 0
        %918 = vmatpush1.bf16.msra.mxu0 %v751
        %919 = vmatprep.subr.bf16.mxu0 0
        %920 = vmatpush1.bf16.msra.mxu0 %v752
        %921 = vmatprep.subr.bf16.mxu0 0
        %922 = vmatpush1.bf16.msra.mxu0 %v753
        %923 = vmatprep.subr.bf16.mxu0 0
        %924 = vmatpush1.bf16.msra.mxu0 %v754
        %925 = vmatprep.subr.bf16.mxu0 0
        %926 = vmatpush1.bf16.msra.mxu0 %v755
        %927 = vmatprep.subr.bf16.mxu0 0
        %928 = vmatpush1.bf16.msra.mxu0 %v756
        %929 = vmatprep.subr.bf16.mxu0 0
        %930 = vmatpush1.bf16.msra.mxu0 %v757
        %931 = vmatprep.subr.bf16.mxu0 0
        %932 = vmatpush1.bf16.msra.mxu0 %v758
        %933 = vmatprep.subr.bf16.mxu0 0
        %934 = vmatpush1.bf16.msra.mxu0 %v759
        %935 = vmatprep.subr.bf16.mxu0 0
        %936 = vmatpush1.bf16.msra.mxu0 %v760
        %937 = vmatprep.mubr.bf16.mxu0 %v480
        %938 = vmatmul.mubr.bf16.gmra.mrb[0].mxu0 %v479
        %v939 = vpop.f32.mrb[0].mxu0
        %v940 = vadd.f32 %v900, %v939
        %v941 = vpop.f32.mrb[0].mxu0
        %v942 = vpop.f32.mrb[0].mxu0
        %v943 = vpop.f32.mrb[0].mxu0
        %944 = vdwg.mxu0
        %945 = vmatprep.subr.bf16.mxu0 0
        %946 = vmatpush1.bf16.msra.mxu0 %v761
        %947 = vmatprep.subr.bf16.mxu0 0
        %948 = vmatpush1.bf16.msra.mxu0 %v762
        %949 = vmatprep.subr.bf16.mxu0 0
        %950 = vmatpush1.bf16.msra.mxu0 %v763
        %951 = vmatprep.subr.bf16.mxu0 0
        %952 = vmatpush1.bf16.msra.mxu0 %v764
        %953 = vmatprep.subr.bf16.mxu0 0
        %954 = vmatpush1.bf16.msra.mxu0 %v765
        %955 = vmatprep.subr.bf16.mxu0 0
        %956 = vmatpush1.bf16.msra.mxu0 %v766
        %957 = vmatprep.subr.bf16.mxu0 0
        %958 = vmatpush1.bf16.msra.mxu0 %v767
        %959 = vmatprep.subr.bf16.mxu0 0
        %960 = vmatpush1.bf16.msra.mxu0 %v768
        %961 = vmatprep.subr.bf16.mxu0 0
        %962 = vmatpush1.bf16.msra.mxu0 0
        %963 = vmatprep.subr.bf16.mxu0 0
        %964 = vmatpush1.bf16.msra.mxu0 0
        %965 = vmatprep.subr.bf16.mxu0 0
        %966 = vmatpush1.bf16.msra.mxu0 0
        %967 = vmatprep.subr.bf16.mxu0 0
        %968 = vmatpush1.bf16.msra.mxu0 0
        %969 = vmatprep.subr.bf16.mxu0 0
        %970 = vmatpush1.bf16.msra.mxu0 0
        %971 = vmatprep.subr.bf16.mxu0 0
        %972 = vmatpush1.bf16.msra.mxu0 0
        %973 = vmatprep.subr.bf16.mxu0 0
        %974 = vmatpush1.bf16.msra.mxu0 0
        %975 = vmatprep.subr.bf16.mxu0 0
        %976 = vmatpush1.bf16.msra.mxu0 0
        %977 = vmatprep.mubr.bf16.mxu0 0
        %978 = vmatmul.mubr.bf16.gmra.mrb[0].mxu0 %v481
        %v979 = vpop.f32.mrb[0].mxu0
        %v980 = vadd.f32 %v940, %v979
        %v981 = vpop.f32.mrb[0].mxu0
        %v982 = vpop.f32.mrb[0].mxu0
        %v983 = vpop.f32.mrb[0].mxu0
        %984 = vdwg.mxu0
        %v989 = vunpack.c.l.b16 %v231
        %v990 = vunpack.c.h.b16 %v231
        %v991 = vunpack.c.l.b16 %v232
        %v992 = vunpack.c.h.b16 %v232
        %v993 = vunpack.c.l.b16 %v233
        %v994 = vunpack.c.h.b16 %v233
        %v995 = vunpack.c.l.b16 %v234
        %v996 = vpack.c.b16 %v989, %v989
        %v997 = vpack.c.b16 %v990, %v990
        %v998 = vpack.c.b16 %v991, %v991
        %v999 = vpack.c.b16 %v992, %v992
        %v1000 = vpack.c.b16 %v993, %v993
        %v1001 = vpack.c.b16 %v994, %v994
        %v1002 = vpack.c.b16 %v995, %v995
        %v1122 = vunpack.c.l.b16 %v235
        %v1123 = vunpack.c.l.b16 %v236
        %v1124 = vunpack.c.l.b16 %v237
        %v1125 = vunpack.c.l.b16 %v238
        %v1126 = vunpack.c.l.b16 %v239
        %v1127 = vunpack.c.l.b16 %v240
        %v1128 = vunpack.c.l.b16 %v241
        %v1129 = vunpack.c.l.b16 %v242
        %v1130 = vunpack.c.l.b16 %v243
        %v1131 = vunpack.c.l.b16 %v244
        %v1132 = vunpack.c.l.b16 %v245
        %v1133 = vunpack.c.l.b16 %v246
        %v1134 = vunpack.c.l.b16 %v247
        %v1135 = vunpack.c.l.b16 %v248
        %v1136 = vunpack.c.l.b16 %v249
        %v1137 = vunpack.c.l.b16 %v250
        %v1138 = vunpack.c.l.b16 %v251
        %v1139 = vunpack.c.l.b16 %v252
        %v1140 = vunpack.c.l.b16 %v253
        %v1141 = vunpack.c.l.b16 %v254
        %v1142 = vunpack.c.l.b16 %v255
        %v1143 = vunpack.c.l.b16 %v256
        %v1144 = vunpack.c.l.b16 %v257
        %v1145 = vunpack.c.l.b16 %v258
        %v1146 = vunpack.c.l.b16 %v259
        %v1147 = vunpack.c.l.b16 %v260
        %v1148 = vunpack.c.l.b16 %v261
        %v1149 = vunpack.c.l.b16 %v262
        %v1150 = vunpack.c.l.b16 %v263
        %v1151 = vunpack.c.l.b16 %v264
        %v1152 = vunpack.c.l.b16 %v265
        %v1153 = vunpack.c.l.b16 %v266
        %v1154 = vunpack.c.l.b16 %v267
        %v1155 = vunpack.c.l.b16 %v268
        %v1156 = vunpack.c.l.b16 %v269
        %v1157 = vunpack.c.l.b16 %v270
        %v1158 = vunpack.c.l.b16 %v271
        %v1159 = vunpack.c.l.b16 %v272
        %v1160 = vunpack.c.l.b16 %v273
        %v1161 = vunpack.c.l.b16 %v274
        %v1162 = vunpack.c.l.b16 %v275
        %v1163 = vunpack.c.l.b16 %v276
        %v1164 = vunpack.c.l.b16 %v277
        %v1165 = vunpack.c.l.b16 %v278
        %v1166 = vunpack.c.l.b16 %v279
        %v1167 = vunpack.c.l.b16 %v280
        %v1168 = vunpack.c.l.b16 %v281
        %v1169 = vunpack.c.l.b16 %v282
        %v1170 = vunpack.c.l.b16 %v283
        %v1171 = vunpack.c.l.b16 %v284
        %v1172 = vunpack.c.l.b16 %v285
        %v1173 = vunpack.c.l.b16 %v286
        %v1174 = vunpack.c.l.b16 %v287
        %v1175 = vunpack.c.l.b16 %v288
        %v1176 = vunpack.c.l.b16 %v289
        %v1177 = vunpack.c.l.b16 %v290
        %v1178 = vunpack.c.l.b16 %v291
        %v1179 = vunpack.c.l.b16 %v292
        %v1180 = vunpack.c.l.b16 %v293
        %v1181 = vunpack.c.l.b16 %v294
        %v1182 = vunpack.c.l.b16 %v295
        %v1183 = vunpack.c.l.b16 %v296
        %v1184 = vunpack.c.l.b16 %v297
        %v1185 = vunpack.c.l.b16 %v298
        %v1186 = vunpack.c.l.b16 %v299
        %v1187 = vunpack.c.l.b16 %v300
        %v1188 = vunpack.c.l.b16 %v301
        %v1189 = vunpack.c.l.b16 %v302
        %v1190 = vunpack.c.l.b16 %v303
        %v1191 = vunpack.c.l.b16 %v304
        %v1192 = vunpack.c.l.b16 %v305
        %v1193 = vunpack.c.l.b16 %v306
        %v1194 = vunpack.c.l.b16 %v307
        %v1195 = vunpack.c.l.b16 %v308
        %v1196 = vunpack.c.l.b16 %v309
        %v1197 = vunpack.c.l.b16 %v310
        %v1198 = vunpack.c.l.b16 %v311
        %v1199 = vunpack.c.l.b16 %v312
        %v1200 = vunpack.c.l.b16 %v313
        %v1201 = vunpack.c.l.b16 %v314
        %v1202 = vunpack.c.l.b16 %v315
        %v1203 = vunpack.c.l.b16 %v316
        %v1204 = vunpack.c.l.b16 %v317
        %v1205 = vunpack.c.l.b16 %v318
        %v1206 = vunpack.c.l.b16 %v319
        %v1207 = vunpack.c.l.b16 %v320
        %v1208 = vunpack.c.l.b16 %v321
        %v1209 = vunpack.c.l.b16 %v322
        %v1210 = vunpack.c.l.b16 %v323
        %v1211 = vunpack.c.l.b16 %v324
        %v1212 = vunpack.c.l.b16 %v325
        %v1213 = vunpack.c.l.b16 %v326
        %v1214 = vunpack.c.l.b16 %v327
        %v1215 = vunpack.c.l.b16 %v328
        %v1216 = vunpack.c.l.b16 %v329
        %v1217 = vunpack.c.l.b16 %v330
        %v1218 = vunpack.c.l.b16 %v331
        %v1219 = vunpack.c.l.b16 %v332
        %v1220 = vunpack.c.l.b16 %v333
        %v1221 = vunpack.c.l.b16 %v334
        %v1222 = vunpack.c.l.b16 %v335
        %v1223 = vunpack.c.l.b16 %v336
        %v1224 = vunpack.c.l.b16 %v337
        %v1225 = vunpack.c.l.b16 %v338
        %v1226 = vunpack.c.l.b16 %v339
        %v1227 = vunpack.c.l.b16 %v340
        %v1228 = vunpack.c.l.b16 %v341
        %v1229 = vunpack.c.l.b16 %v342
        %v1230 = vunpack.c.l.b16 %v343
        %v1231 = vunpack.c.l.b16 %v344
        %v1232 = vunpack.c.l.b16 %v345
        %v1233 = vunpack.c.l.b16 %v346
        %v1234 = vpack.c.b16 %v1123, %v1122
        %v1235 = vpack.c.b16 %v1125, %v1124
        %v1236 = vpack.c.b16 %v1127, %v1126
        %v1237 = vpack.c.b16 %v1129, %v1128
        %v1238 = vpack.c.b16 %v1131, %v1130
        %v1239 = vpack.c.b16 %v1133, %v1132
        %v1240 = vpack.c.b16 %v1135, %v1134
        %v1241 = vpack.c.b16 %v1137, %v1136
        %v1242 = vpack.c.b16 %v1139, %v1138
        %v1243 = vpack.c.b16 %v1141, %v1140
        %v1244 = vpack.c.b16 %v1143, %v1142
        %v1245 = vpack.c.b16 %v1145, %v1144
        %v1246 = vpack.c.b16 %v1147, %v1146
        %v1247 = vpack.c.b16 %v1149, %v1148
        %v1248 = vpack.c.b16 %v1151, %v1150
        %v1249 = vpack.c.b16 %v1153, %v1152
        %v1250 = vpack.c.b16 %v1155, %v1154
        %v1251 = vpack.c.b16 %v1157, %v1156
        %v1252 = vpack.c.b16 %v1159, %v1158
        %v1253 = vpack.c.b16 %v1161, %v1160
        %v1254 = vpack.c.b16 %v1163, %v1162
        %v1255 = vpack.c.b16 %v1165, %v1164
        %v1256 = vpack.c.b16 %v1167, %v1166
        %v1257 = vpack.c.b16 %v1169, %v1168
        %v1258 = vpack.c.b16 %v1171, %v1170
        %v1259 = vpack.c.b16 %v1173, %v1172
        %v1260 = vpack.c.b16 %v1175, %v1174
        %v1261 = vpack.c.b16 %v1177, %v1176
        %v1262 = vpack.c.b16 %v1179, %v1178
        %v1263 = vpack.c.b16 %v1181, %v1180
        %v1264 = vpack.c.b16 %v1183, %v1182
        %v1265 = vpack.c.b16 %v1185, %v1184
        %v1266 = vpack.c.b16 %v1187, %v1186
        %v1267 = vpack.c.b16 %v1189, %v1188
        %v1268 = vpack.c.b16 %v1191, %v1190
        %v1269 = vpack.c.b16 %v1193, %v1192
        %v1270 = vpack.c.b16 %v1195, %v1194
        %v1271 = vpack.c.b16 %v1197, %v1196
        %v1272 = vpack.c.b16 %v1199, %v1198
        %v1273 = vpack.c.b16 %v1201, %v1200
        %v1274 = vpack.c.b16 %v1203, %v1202
        %v1275 = vpack.c.b16 %v1205, %v1204
        %v1276 = vpack.c.b16 %v1207, %v1206
        %v1277 = vpack.c.b16 %v1209, %v1208
        %v1278 = vpack.c.b16 %v1211, %v1210
        %v1279 = vpack.c.b16 %v1213, %v1212
        %v1280 = vpack.c.b16 %v1215, %v1214
        %v1281 = vpack.c.b16 %v1217, %v1216
        %v1282 = vpack.c.b16 %v1219, %v1218
        %v1283 = vpack.c.b16 %v1221, %v1220
        %v1284 = vpack.c.b16 %v1223, %v1222
        %v1285 = vpack.c.b16 %v1225, %v1224
        %v1286 = vpack.c.b16 %v1227, %v1226
        %v1287 = vpack.c.b16 %v1229, %v1228
        %v1288 = vpack.c.b16 %v1231, %v1230
        %v1289 = vpack.c.b16 %v1233, %v1232
        %1346 = vmatprep.subr.bf16.mxu0 0
        %1347 = vmatpush1.bf16.msra.mxu0 %v1234
        %1348 = vmatprep.subr.bf16.mxu0 0
        %1349 = vmatpush1.bf16.msra.mxu0 %v1235
        %1350 = vmatprep.subr.bf16.mxu0 0
        %1351 = vmatpush1.bf16.msra.mxu0 %v1236
        %1352 = vmatprep.subr.bf16.mxu0 0
        %1353 = vmatpush1.bf16.msra.mxu0 %v1237
        %1354 = vmatprep.subr.bf16.mxu0 0
        %1355 = vmatpush1.bf16.msra.mxu0 %v1238
        %1356 = vmatprep.subr.bf16.mxu0 0
        %1357 = vmatpush1.bf16.msra.mxu0 %v1239
        %1358 = vmatprep.subr.bf16.mxu0 0
        %1359 = vmatpush1.bf16.msra.mxu0 %v1240
        %1360 = vmatprep.subr.bf16.mxu0 0
        %1361 = vmatpush1.bf16.msra.mxu0 %v1241
        %1362 = vmatprep.subr.bf16.mxu0 0
        %1363 = vmatpush1.bf16.msra.mxu0 %v1242
        %1364 = vmatprep.subr.bf16.mxu0 0
        %1365 = vmatpush1.bf16.msra.mxu0 %v1243
        %1366 = vmatprep.subr.bf16.mxu0 0
        %1367 = vmatpush1.bf16.msra.mxu0 %v1244
        %1368 = vmatprep.subr.bf16.mxu0 0
        %1369 = vmatpush1.bf16.msra.mxu0 %v1245
        %1370 = vmatprep.subr.bf16.mxu0 0
        %1371 = vmatpush1.bf16.msra.mxu0 %v1246
        %1372 = vmatprep.subr.bf16.mxu0 0
        %1373 = vmatpush1.bf16.msra.mxu0 %v1247
        %1374 = vmatprep.subr.bf16.mxu0 0
        %1375 = vmatpush1.bf16.msra.mxu0 %v1248
        %1376 = vmatprep.subr.bf16.mxu0 0
        %1377 = vmatpush1.bf16.msra.mxu0 %v1249
        %1378 = vmatprep.mubr.bf16.mxu0 %v997
        %1379 = vmatmul.mubr.bf16.gmra.mrb[0].mxu0 %v996
        %v1380 = vpop.f32.mrb[0].mxu0
        %v1381 = vadd.f32 %v980, %v1380
        %v1382 = vpop.f32.mrb[0].mxu0
        %v1383 = vpop.f32.mrb[0].mxu0
        %v1384 = vpop.f32.mrb[0].mxu0
        %1385 = vdwg.mxu0
        %1386 = vmatprep.subr.bf16.mxu0 0
        %1387 = vmatpush1.bf16.msra.mxu0 %v1250
        %1388 = vmatprep.subr.bf16.mxu0 0
        %1389 = vmatpush1.bf16.msra.mxu0 %v1251
        %1390 = vmatprep.subr.bf16.mxu0 0
        %1391 = vmatpush1.bf16.msra.mxu0 %v1252
        %1392 = vmatprep.subr.bf16.mxu0 0
        %1393 = vmatpush1.bf16.msra.mxu0 %v1253
        %1394 = vmatprep.subr.bf16.mxu0 0
        %1395 = vmatpush1.bf16.msra.mxu0 %v1254
        %1396 = vmatprep.subr.bf16.mxu0 0
        %1397 = vmatpush1.bf16.msra.mxu0 %v1255
        %1398 = vmatprep.subr.bf16.mxu0 0
        %1399 = vmatpush1.bf16.msra.mxu0 %v1256
        %1400 = vmatprep.subr.bf16.mxu0 0
        %1401 = vmatpush1.bf16.msra.mxu0 %v1257
        %1402 = vmatprep.subr.bf16.mxu0 0
        %1403 = vmatpush1.bf16.msra.mxu0 %v1258
        %1404 = vmatprep.subr.bf16.mxu0 0
        %1405 = vmatpush1.bf16.msra.mxu0 %v1259
        %1406 = vmatprep.subr.bf16.mxu0 0
        %1407 = vmatpush1.bf16.msra.mxu0 %v1260
        %1408 = vmatprep.subr.bf16.mxu0 0
        %1409 = vmatpush1.bf16.msra.mxu0 %v1261
        %1410 = vmatprep.subr.bf16.mxu0 0
        %1411 = vmatpush1.bf16.msra.mxu0 %v1262
        %1412 = vmatprep.subr.bf16.mxu0 0
        %1413 = vmatpush1.bf16.msra.mxu0 %v1263
        %1414 = vmatprep.subr.bf16.mxu0 0
        %1415 = vmatpush1.bf16.msra.mxu0 %v1264
        %1416 = vmatprep.subr.bf16.mxu0 0
        %1417 = vmatpush1.bf16.msra.mxu0 %v1265
        %1418 = vmatprep.mubr.bf16.mxu0 %v999
        %1419 = vmatmul.mubr.bf16.gmra.mrb[0].mxu0 %v998
        %v1420 = vpop.f32.mrb[0].mxu0
        %v1421 = vadd.f32 %v1381, %v1420
        %v1422 = vpop.f32.mrb[0].mxu0
        %v1423 = vpop.f32.mrb[0].mxu0
        %v1424 = vpop.f32.mrb[0].mxu0
        %1425 = vdwg.mxu0
        %1426 = vmatprep.subr.bf16.mxu0 0
        %1427 = vmatpush1.bf16.msra.mxu0 %v1266
        %1428 = vmatprep.subr.bf16.mxu0 0
        %1429 = vmatpush1.bf16.msra.mxu0 %v1267
        %1430 = vmatprep.subr.bf16.mxu0 0
        %1431 = vmatpush1.bf16.msra.mxu0 %v1268
        %1432 = vmatprep.subr.bf16.mxu0 0
        %1433 = vmatpush1.bf16.msra.mxu0 %v1269
        %1434 = vmatprep.subr.bf16.mxu0 0
        %1435 = vmatpush1.bf16.msra.mxu0 %v1270
        %1436 = vmatprep.subr.bf16.mxu0 0
        %1437 = vmatpush1.bf16.msra.mxu0 %v1271
        %1438 = vmatprep.subr.bf16.mxu0 0
        %1439 = vmatpush1.bf16.msra.mxu0 %v1272
        %1440 = vmatprep.subr.bf16.mxu0 0
        %1441 = vmatpush1.bf16.msra.mxu0 %v1273
        %1442 = vmatprep.subr.bf16.mxu0 0
        %1443 = vmatpush1.bf16.msra.mxu0 %v1274
        %1444 = vmatprep.subr.bf16.mxu0 0
        %1445 = vmatpush1.bf16.msra.mxu0 %v1275
        %1446 = vmatprep.subr.bf16.mxu0 0
        %1447 = vmatpush1.bf16.msra.mxu0 %v1276
        %1448 = vmatprep.subr.bf16.mxu0 0
        %1449 = vmatpush1.bf16.msra.mxu0 %v1277
        %1450 = vmatprep.subr.bf16.mxu0 0
        %1451 = vmatpush1.bf16.msra.mxu0 %v1278
        %1452 = vmatprep.subr.bf16.mxu0 0
        %1453 = vmatpush1.bf16.msra.mxu0 %v1279
        %1454 = vmatprep.subr.bf16.mxu0 0
        %1455 = vmatpush1.bf16.msra.mxu0 %v1280
        %1456 = vmatprep.subr.bf16.mxu0 0
        %1457 = vmatpush1.bf16.msra.mxu0 %v1281
        %1458 = vmatprep.mubr.bf16.mxu0 %v1001
        %1459 = vmatmul.mubr.bf16.gmra.mrb[0].mxu0 %v1000
        %v1460 = vpop.f32.mrb[0].mxu0
        %v1461 = vadd.f32 %v1421, %v1460
        %v1462 = vpop.f32.mrb[0].mxu0
        %v1463 = vpop.f32.mrb[0].mxu0
        %v1464 = vpop.f32.mrb[0].mxu0
        %1465 = vdwg.mxu0
        %1466 = vmatprep.subr.bf16.mxu0 0
        %1467 = vmatpush1.bf16.msra.mxu0 %v1282
        %1468 = vmatprep.subr.bf16.mxu0 0
        %1469 = vmatpush1.bf16.msra.mxu0 %v1283
        %1470 = vmatprep.subr.bf16.mxu0 0
        %1471 = vmatpush1.bf16.msra.mxu0 %v1284
        %1472 = vmatprep.subr.bf16.mxu0 0
        %1473 = vmatpush1.bf16.msra.mxu0 %v1285
        %1474 = vmatprep.subr.bf16.mxu0 0
        %1475 = vmatpush1.bf16.msra.mxu0 %v1286
        %1476 = vmatprep.subr.bf16.mxu0 0
        %1477 = vmatpush1.bf16.msra.mxu0 %v1287
        %1478 = vmatprep.subr.bf16.mxu0 0
        %1479 = vmatpush1.bf16.msra.mxu0 %v1288
        %1480 = vmatprep.subr.bf16.mxu0 0
        %1481 = vmatpush1.bf16.msra.mxu0 %v1289
        %1482 = vmatprep.subr.bf16.mxu0 0
        %1483 = vmatpush1.bf16.msra.mxu0 0
        %1484 = vmatprep.subr.bf16.mxu0 0
        %1485 = vmatpush1.bf16.msra.mxu0 0
        %1486 = vmatprep.subr.bf16.mxu0 0
        %1487 = vmatpush1.bf16.msra.mxu0 0
        %1488 = vmatprep.subr.bf16.mxu0 0
        %1489 = vmatpush1.bf16.msra.mxu0 0
        %1490 = vmatprep.subr.bf16.mxu0 0
        %1491 = vmatpush1.bf16.msra.mxu0 0
        %1492 = vmatprep.subr.bf16.mxu0 0
        %1493 = vmatpush1.bf16.msra.mxu0 0
        %1494 = vmatprep.subr.bf16.mxu0 0
        %1495 = vmatpush1.bf16.msra.mxu0 0
        %1496 = vmatprep.subr.bf16.mxu0 0
        %1497 = vmatpush1.bf16.msra.mxu0 0
        %1498 = vmatprep.mubr.bf16.mxu0 0
        %1499 = vmatmul.mubr.bf16.gmra.mrb[0].mxu0 %v1002
        %v1500 = vpop.f32.mrb[0].mxu0
        %v1501 = vadd.f32 %v1461, %v1500
        %v1502 = vpop.f32.mrb[0].mxu0
        %v1503 = vpop.f32.mrb[0].mxu0
        %v1504 = vpop.f32.mrb[0].mxu0
        %1505 = vdwg.mxu0
        %v1506 = vld [vmem:[%s224] sm:$0x66]
        %v1507 = vld [vmem:[%s224 + $0x8] sm:$0x66]
        %v1508 = vld [vmem:[%s224 + $0x10] sm:$0x66]
        %v1509 = vld [vmem:[%s224 + $0x18] sm:$0x6]
        %s1510 = scalar_lea.vmem %s2, 896
        %v1511 = vld [vmem:[%s1510] sm:$0xf]
        %v1512 = vld [vmem:[%s1510 + $0x4] sm:$0xf]
        %v1513 = vld [vmem:[%s1510 + $0x8] sm:$0xf]
        %v1514 = vld [vmem:[%s1510 + $0xc] sm:$0xf]
        %v1515 = vld [vmem:[%s1510 + $0x10] sm:$0xf]
        %v1516 = vld [vmem:[%s1510 + $0x14] sm:$0xf]
        %v1517 = vld [vmem:[%s1510 + $0x18] sm:$0xf]
        %v1518 = vld [vmem:[%s1510 + $0x1c] sm:$0xf]
        %v1519 = vld [vmem:[%s1510 + $0x20] sm:$0xf]
        %v1520 = vld [vmem:[%s1510 + $0x24] sm:$0xf]
        %v1521 = vld [vmem:[%s1510 + $0x28] sm:$0xf]
        %v1522 = vld [vmem:[%s1510 + $0x2c] sm:$0xf]
        %v1523 = vld [vmem:[%s1510 + $0x30] sm:$0xf]
        %v1524 = vld [vmem:[%s1510 + $0x34] sm:$0xf]
        %v1525 = vld [vmem:[%s1510 + $0x38] sm:$0xf]
        %v1526 = vld [vmem:[%s1510 + $0x3c] sm:$0xf]
        %v1527 = vld [vmem:[%s1510 + $0x40] sm:$0xf]
        %v1528 = vld [vmem:[%s1510 + $0x44] sm:$0xf]
        %v1529 = vld [vmem:[%s1510 + $0x48] sm:$0xf]
        %v1530 = vld [vmem:[%s1510 + $0x4c] sm:$0xf]
        %v1531 = vld [vmem:[%s1510 + $0x50] sm:$0xf]
        %v1532 = vld [vmem:[%s1510 + $0x54] sm:$0xf]
        %v1533 = vld [vmem:[%s1510 + $0x58] sm:$0xf]
        %v1534 = vld [vmem:[%s1510 + $0x5c] sm:$0xf]
        %v1535 = vld [vmem:[%s1510 + $0x60] sm:$0xf]
        %v1536 = vld [vmem:[%s1510 + $0x64] sm:$0xf]
        %v1537 = vld [vmem:[%s1510 + $0x68] sm:$0xf]
        %v1538 = vld [vmem:[%s1510 + $0x6c] sm:$0xf]
        %v1539 = vld [vmem:[%s1510 + $0x70] sm:$0xf]
        %v1540 = vld [vmem:[%s1510 + $0x74] sm:$0xf]
        %v1541 = vld [vmem:[%s1510 + $0x78] sm:$0xf]
        %v1542 = vld [vmem:[%s1510 + $0x7c] sm:$0xf]
        %v1543 = vld [vmem:[%s1510 + $0x80] sm:$0xf]
        %v1544 = vld [vmem:[%s1510 + $0x84] sm:$0xf]
        %v1545 = vld [vmem:[%s1510 + $0x88] sm:$0xf]
        %v1546 = vld [vmem:[%s1510 + $0x8c] sm:$0xf]
        %v1547 = vld [vmem:[%s1510 + $0x90] sm:$0xf]
        %v1548 = vld [vmem:[%s1510 + $0x94] sm:$0xf]
        %v1549 = vld [vmem:[%s1510 + $0x98] sm:$0xf]
        %v1550 = vld [vmem:[%s1510 + $0x9c] sm:$0xf]
        %v1551 = vld [vmem:[%s1510 + $0xa0] sm:$0xf]
        %v1552 = vld [vmem:[%s1510 + $0xa4] sm:$0xf]
        %v1553 = vld [vmem:[%s1510 + $0xa8] sm:$0xf]
        %v1554 = vld [vmem:[%s1510 + $0xac] sm:$0xf]
        %v1555 = vld [vmem:[%s1510 + $0xb0] sm:$0xf]
        %v1556 = vld [vmem:[%s1510 + $0xb4] sm:$0xf]
        %v1557 = vld [vmem:[%s1510 + $0xb8] sm:$0xf]
        %v1558 = vld [vmem:[%s1510 + $0xbc] sm:$0xf]
        %v1559 = vld [vmem:[%s1510 + $0xc0] sm:$0xf]
        %v1560 = vld [vmem:[%s1510 + $0xc4] sm:$0xf]
        %v1561 = vld [vmem:[%s1510 + $0xc8] sm:$0xf]
        %v1562 = vld [vmem:[%s1510 + $0xcc] sm:$0xf]
        %v1563 = vld [vmem:[%s1510 + $0xd0] sm:$0xf]
        %v1564 = vld [vmem:[%s1510 + $0xd4] sm:$0xf]
        %v1565 = vld [vmem:[%s1510 + $0xd8] sm:$0xf]
        %v1566 = vld [vmem:[%s1510 + $0xdc] sm:$0xf]
        %v1567 = vld [vmem:[%s1510 + $0xe0] sm:$0xf]
        %v1568 = vld [vmem:[%s1510 + $0xe4] sm:$0xf]
        %v1569 = vld [vmem:[%s1510 + $0xe8] sm:$0xf]
        %v1570 = vld [vmem:[%s1510 + $0xec] sm:$0xf]
        %v1571 = vld [vmem:[%s1510 + $0xf0] sm:$0xf]
        %v1572 = vld [vmem:[%s1510 + $0xf4] sm:$0xf]
        %v1573 = vld [vmem:[%s1510 + $0xf8] sm:$0xf]
        %v1574 = vld [vmem:[%s1510 + $0xfc] sm:$0xf]
        %v1575 = vld [vmem:[%s1510 + $0x100] sm:$0xf]
        %v1576 = vld [vmem:[%s1510 + $0x104] sm:$0xf]
        %v1577 = vld [vmem:[%s1510 + $0x108] sm:$0xf]
        %v1578 = vld [vmem:[%s1510 + $0x10c] sm:$0xf]
        %v1579 = vld [vmem:[%s1510 + $0x110] sm:$0xf]
        %v1580 = vld [vmem:[%s1510 + $0x114] sm:$0xf]
        %v1581 = vld [vmem:[%s1510 + $0x118] sm:$0xf]
        %v1582 = vld [vmem:[%s1510 + $0x11c] sm:$0xf]
        %v1583 = vld [vmem:[%s1510 + $0x120] sm:$0xf]
        %v1584 = vld [vmem:[%s1510 + $0x124] sm:$0xf]
        %v1585 = vld [vmem:[%s1510 + $0x128] sm:$0xf]
        %v1586 = vld [vmem:[%s1510 + $0x12c] sm:$0xf]
        %v1587 = vld [vmem:[%s1510 + $0x130] sm:$0xf]
        %v1588 = vld [vmem:[%s1510 + $0x134] sm:$0xf]
        %v1589 = vld [vmem:[%s1510 + $0x138] sm:$0xf]
        %v1590 = vld [vmem:[%s1510 + $0x13c] sm:$0xf]
        %v1591 = vld [vmem:[%s1510 + $0x140] sm:$0xf]
        %v1592 = vld [vmem:[%s1510 + $0x144] sm:$0xf]
        %v1593 = vld [vmem:[%s1510 + $0x148] sm:$0xf]
        %v1594 = vld [vmem:[%s1510 + $0x14c] sm:$0xf]
        %v1595 = vld [vmem:[%s1510 + $0x150] sm:$0xf]
        %v1596 = vld [vmem:[%s1510 + $0x154] sm:$0xf]
        %v1597 = vld [vmem:[%s1510 + $0x158] sm:$0xf]
        %v1598 = vld [vmem:[%s1510 + $0x15c] sm:$0xf]
        %v1599 = vld [vmem:[%s1510 + $0x160] sm:$0xf]
        %v1600 = vld [vmem:[%s1510 + $0x164] sm:$0xf]
        %v1601 = vld [vmem:[%s1510 + $0x168] sm:$0xf]
        %v1602 = vld [vmem:[%s1510 + $0x16c] sm:$0xf]
        %v1603 = vld [vmem:[%s1510 + $0x170] sm:$0xf]
        %v1604 = vld [vmem:[%s1510 + $0x174] sm:$0xf]
        %v1605 = vld [vmem:[%s1510 + $0x178] sm:$0xf]
        %v1606 = vld [vmem:[%s1510 + $0x17c] sm:$0xf]
        %v1607 = vld [vmem:[%s1510 + $0x180] sm:$0xf]
        %v1608 = vld [vmem:[%s1510 + $0x184] sm:$0xf]
        %v1609 = vld [vmem:[%s1510 + $0x188] sm:$0xf]
        %v1610 = vld [vmem:[%s1510 + $0x18c] sm:$0xf]
        %v1611 = vld [vmem:[%s1510 + $0x190] sm:$0xf]
        %v1612 = vld [vmem:[%s1510 + $0x194] sm:$0xf]
        %v1613 = vld [vmem:[%s1510 + $0x198] sm:$0xf]
        %v1614 = vld [vmem:[%s1510 + $0x19c] sm:$0xf]
        %v1615 = vld [vmem:[%s1510 + $0x1a0] sm:$0xf]
        %v1616 = vld [vmem:[%s1510 + $0x1a4] sm:$0xf]
        %v1617 = vld [vmem:[%s1510 + $0x1a8] sm:$0xf]
        %v1618 = vld [vmem:[%s1510 + $0x1ac] sm:$0xf]
        %v1619 = vld [vmem:[%s1510 + $0x1b0] sm:$0xf]
        %v1620 = vld [vmem:[%s1510 + $0x1b4] sm:$0xf]
        %v1621 = vld [vmem:[%s1510 + $0x1b8] sm:$0xf]
        %v1622 = vld [vmem:[%s1510 + $0x1bc] sm:$0xf]
        %v1627 = vunpack.c.l.b16 %v1506
        %v1628 = vunpack.c.h.b16 %v1506
        %v1629 = vunpack.c.l.b16 %v1507
        %v1630 = vunpack.c.h.b16 %v1507
        %v1631 = vunpack.c.l.b16 %v1508
        %v1632 = vunpack.c.h.b16 %v1508
        %v1633 = vunpack.c.l.b16 %v1509
        %v1634 = vpack.c.b16 %v1627, %v1627
        %v1635 = vpack.c.b16 %v1628, %v1628
        %v1636 = vpack.c.b16 %v1629, %v1629
        %v1637 = vpack.c.b16 %v1630, %v1630
        %v1638 = vpack.c.b16 %v1631, %v1631
        %v1639 = vpack.c.b16 %v1632, %v1632
        %v1640 = vpack.c.b16 %v1633, %v1633
        %v1641 = vrot.slane %v1634, 1
        %v1642 = vrot.slane %v1635, 1
        %v1643 = vrot.slane %v1636, 1
        %v1644 = vrot.slane %v1637, 1
        %v1645 = vrot.slane %v1638, 1
        %v1646 = vrot.slane %v1639, 1
        %v1647 = vrot.slane %v1640, 1
        %v1767 = vunpack.c.l.b16 %v1511
        %v1768 = vunpack.c.l.b16 %v1512
        %v1769 = vunpack.c.l.b16 %v1513
        %v1770 = vunpack.c.l.b16 %v1514
        %v1771 = vunpack.c.l.b16 %v1515
        %v1772 = vunpack.c.l.b16 %v1516
        %v1773 = vunpack.c.l.b16 %v1517
        %v1774 = vunpack.c.l.b16 %v1518
        %v1775 = vunpack.c.l.b16 %v1519
        %v1776 = vunpack.c.l.b16 %v1520
        %v1777 = vunpack.c.l.b16 %v1521
        %v1778 = vunpack.c.l.b16 %v1522
        %v1779 = vunpack.c.l.b16 %v1523
        %v1780 = vunpack.c.l.b16 %v1524
        %v1781 = vunpack.c.l.b16 %v1525
        %v1782 = vunpack.c.l.b16 %v1526
        %v1783 = vunpack.c.l.b16 %v1527
        %v1784 = vunpack.c.l.b16 %v1528
        %v1785 = vunpack.c.l.b16 %v1529
        %v1786 = vunpack.c.l.b16 %v1530
        %v1787 = vunpack.c.l.b16 %v1531
        %v1788 = vunpack.c.l.b16 %v1532
        %v1789 = vunpack.c.l.b16 %v1533
        %v1790 = vunpack.c.l.b16 %v1534
        %v1791 = vunpack.c.l.b16 %v1535
        %v1792 = vunpack.c.l.b16 %v1536
        %v1793 = vunpack.c.l.b16 %v1537
        %v1794 = vunpack.c.l.b16 %v1538
        %v1795 = vunpack.c.l.b16 %v1539
        %v1796 = vunpack.c.l.b16 %v1540
        %v1797 = vunpack.c.l.b16 %v1541
        %v1798 = vunpack.c.l.b16 %v1542
        %v1799 = vunpack.c.l.b16 %v1543
        %v1800 = vunpack.c.l.b16 %v1544
        %v1801 = vunpack.c.l.b16 %v1545
        %v1802 = vunpack.c.l.b16 %v1546
        %v1803 = vunpack.c.l.b16 %v1547
        %v1804 = vunpack.c.l.b16 %v1548
        %v1805 = vunpack.c.l.b16 %v1549
        %v1806 = vunpack.c.l.b16 %v1550
        %v1807 = vunpack.c.l.b16 %v1551
        %v1808 = vunpack.c.l.b16 %v1552
        %v1809 = vunpack.c.l.b16 %v1553
        %v1810 = vunpack.c.l.b16 %v1554
        %v1811 = vunpack.c.l.b16 %v1555
        %v1812 = vunpack.c.l.b16 %v1556
        %v1813 = vunpack.c.l.b16 %v1557
        %v1814 = vunpack.c.l.b16 %v1558
        %v1815 = vunpack.c.l.b16 %v1559
        %v1816 = vunpack.c.l.b16 %v1560
        %v1817 = vunpack.c.l.b16 %v1561
        %v1818 = vunpack.c.l.b16 %v1562
        %v1819 = vunpack.c.l.b16 %v1563
        %v1820 = vunpack.c.l.b16 %v1564
        %v1821 = vunpack.c.l.b16 %v1565
        %v1822 = vunpack.c.l.b16 %v1566
        %v1823 = vunpack.c.l.b16 %v1567
        %v1824 = vunpack.c.l.b16 %v1568
        %v1825 = vunpack.c.l.b16 %v1569
        %v1826 = vunpack.c.l.b16 %v1570
        %v1827 = vunpack.c.l.b16 %v1571
        %v1828 = vunpack.c.l.b16 %v1572
        %v1829 = vunpack.c.l.b16 %v1573
        %v1830 = vunpack.c.l.b16 %v1574
        %v1831 = vunpack.c.l.b16 %v1575
        %v1832 = vunpack.c.l.b16 %v1576
        %v1833 = vunpack.c.l.b16 %v1577
        %v1834 = vunpack.c.l.b16 %v1578
        %v1835 = vunpack.c.l.b16 %v1579
        %v1836 = vunpack.c.l.b16 %v1580
        %v1837 = vunpack.c.l.b16 %v1581
        %v1838 = vunpack.c.l.b16 %v1582
        %v1839 = vunpack.c.l.b16 %v1583
        %v1840 = vunpack.c.l.b16 %v1584
        %v1841 = vunpack.c.l.b16 %v1585
        %v1842 = vunpack.c.l.b16 %v1586
        %v1843 = vunpack.c.l.b16 %v1587
        %v1844 = vunpack.c.l.b16 %v1588
        %v1845 = vunpack.c.l.b16 %v1589
        %v1846 = vunpack.c.l.b16 %v1590
        %v1847 = vunpack.c.l.b16 %v1591
        %v1848 = vunpack.c.l.b16 %v1592
        %v1849 = vunpack.c.l.b16 %v1593
        %v1850 = vunpack.c.l.b16 %v1594
        %v1851 = vunpack.c.l.b16 %v1595
        %v1852 = vunpack.c.l.b16 %v1596
        %v1853 = vunpack.c.l.b16 %v1597
        %v1854 = vunpack.c.l.b16 %v1598
        %v1855 = vunpack.c.l.b16 %v1599
        %v1856 = vunpack.c.l.b16 %v1600
        %v1857 = vunpack.c.l.b16 %v1601
        %v1858 = vunpack.c.l.b16 %v1602
        %v1859 = vunpack.c.l.b16 %v1603
        %v1860 = vunpack.c.l.b16 %v1604
        %v1861 = vunpack.c.l.b16 %v1605
        %v1862 = vunpack.c.l.b16 %v1606
        %v1863 = vunpack.c.l.b16 %v1607
        %v1864 = vunpack.c.l.b16 %v1608
        %v1865 = vunpack.c.l.b16 %v1609
        %v1866 = vunpack.c.l.b16 %v1610
        %v1867 = vunpack.c.l.b16 %v1611
        %v1868 = vunpack.c.l.b16 %v1612
        %v1869 = vunpack.c.l.b16 %v1613
        %v1870 = vunpack.c.l.b16 %v1614
        %v1871 = vunpack.c.l.b16 %v1615
        %v1872 = vunpack.c.l.b16 %v1616
        %v1873 = vunpack.c.l.b16 %v1617
        %v1874 = vunpack.c.l.b16 %v1618
        %v1875 = vunpack.c.l.b16 %v1619
        %v1876 = vunpack.c.l.b16 %v1620
        %v1877 = vunpack.c.l.b16 %v1621
        %v1878 = vunpack.c.l.b16 %v1622
        %v1879 = vpack.c.b16 %v1768, %v1767
        %v1880 = vpack.c.b16 %v1770, %v1769
        %v1881 = vpack.c.b16 %v1772, %v1771
        %v1882 = vpack.c.b16 %v1774, %v1773
        %v1883 = vpack.c.b16 %v1776, %v1775
        %v1884 = vpack.c.b16 %v1778, %v1777
        %v1885 = vpack.c.b16 %v1780, %v1779
        %v1886 = vpack.c.b16 %v1782, %v1781
        %v1887 = vpack.c.b16 %v1784, %v1783
        %v1888 = vpack.c.b16 %v1786, %v1785
        %v1889 = vpack.c.b16 %v1788, %v1787
        %v1890 = vpack.c.b16 %v1790, %v1789
        %v1891 = vpack.c.b16 %v1792, %v1791
        %v1892 = vpack.c.b16 %v1794, %v1793
        %v1893 = vpack.c.b16 %v1796, %v1795
        %v1894 = vpack.c.b16 %v1798, %v1797
        %v1895 = vpack.c.b16 %v1800, %v1799
        %v1896 = vpack.c.b16 %v1802, %v1801
        %v1897 = vpack.c.b16 %v1804, %v1803
        %v1898 = vpack.c.b16 %v1806, %v1805
        %v1899 = vpack.c.b16 %v1808, %v1807
        %v1900 = vpack.c.b16 %v1810, %v1809
        %v1901 = vpack.c.b16 %v1812, %v1811
        %v1902 = vpack.c.b16 %v1814, %v1813
        %v1903 = vpack.c.b16 %v1816, %v1815
        %v1904 = vpack.c.b16 %v1818, %v1817
        %v1905 = vpack.c.b16 %v1820, %v1819
        %v1906 = vpack.c.b16 %v1822, %v1821
        %v1907 = vpack.c.b16 %v1824, %v1823
        %v1908 = vpack.c.b16 %v1826, %v1825
        %v1909 = vpack.c.b16 %v1828, %v1827
        %v1910 = vpack.c.b16 %v1830, %v1829
        %v1911 = vpack.c.b16 %v1832, %v1831
        %v1912 = vpack.c.b16 %v1834, %v1833
        %v1913 = vpack.c.b16 %v1836, %v1835
        %v1914 = vpack.c.b16 %v1838, %v1837
        %v1915 = vpack.c.b16 %v1840, %v1839
        %v1916 = vpack.c.b16 %v1842, %v1841
        %v1917 = vpack.c.b16 %v1844, %v1843
        %v1918 = vpack.c.b16 %v1846, %v1845
        %v1919 = vpack.c.b16 %v1848, %v1847
        %v1920 = vpack.c.b16 %v1850, %v1849
        %v1921 = vpack.c.b16 %v1852, %v1851
        %v1922 = vpack.c.b16 %v1854, %v1853
        %v1923 = vpack.c.b16 %v1856, %v1855
        %v1924 = vpack.c.b16 %v1858, %v1857
        %v1925 = vpack.c.b16 %v1860, %v1859
        %v1926 = vpack.c.b16 %v1862, %v1861
        %v1927 = vpack.c.b16 %v1864, %v1863
        %v1928 = vpack.c.b16 %v1866, %v1865
        %v1929 = vpack.c.b16 %v1868, %v1867
        %v1930 = vpack.c.b16 %v1870, %v1869
        %v1931 = vpack.c.b16 %v1872, %v1871
        %v1932 = vpack.c.b16 %v1874, %v1873
        %v1933 = vpack.c.b16 %v1876, %v1875
        %v1934 = vpack.c.b16 %v1878, %v1877
        %1991 = vmatprep.subr.bf16.mxu0 0
        %1992 = vmatpush1.bf16.msra.mxu0 %v1879
        %1993 = vmatprep.subr.bf16.mxu0 0
        %1994 = vmatpush1.bf16.msra.mxu0 %v1880
        %1995 = vmatprep.subr.bf16.mxu0 0
        %1996 = vmatpush1.bf16.msra.mxu0 %v1881
        %1997 = vmatprep.subr.bf16.mxu0 0
        %1998 = vmatpush1.bf16.msra.mxu0 %v1882
        %1999 = vmatprep.subr.bf16.mxu0 0
        %2000 = vmatpush1.bf16.msra.mxu0 %v1883
        %2001 = vmatprep.subr.bf16.mxu0 0
        %2002 = vmatpush1.bf16.msra.mxu0 %v1884
        %2003 = vmatprep.subr.bf16.mxu0 0
        %2004 = vmatpush1.bf16.msra.mxu0 %v1885
        %2005 = vmatprep.subr.bf16.mxu0 0
        %2006 = vmatpush1.bf16.msra.mxu0 %v1886
        %2007 = vmatprep.subr.bf16.mxu0 0
        %2008 = vmatpush1.bf16.msra.mxu0 %v1887
        %2009 = vmatprep.subr.bf16.mxu0 0
        %2010 = vmatpush1.bf16.msra.mxu0 %v1888
        %2011 = vmatprep.subr.bf16.mxu0 0
        %2012 = vmatpush1.bf16.msra.mxu0 %v1889
        %2013 = vmatprep.subr.bf16.mxu0 0
        %2014 = vmatpush1.bf16.msra.mxu0 %v1890
        %2015 = vmatprep.subr.bf16.mxu0 0
        %2016 = vmatpush1.bf16.msra.mxu0 %v1891
        %2017 = vmatprep.subr.bf16.mxu0 0
        %2018 = vmatpush1.bf16.msra.mxu0 %v1892
        %2019 = vmatprep.subr.bf16.mxu0 0
        %2020 = vmatpush1.bf16.msra.mxu0 %v1893
        %2021 = vmatprep.subr.bf16.mxu0 0
        %2022 = vmatpush1.bf16.msra.mxu0 %v1894
        %2023 = vmatprep.mubr.bf16.mxu0 %v1642
        %2024 = vmatmul.mubr.bf16.gmra.mrb[0].mxu0 %v1641
        %v2025 = vpop.f32.mrb[0].mxu0
        %v2026 = vadd.f32 0.0, %v2025
        %v2027 = vpop.f32.mrb[0].mxu0
        %v2028 = vpop.f32.mrb[0].mxu0
        %v2029 = vpop.f32.mrb[0].mxu0
        %2030 = vdwg.mxu0
        %2031 = vmatprep.subr.bf16.mxu0 0
        %2032 = vmatpush1.bf16.msra.mxu0 %v1895
        %2033 = vmatprep.subr.bf16.mxu0 0
        %2034 = vmatpush1.bf16.msra.mxu0 %v1896
        %2035 = vmatprep.subr.bf16.mxu0 0
        %2036 = vmatpush1.bf16.msra.mxu0 %v1897
        %2037 = vmatprep.subr.bf16.mxu0 0
        %2038 = vmatpush1.bf16.msra.mxu0 %v1898
        %2039 = vmatprep.subr.bf16.mxu0 0
        %2040 = vmatpush1.bf16.msra.mxu0 %v1899
        %2041 = vmatprep.subr.bf16.mxu0 0
        %2042 = vmatpush1.bf16.msra.mxu0 %v1900
        %2043 = vmatprep.subr.bf16.mxu0 0
        %2044 = vmatpush1.bf16.msra.mxu0 %v1901
        %2045 = vmatprep.subr.bf16.mxu0 0
        %2046 = vmatpush1.bf16.msra.mxu0 %v1902
        %2047 = vmatprep.subr.bf16.mxu0 0
        %2048 = vmatpush1.bf16.msra.mxu0 %v1903
        %2049 = vmatprep.subr.bf16.mxu0 0
        %2050 = vmatpush1.bf16.msra.mxu0 %v1904
        %2051 = vmatprep.subr.bf16.mxu0 0
        %2052 = vmatpush1.bf16.msra.mxu0 %v1905
        %2053 = vmatprep.subr.bf16.mxu0 0
        %2054 = vmatpush1.bf16.msra.mxu0 %v1906
        %2055 = vmatprep.subr.bf16.mxu0 0
        %2056 = vmatpush1.bf16.msra.mxu0 %v1907
        %2057 = vmatprep.subr.bf16.mxu0 0
        %2058 = vmatpush1.bf16.msra.mxu0 %v1908
        %2059 = vmatprep.subr.bf16.mxu0 0
        %2060 = vmatpush1.bf16.msra.mxu0 %v1909
        %2061 = vmatprep.subr.bf16.mxu0 0
        %2062 = vmatpush1.bf16.msra.mxu0 %v1910
        %2063 = vmatprep.mubr.bf16.mxu0 %v1644
        %2064 = vmatmul.mubr.bf16.gmra.mrb[0].mxu0 %v1643
        %v2065 = vpop.f32.mrb[0].mxu0
        %v2066 = vadd.f32 %v2026, %v2065
        %v2067 = vpop.f32.mrb[0].mxu0
        %v2068 = vpop.f32.mrb[0].mxu0
        %v2069 = vpop.f32.mrb[0].mxu0
        %2070 = vdwg.mxu0
        %2071 = vmatprep.subr.bf16.mxu0 0
        %2072 = vmatpush1.bf16.msra.mxu0 %v1911
        %2073 = vmatprep.subr.bf16.mxu0 0
        %2074 = vmatpush1.bf16.msra.mxu0 %v1912
        %2075 = vmatprep.subr.bf16.mxu0 0
        %2076 = vmatpush1.bf16.msra.mxu0 %v1913
        %2077 = vmatprep.subr.bf16.mxu0 0
        %2078 = vmatpush1.bf16.msra.mxu0 %v1914
        %2079 = vmatprep.subr.bf16.mxu0 0
        %2080 = vmatpush1.bf16.msra.mxu0 %v1915
        %2081 = vmatprep.subr.bf16.mxu0 0
        %2082 = vmatpush1.bf16.msra.mxu0 %v1916
        %2083 = vmatprep.subr.bf16.mxu0 0
        %2084 = vmatpush1.bf16.msra.mxu0 %v1917
        %2085 = vmatprep.subr.bf16.mxu0 0
        %2086 = vmatpush1.bf16.msra.mxu0 %v1918
        %2087 = vmatprep.subr.bf16.mxu0 0
        %2088 = vmatpush1.bf16.msra.mxu0 %v1919
        %2089 = vmatprep.subr.bf16.mxu0 0
        %2090 = vmatpush1.bf16.msra.mxu0 %v1920
        %2091 = vmatprep.subr.bf16.mxu0 0
        %2092 = vmatpush1.bf16.msra.mxu0 %v1921
        %2093 = vmatprep.subr.bf16.mxu0 0
        %2094 = vmatpush1.bf16.msra.mxu0 %v1922
        %2095 = vmatprep.subr.bf16.mxu0 0
        %2096 = vmatpush1.bf16.msra.mxu0 %v1923
        %2097 = vmatprep.subr.bf16.mxu0 0
        %2098 = vmatpush1.bf16.msra.mxu0 %v1924
        %2099 = vmatprep.subr.bf16.mxu0 0
        %2100 = vmatpush1.bf16.msra.mxu0 %v1925
        %2101 = vmatprep.subr.bf16.mxu0 0
        %2102 = vmatpush1.bf16.msra.mxu0 %v1926
        %2103 = vmatprep.mubr.bf16.mxu0 %v1646
        %2104 = vmatmul.mubr.bf16.gmra.mrb[0].mxu0 %v1645
        %v2105 = vpop.f32.mrb[0].mxu0
        %v2106 = vadd.f32 %v2066, %v2105
        %v2107 = vpop.f32.mrb[0].mxu0
        %v2108 = vpop.f32.mrb[0].mxu0
        %v2109 = vpop.f32.mrb[0].mxu0
        %2110 = vdwg.mxu0
        %2111 = vmatprep.subr.bf16.mxu0 0
        %2112 = vmatpush1.bf16.msra.mxu0 %v1927
        %2113 = vmatprep.subr.bf16.mxu0 0
        %2114 = vmatpush1.bf16.msra.mxu0 %v1928
        %2115 = vmatprep.subr.bf16.mxu0 0
        %2116 = vmatpush1.bf16.msra.mxu0 %v1929
        %2117 = vmatprep.subr.bf16.mxu0 0
        %2118 = vmatpush1.bf16.msra.mxu0 %v1930
        %2119 = vmatprep.subr.bf16.mxu0 0
        %2120 = vmatpush1.bf16.msra.mxu0 %v1931
        %2121 = vmatprep.subr.bf16.mxu0 0
        %2122 = vmatpush1.bf16.msra.mxu0 %v1932
        %2123 = vmatprep.subr.bf16.mxu0 0
        %2124 = vmatpush1.bf16.msra.mxu0 %v1933
        %2125 = vmatprep.subr.bf16.mxu0 0
        %2126 = vmatpush1.bf16.msra.mxu0 %v1934
        %2127 = vmatprep.subr.bf16.mxu0 0
        %2128 = vmatpush1.bf16.msra.mxu0 0
        %2129 = vmatprep.subr.bf16.mxu0 0
        %2130 = vmatpush1.bf16.msra.mxu0 0
        %2131 = vmatprep.subr.bf16.mxu0 0
        %2132 = vmatpush1.bf16.msra.mxu0 0
        %2133 = vmatprep.subr.bf16.mxu0 0
        %2134 = vmatpush1.bf16.msra.mxu0 0
        %2135 = vmatprep.subr.bf16.mxu0 0
        %2136 = vmatpush1.bf16.msra.mxu0 0
        %2137 = vmatprep.subr.bf16.mxu0 0
        %2138 = vmatpush1.bf16.msra.mxu0 0
        %2139 = vmatprep.subr.bf16.mxu0 0
        %2140 = vmatpush1.bf16.msra.mxu0 0
        %2141 = vmatprep.subr.bf16.mxu0 0
        %2142 = vmatpush1.bf16.msra.mxu0 0
        %2143 = vmatprep.mubr.bf16.mxu0 0
        %2144 = vmatmul.mubr.bf16.gmra.mrb[0].mxu0 %v1647
        %v2145 = vpop.f32.mrb[0].mxu0
        %v2146 = vadd.f32 %v2106, %v2145
        %v2147 = vpop.f32.mrb[0].mxu0
        %v2148 = vpop.f32.mrb[0].mxu0
        %v2149 = vpop.f32.mrb[0].mxu0
        %2150 = vdwg.mxu0
        %v2151 = vadd.f32 %v1501, %v2146
        %v2152 = vld [vmem:[%s229] sm:$0x66]
        %v2153 = vld [vmem:[%s229 + $0x8] sm:$0x66]
        %v2154 = vld [vmem:[%s229 + $0x10] sm:$0x66]
        %v2155 = vld [vmem:[%s229 + $0x18] sm:$0x6]
        %s2156 = scalar_lea.vmem %s2, 1344
        %v2157 = vld [vmem:[%s2156] sm:$0xf]
        %v2158 = vld [vmem:[%s2156 + $0x4] sm:$0xf]
        %v2159 = vld [vmem:[%s2156 + $0x8] sm:$0xf]
        %v2160 = vld [vmem:[%s2156 + $0xc] sm:$0xf]
        %v2161 = vld [vmem:[%s2156 + $0x10] sm:$0xf]
        %v2162 = vld [vmem:[%s2156 + $0x14] sm:$0xf]
        %v2163 = vld [vmem:[%s2156 + $0x18] sm:$0xf]
        %v2164 = vld [vmem:[%s2156 + $0x1c] sm:$0xf]
        %v2165 = vld [vmem:[%s2156 + $0x20] sm:$0xf]
        %v2166 = vld [vmem:[%s2156 + $0x24] sm:$0xf]
        %v2167 = vld [vmem:[%s2156 + $0x28] sm:$0xf]
        %v2168 = vld [vmem:[%s2156 + $0x2c] sm:$0xf]
        %v2169 = vld [vmem:[%s2156 + $0x30] sm:$0xf]
        %v2170 = vld [vmem:[%s2156 + $0x34] sm:$0xf]
        %v2171 = vld [vmem:[%s2156 + $0x38] sm:$0xf]
        %v2172 = vld [vmem:[%s2156 + $0x3c] sm:$0xf]
        %v2173 = vld [vmem:[%s2156 + $0x40] sm:$0xf]
        %v2174 = vld [vmem:[%s2156 + $0x44] sm:$0xf]
        %v2175 = vld [vmem:[%s2156 + $0x48] sm:$0xf]
        %v2176 = vld [vmem:[%s2156 + $0x4c] sm:$0xf]
        %v2177 = vld [vmem:[%s2156 + $0x50] sm:$0xf]
        %v2178 = vld [vmem:[%s2156 + $0x54] sm:$0xf]
        %v2179 = vld [vmem:[%s2156 + $0x58] sm:$0xf]
        %v2180 = vld [vmem:[%s2156 + $0x5c] sm:$0xf]
        %v2181 = vld [vmem:[%s2156 + $0x60] sm:$0xf]
        %v2182 = vld [vmem:[%s2156 + $0x64] sm:$0xf]
        %v2183 = vld [vmem:[%s2156 + $0x68] sm:$0xf]
        %v2184 = vld [vmem:[%s2156 + $0x6c] sm:$0xf]
        %v2185 = vld [vmem:[%s2156 + $0x70] sm:$0xf]
        %v2186 = vld [vmem:[%s2156 + $0x74] sm:$0xf]
        %v2187 = vld [vmem:[%s2156 + $0x78] sm:$0xf]
        %v2188 = vld [vmem:[%s2156 + $0x7c] sm:$0xf]
        %v2189 = vld [vmem:[%s2156 + $0x80] sm:$0xf]
        %v2190 = vld [vmem:[%s2156 + $0x84] sm:$0xf]
        %v2191 = vld [vmem:[%s2156 + $0x88] sm:$0xf]
        %v2192 = vld [vmem:[%s2156 + $0x8c] sm:$0xf]
        %v2193 = vld [vmem:[%s2156 + $0x90] sm:$0xf]
        %v2194 = vld [vmem:[%s2156 + $0x94] sm:$0xf]
        %v2195 = vld [vmem:[%s2156 + $0x98] sm:$0xf]
        %v2196 = vld [vmem:[%s2156 + $0x9c] sm:$0xf]
        %v2197 = vld [vmem:[%s2156 + $0xa0] sm:$0xf]
        %v2198 = vld [vmem:[%s2156 + $0xa4] sm:$0xf]
        %v2199 = vld [vmem:[%s2156 + $0xa8] sm:$0xf]
        %v2200 = vld [vmem:[%s2156 + $0xac] sm:$0xf]
        %v2201 = vld [vmem:[%s2156 + $0xb0] sm:$0xf]
        %v2202 = vld [vmem:[%s2156 + $0xb4] sm:$0xf]
        %v2203 = vld [vmem:[%s2156 + $0xb8] sm:$0xf]
        %v2204 = vld [vmem:[%s2156 + $0xbc] sm:$0xf]
        %v2205 = vld [vmem:[%s2156 + $0xc0] sm:$0xf]
        %v2206 = vld [vmem:[%s2156 + $0xc4] sm:$0xf]
        %v2207 = vld [vmem:[%s2156 + $0xc8] sm:$0xf]
        %v2208 = vld [vmem:[%s2156 + $0xcc] sm:$0xf]
        %v2209 = vld [vmem:[%s2156 + $0xd0] sm:$0xf]
        %v2210 = vld [vmem:[%s2156 + $0xd4] sm:$0xf]
        %v2211 = vld [vmem:[%s2156 + $0xd8] sm:$0xf]
        %v2212 = vld [vmem:[%s2156 + $0xdc] sm:$0xf]
        %v2213 = vld [vmem:[%s2156 + $0xe0] sm:$0xf]
        %v2214 = vld [vmem:[%s2156 + $0xe4] sm:$0xf]
        %v2215 = vld [vmem:[%s2156 + $0xe8] sm:$0xf]
        %v2216 = vld [vmem:[%s2156 + $0xec] sm:$0xf]
        %v2217 = vld [vmem:[%s2156 + $0xf0] sm:$0xf]
        %v2218 = vld [vmem:[%s2156 + $0xf4] sm:$0xf]
        %v2219 = vld [vmem:[%s2156 + $0xf8] sm:$0xf]
        %v2220 = vld [vmem:[%s2156 + $0xfc] sm:$0xf]
        %v2221 = vld [vmem:[%s2156 + $0x100] sm:$0xf]
        %v2222 = vld [vmem:[%s2156 + $0x104] sm:$0xf]
        %v2223 = vld [vmem:[%s2156 + $0x108] sm:$0xf]
        %v2224 = vld [vmem:[%s2156 + $0x10c] sm:$0xf]
        %v2225 = vld [vmem:[%s2156 + $0x110] sm:$0xf]
        %v2226 = vld [vmem:[%s2156 + $0x114] sm:$0xf]
        %v2227 = vld [vmem:[%s2156 + $0x118] sm:$0xf]
        %v2228 = vld [vmem:[%s2156 + $0x11c] sm:$0xf]
        %v2229 = vld [vmem:[%s2156 + $0x120] sm:$0xf]
        %v2230 = vld [vmem:[%s2156 + $0x124] sm:$0xf]
        %v2231 = vld [vmem:[%s2156 + $0x128] sm:$0xf]
        %v2232 = vld [vmem:[%s2156 + $0x12c] sm:$0xf]
        %v2233 = vld [vmem:[%s2156 + $0x130] sm:$0xf]
        %v2234 = vld [vmem:[%s2156 + $0x134] sm:$0xf]
        %v2235 = vld [vmem:[%s2156 + $0x138] sm:$0xf]
        %v2236 = vld [vmem:[%s2156 + $0x13c] sm:$0xf]
        %v2237 = vld [vmem:[%s2156 + $0x140] sm:$0xf]
        %v2238 = vld [vmem:[%s2156 + $0x144] sm:$0xf]
        %v2239 = vld [vmem:[%s2156 + $0x148] sm:$0xf]
        %v2240 = vld [vmem:[%s2156 + $0x14c] sm:$0xf]
        %v2241 = vld [vmem:[%s2156 + $0x150] sm:$0xf]
        %v2242 = vld [vmem:[%s2156 + $0x154] sm:$0xf]
        %v2243 = vld [vmem:[%s2156 + $0x158] sm:$0xf]
        %v2244 = vld [vmem:[%s2156 + $0x15c] sm:$0xf]
        %v2245 = vld [vmem:[%s2156 + $0x160] sm:$0xf]
        %v2246 = vld [vmem:[%s2156 + $0x164] sm:$0xf]
        %v2247 = vld [vmem:[%s2156 + $0x168] sm:$0xf]
        %v2248 = vld [vmem:[%s2156 + $0x16c] sm:$0xf]
        %v2249 = vld [vmem:[%s2156 + $0x170] sm:$0xf]
        %v2250 = vld [vmem:[%s2156 + $0x174] sm:$0xf]
        %v2251 = vld [vmem:[%s2156 + $0x178] sm:$0xf]
        %v2252 = vld [vmem:[%s2156 + $0x17c] sm:$0xf]
        %v2253 = vld [vmem:[%s2156 + $0x180] sm:$0xf]
        %v2254 = vld [vmem:[%s2156 + $0x184] sm:$0xf]
        %v2255 = vld [vmem:[%s2156 + $0x188] sm:$0xf]
        %v2256 = vld [vmem:[%s2156 + $0x18c] sm:$0xf]
        %v2257 = vld [vmem:[%s2156 + $0x190] sm:$0xf]
        %v2258 = vld [vmem:[%s2156 + $0x194] sm:$0xf]
        %v2259 = vld [vmem:[%s2156 + $0x198] sm:$0xf]
        %v2260 = vld [vmem:[%s2156 + $0x19c] sm:$0xf]
        %v2261 = vld [vmem:[%s2156 + $0x1a0] sm:$0xf]
        %v2262 = vld [vmem:[%s2156 + $0x1a4] sm:$0xf]
        %v2263 = vld [vmem:[%s2156 + $0x1a8] sm:$0xf]
        %v2264 = vld [vmem:[%s2156 + $0x1ac] sm:$0xf]
        %v2265 = vld [vmem:[%s2156 + $0x1b0] sm:$0xf]
        %v2266 = vld [vmem:[%s2156 + $0x1b4] sm:$0xf]
        %v2267 = vld [vmem:[%s2156 + $0x1b8] sm:$0xf]
        %v2268 = vld [vmem:[%s2156 + $0x1bc] sm:$0xf]
        %v2273 = vunpack.c.l.b16 %v2152
        %v2274 = vunpack.c.h.b16 %v2152
        %v2275 = vunpack.c.l.b16 %v2153
        %v2276 = vunpack.c.h.b16 %v2153
        %v2277 = vunpack.c.l.b16 %v2154
        %v2278 = vunpack.c.h.b16 %v2154
        %v2279 = vunpack.c.l.b16 %v2155
        %v2280 = vpack.c.b16 %v2273, %v2273
        %v2281 = vpack.c.b16 %v2274, %v2274
        %v2282 = vpack.c.b16 %v2275, %v2275
        %v2283 = vpack.c.b16 %v2276, %v2276
        %v2284 = vpack.c.b16 %v2277, %v2277
        %v2285 = vpack.c.b16 %v2278, %v2278
        %v2286 = vpack.c.b16 %v2279, %v2279
        %v2287 = vrot.slane %v2280, 1
        %v2288 = vrot.slane %v2281, 1
        %v2289 = vrot.slane %v2282, 1
        %v2290 = vrot.slane %v2283, 1
        %v2291 = vrot.slane %v2284, 1
        %v2292 = vrot.slane %v2285, 1
        %v2293 = vrot.slane %v2286, 1
        %v2413 = vunpack.c.l.b16 %v2157
        %v2414 = vunpack.c.l.b16 %v2158
        %v2415 = vunpack.c.l.b16 %v2159
        %v2416 = vunpack.c.l.b16 %v2160
        %v2417 = vunpack.c.l.b16 %v2161
        %v2418 = vunpack.c.l.b16 %v2162
        %v2419 = vunpack.c.l.b16 %v2163
        %v2420 = vunpack.c.l.b16 %v2164
        %v2421 = vunpack.c.l.b16 %v2165
        %v2422 = vunpack.c.l.b16 %v2166
        %v2423 = vunpack.c.l.b16 %v2167
        %v2424 = vunpack.c.l.b16 %v2168
        %v2425 = vunpack.c.l.b16 %v2169
        %v2426 = vunpack.c.l.b16 %v2170
        %v2427 = vunpack.c.l.b16 %v2171
        %v2428 = vunpack.c.l.b16 %v2172
        %v2429 = vunpack.c.l.b16 %v2173
        %v2430 = vunpack.c.l.b16 %v2174
        %v2431 = vunpack.c.l.b16 %v2175
        %v2432 = vunpack.c.l.b16 %v2176
        %v2433 = vunpack.c.l.b16 %v2177
        %v2434 = vunpack.c.l.b16 %v2178
        %v2435 = vunpack.c.l.b16 %v2179
        %v2436 = vunpack.c.l.b16 %v2180
        %v2437 = vunpack.c.l.b16 %v2181
        %v2438 = vunpack.c.l.b16 %v2182
        %v2439 = vunpack.c.l.b16 %v2183
        %v2440 = vunpack.c.l.b16 %v2184
        %v2441 = vunpack.c.l.b16 %v2185
        %v2442 = vunpack.c.l.b16 %v2186
        %v2443 = vunpack.c.l.b16 %v2187
        %v2444 = vunpack.c.l.b16 %v2188
        %v2445 = vunpack.c.l.b16 %v2189
        %v2446 = vunpack.c.l.b16 %v2190
        %v2447 = vunpack.c.l.b16 %v2191
        %v2448 = vunpack.c.l.b16 %v2192
        %v2449 = vunpack.c.l.b16 %v2193
        %v2450 = vunpack.c.l.b16 %v2194
        %v2451 = vunpack.c.l.b16 %v2195
        %v2452 = vunpack.c.l.b16 %v2196
        %v2453 = vunpack.c.l.b16 %v2197
        %v2454 = vunpack.c.l.b16 %v2198
        %v2455 = vunpack.c.l.b16 %v2199
        %v2456 = vunpack.c.l.b16 %v2200
        %v2457 = vunpack.c.l.b16 %v2201
        %v2458 = vunpack.c.l.b16 %v2202
        %v2459 = vunpack.c.l.b16 %v2203
        %v2460 = vunpack.c.l.b16 %v2204
        %v2461 = vunpack.c.l.b16 %v2205
        %v2462 = vunpack.c.l.b16 %v2206
        %v2463 = vunpack.c.l.b16 %v2207
        %v2464 = vunpack.c.l.b16 %v2208
        %v2465 = vunpack.c.l.b16 %v2209
        %v2466 = vunpack.c.l.b16 %v2210
        %v2467 = vunpack.c.l.b16 %v2211
        %v2468 = vunpack.c.l.b16 %v2212
        %v2469 = vunpack.c.l.b16 %v2213
        %v2470 = vunpack.c.l.b16 %v2214
        %v2471 = vunpack.c.l.b16 %v2215
        %v2472 = vunpack.c.l.b16 %v2216
        %v2473 = vunpack.c.l.b16 %v2217
        %v2474 = vunpack.c.l.b16 %v2218
        %v2475 = vunpack.c.l.b16 %v2219
        %v2476 = vunpack.c.l.b16 %v2220
        %v2477 = vunpack.c.l.b16 %v2221
        %v2478 = vunpack.c.l.b16 %v2222
        %v2479 = vunpack.c.l.b16 %v2223
        %v2480 = vunpack.c.l.b16 %v2224
        %v2481 = vunpack.c.l.b16 %v2225
        %v2482 = vunpack.c.l.b16 %v2226
        %v2483 = vunpack.c.l.b16 %v2227
        %v2484 = vunpack.c.l.b16 %v2228
        %v2485 = vunpack.c.l.b16 %v2229
        %v2486 = vunpack.c.l.b16 %v2230
        %v2487 = vunpack.c.l.b16 %v2231
        %v2488 = vunpack.c.l.b16 %v2232
        %v2489 = vunpack.c.l.b16 %v2233
        %v2490 = vunpack.c.l.b16 %v2234
        %v2491 = vunpack.c.l.b16 %v2235
        %v2492 = vunpack.c.l.b16 %v2236
        %v2493 = vunpack.c.l.b16 %v2237
        %v2494 = vunpack.c.l.b16 %v2238
        %v2495 = vunpack.c.l.b16 %v2239
        %v2496 = vunpack.c.l.b16 %v2240
        %v2497 = vunpack.c.l.b16 %v2241
        %v2498 = vunpack.c.l.b16 %v2242
        %v2499 = vunpack.c.l.b16 %v2243
        %v2500 = vunpack.c.l.b16 %v2244
        %v2501 = vunpack.c.l.b16 %v2245
        %v2502 = vunpack.c.l.b16 %v2246
        %v2503 = vunpack.c.l.b16 %v2247
        %v2504 = vunpack.c.l.b16 %v2248
        %v2505 = vunpack.c.l.b16 %v2249
        %v2506 = vunpack.c.l.b16 %v2250
        %v2507 = vunpack.c.l.b16 %v2251
        %v2508 = vunpack.c.l.b16 %v2252
        %v2509 = vunpack.c.l.b16 %v2253
        %v2510 = vunpack.c.l.b16 %v2254
        %v2511 = vunpack.c.l.b16 %v2255
        %v2512 = vunpack.c.l.b16 %v2256
        %v2513 = vunpack.c.l.b16 %v2257
        %v2514 = vunpack.c.l.b16 %v2258
        %v2515 = vunpack.c.l.b16 %v2259
        %v2516 = vunpack.c.l.b16 %v2260
        %v2517 = vunpack.c.l.b16 %v2261
        %v2518 = vunpack.c.l.b16 %v2262
        %v2519 = vunpack.c.l.b16 %v2263
        %v2520 = vunpack.c.l.b16 %v2264
        %v2521 = vunpack.c.l.b16 %v2265
        %v2522 = vunpack.c.l.b16 %v2266
        %v2523 = vunpack.c.l.b16 %v2267
        %v2524 = vunpack.c.l.b16 %v2268
        %v2525 = vpack.c.b16 %v2414, %v2413
        %v2526 = vpack.c.b16 %v2416, %v2415
        %v2527 = vpack.c.b16 %v2418, %v2417
        %v2528 = vpack.c.b16 %v2420, %v2419
        %v2529 = vpack.c.b16 %v2422, %v2421
        %v2530 = vpack.c.b16 %v2424, %v2423
        %v2531 = vpack.c.b16 %v2426, %v2425
        %v2532 = vpack.c.b16 %v2428, %v2427
        %v2533 = vpack.c.b16 %v2430, %v2429
        %v2534 = vpack.c.b16 %v2432, %v2431
        %v2535 = vpack.c.b16 %v2434, %v2433
        %v2536 = vpack.c.b16 %v2436, %v2435
        %v2537 = vpack.c.b16 %v2438, %v2437
        %v2538 = vpack.c.b16 %v2440, %v2439
        %v2539 = vpack.c.b16 %v2442, %v2441
        %v2540 = vpack.c.b16 %v2444, %v2443
        %v2541 = vpack.c.b16 %v2446, %v2445
        %v2542 = vpack.c.b16 %v2448, %v2447
        %v2543 = vpack.c.b16 %v2450, %v2449
        %v2544 = vpack.c.b16 %v2452, %v2451
        %v2545 = vpack.c.b16 %v2454, %v2453
        %v2546 = vpack.c.b16 %v2456, %v2455
        %v2547 = vpack.c.b16 %v2458, %v2457
        %v2548 = vpack.c.b16 %v2460, %v2459
        %v2549 = vpack.c.b16 %v2462, %v2461
        %v2550 = vpack.c.b16 %v2464, %v2463
        %v2551 = vpack.c.b16 %v2466, %v2465
        %v2552 = vpack.c.b16 %v2468, %v2467
        %v2553 = vpack.c.b16 %v2470, %v2469
        %v2554 = vpack.c.b16 %v2472, %v2471
        %v2555 = vpack.c.b16 %v2474, %v2473
        %v2556 = vpack.c.b16 %v2476, %v2475
        %v2557 = vpack.c.b16 %v2478, %v2477
        %v2558 = vpack.c.b16 %v2480, %v2479
        %v2559 = vpack.c.b16 %v2482, %v2481
        %v2560 = vpack.c.b16 %v2484, %v2483
        %v2561 = vpack.c.b16 %v2486, %v2485
        %v2562 = vpack.c.b16 %v2488, %v2487
        %v2563 = vpack.c.b16 %v2490, %v2489
        %v2564 = vpack.c.b16 %v2492, %v2491
        %v2565 = vpack.c.b16 %v2494, %v2493
        %v2566 = vpack.c.b16 %v2496, %v2495
        %v2567 = vpack.c.b16 %v2498, %v2497
        %v2568 = vpack.c.b16 %v2500, %v2499
        %v2569 = vpack.c.b16 %v2502, %v2501
        %v2570 = vpack.c.b16 %v2504, %v2503
        %v2571 = vpack.c.b16 %v2506, %v2505
        %v2572 = vpack.c.b16 %v2508, %v2507
        %v2573 = vpack.c.b16 %v2510, %v2509
        %v2574 = vpack.c.b16 %v2512, %v2511
        %v2575 = vpack.c.b16 %v2514, %v2513
        %v2576 = vpack.c.b16 %v2516, %v2515
        %v2577 = vpack.c.b16 %v2518, %v2517
        %v2578 = vpack.c.b16 %v2520, %v2519
        %v2579 = vpack.c.b16 %v2522, %v2521
        %v2580 = vpack.c.b16 %v2524, %v2523
        %2637 = vmatprep.subr.bf16.mxu0 0
        %2638 = vmatpush1.bf16.msra.mxu0 %v2525
        %2639 = vmatprep.subr.bf16.mxu0 0
        %2640 = vmatpush1.bf16.msra.mxu0 %v2526
        %2641 = vmatprep.subr.bf16.mxu0 0
        %2642 = vmatpush1.bf16.msra.mxu0 %v2527
        %2643 = vmatprep.subr.bf16.mxu0 0
        %2644 = vmatpush1.bf16.msra.mxu0 %v2528
        %2645 = vmatprep.subr.bf16.mxu0 0
        %2646 = vmatpush1.bf16.msra.mxu0 %v2529
        %2647 = vmatprep.subr.bf16.mxu0 0
        %2648 = vmatpush1.bf16.msra.mxu0 %v2530
        %2649 = vmatprep.subr.bf16.mxu0 0
        %2650 = vmatpush1.bf16.msra.mxu0 %v2531
        %2651 = vmatprep.subr.bf16.mxu0 0
        %2652 = vmatpush1.bf16.msra.mxu0 %v2532
        %2653 = vmatprep.subr.bf16.mxu0 0
        %2654 = vmatpush1.bf16.msra.mxu0 %v2533
        %2655 = vmatprep.subr.bf16.mxu0 0
        %2656 = vmatpush1.bf16.msra.mxu0 %v2534
        %2657 = vmatprep.subr.bf16.mxu0 0
        %2658 = vmatpush1.bf16.msra.mxu0 %v2535
        %2659 = vmatprep.subr.bf16.mxu0 0
        %2660 = vmatpush1.bf16.msra.mxu0 %v2536
        %2661 = vmatprep.subr.bf16.mxu0 0
        %2662 = vmatpush1.bf16.msra.mxu0 %v2537
        %2663 = vmatprep.subr.bf16.mxu0 0
        %2664 = vmatpush1.bf16.msra.mxu0 %v2538
        %2665 = vmatprep.subr.bf16.mxu0 0
        %2666 = vmatpush1.bf16.msra.mxu0 %v2539
        %2667 = vmatprep.subr.bf16.mxu0 0
        %2668 = vmatpush1.bf16.msra.mxu0 %v2540
        %2669 = vmatprep.mubr.bf16.mxu0 %v2288
        %2670 = vmatmul.mubr.bf16.gmra.mrb[0].mxu0 %v2287
        %v2671 = vpop.f32.mrb[0].mxu0
        %v2672 = vadd.f32 0.0, %v2671
        %v2673 = vpop.f32.mrb[0].mxu0
        %v2674 = vpop.f32.mrb[0].mxu0
        %v2675 = vpop.f32.mrb[0].mxu0
        %2676 = vdwg.mxu0
        %2677 = vmatprep.subr.bf16.mxu0 0
        %2678 = vmatpush1.bf16.msra.mxu0 %v2541
        %2679 = vmatprep.subr.bf16.mxu0 0
        %2680 = vmatpush1.bf16.msra.mxu0 %v2542
        %2681 = vmatprep.subr.bf16.mxu0 0
        %2682 = vmatpush1.bf16.msra.mxu0 %v2543
        %2683 = vmatprep.subr.bf16.mxu0 0
        %2684 = vmatpush1.bf16.msra.mxu0 %v2544
        %2685 = vmatprep.subr.bf16.mxu0 0
        %2686 = vmatpush1.bf16.msra.mxu0 %v2545
        %2687 = vmatprep.subr.bf16.mxu0 0
        %2688 = vmatpush1.bf16.msra.mxu0 %v2546
        %2689 = vmatprep.subr.bf16.mxu0 0
        %2690 = vmatpush1.bf16.msra.mxu0 %v2547
        %2691 = vmatprep.subr.bf16.mxu0 0
        %2692 = vmatpush1.bf16.msra.mxu0 %v2548
        %2693 = vmatprep.subr.bf16.mxu0 0
        %2694 = vmatpush1.bf16.msra.mxu0 %v2549
        %2695 = vmatprep.subr.bf16.mxu0 0
        %2696 = vmatpush1.bf16.msra.mxu0 %v2550
        %2697 = vmatprep.subr.bf16.mxu0 0
        %2698 = vmatpush1.bf16.msra.mxu0 %v2551
        %2699 = vmatprep.subr.bf16.mxu0 0
        %2700 = vmatpush1.bf16.msra.mxu0 %v2552
        %2701 = vmatprep.subr.bf16.mxu0 0
        %2702 = vmatpush1.bf16.msra.mxu0 %v2553
        %2703 = vmatprep.subr.bf16.mxu0 0
        %2704 = vmatpush1.bf16.msra.mxu0 %v2554
        %2705 = vmatprep.subr.bf16.mxu0 0
        %2706 = vmatpush1.bf16.msra.mxu0 %v2555
        %2707 = vmatprep.subr.bf16.mxu0 0
        %2708 = vmatpush1.bf16.msra.mxu0 %v2556
        %2709 = vmatprep.mubr.bf16.mxu0 %v2290
        %2710 = vmatmul.mubr.bf16.gmra.mrb[0].mxu0 %v2289
        %v2711 = vpop.f32.mrb[0].mxu0
        %v2712 = vadd.f32 %v2672, %v2711
        %v2713 = vpop.f32.mrb[0].mxu0
        %v2714 = vpop.f32.mrb[0].mxu0
        %v2715 = vpop.f32.mrb[0].mxu0
        %2716 = vdwg.mxu0
        %2717 = vmatprep.subr.bf16.mxu0 0
        %2718 = vmatpush1.bf16.msra.mxu0 %v2557
        %2719 = vmatprep.subr.bf16.mxu0 0
        %2720 = vmatpush1.bf16.msra.mxu0 %v2558
        %2721 = vmatprep.subr.bf16.mxu0 0
        %2722 = vmatpush1.bf16.msra.mxu0 %v2559
        %2723 = vmatprep.subr.bf16.mxu0 0
        %2724 = vmatpush1.bf16.msra.mxu0 %v2560
        %2725 = vmatprep.subr.bf16.mxu0 0
        %2726 = vmatpush1.bf16.msra.mxu0 %v2561
        %2727 = vmatprep.subr.bf16.mxu0 0
        %2728 = vmatpush1.bf16.msra.mxu0 %v2562
        %2729 = vmatprep.subr.bf16.mxu0 0
        %2730 = vmatpush1.bf16.msra.mxu0 %v2563
        %2731 = vmatprep.subr.bf16.mxu0 0
        %2732 = vmatpush1.bf16.msra.mxu0 %v2564
        %2733 = vmatprep.subr.bf16.mxu0 0
        %2734 = vmatpush1.bf16.msra.mxu0 %v2565
        %2735 = vmatprep.subr.bf16.mxu0 0
        %2736 = vmatpush1.bf16.msra.mxu0 %v2566
        %2737 = vmatprep.subr.bf16.mxu0 0
        %2738 = vmatpush1.bf16.msra.mxu0 %v2567
        %2739 = vmatprep.subr.bf16.mxu0 0
        %2740 = vmatpush1.bf16.msra.mxu0 %v2568
        %2741 = vmatprep.subr.bf16.mxu0 0
        %2742 = vmatpush1.bf16.msra.mxu0 %v2569
        %2743 = vmatprep.subr.bf16.mxu0 0
        %2744 = vmatpush1.bf16.msra.mxu0 %v2570
        %2745 = vmatprep.subr.bf16.mxu0 0
        %2746 = vmatpush1.bf16.msra.mxu0 %v2571
        %2747 = vmatprep.subr.bf16.mxu0 0
        %2748 = vmatpush1.bf16.msra.mxu0 %v2572
        %2749 = vmatprep.mubr.bf16.mxu0 %v2292
        %2750 = vmatmul.mubr.bf16.gmra.mrb[0].mxu0 %v2291
        %v2751 = vpop.f32.mrb[0].mxu0
        %v2752 = vadd.f32 %v2712, %v2751
        %v2753 = vpop.f32.mrb[0].mxu0
        %v2754 = vpop.f32.mrb[0].mxu0
        %v2755 = vpop.f32.mrb[0].mxu0
        %2756 = vdwg.mxu0
        %2757 = vmatprep.subr.bf16.mxu0 0
        %2758 = vmatpush1.bf16.msra.mxu0 %v2573
        %2759 = vmatprep.subr.bf16.mxu0 0
        %2760 = vmatpush1.bf16.msra.mxu0 %v2574
        %2761 = vmatprep.subr.bf16.mxu0 0
        %2762 = vmatpush1.bf16.msra.mxu0 %v2575
        %2763 = vmatprep.subr.bf16.mxu0 0
        %2764 = vmatpush1.bf16.msra.mxu0 %v2576
        %2765 = vmatprep.subr.bf16.mxu0 0
        %2766 = vmatpush1.bf16.msra.mxu0 %v2577
        %2767 = vmatprep.subr.bf16.mxu0 0
        %2768 = vmatpush1.bf16.msra.mxu0 %v2578
        %2769 = vmatprep.subr.bf16.mxu0 0
        %2770 = vmatpush1.bf16.msra.mxu0 %v2579
        %2771 = vmatprep.subr.bf16.mxu0 0
        %2772 = vmatpush1.bf16.msra.mxu0 %v2580
        %2773 = vmatprep.subr.bf16.mxu0 0
        %2774 = vmatpush1.bf16.msra.mxu0 0
        %2775 = vmatprep.subr.bf16.mxu0 0
        %2776 = vmatpush1.bf16.msra.mxu0 0
        %2777 = vmatprep.subr.bf16.mxu0 0
        %2778 = vmatpush1.bf16.msra.mxu0 0
        %2779 = vmatprep.subr.bf16.mxu0 0
        %2780 = vmatpush1.bf16.msra.mxu0 0
        %2781 = vmatprep.subr.bf16.mxu0 0
        %2782 = vmatpush1.bf16.msra.mxu0 0
        %2783 = vmatprep.subr.bf16.mxu0 0
        %2784 = vmatpush1.bf16.msra.mxu0 0
        %2785 = vmatprep.subr.bf16.mxu0 0
        %2786 = vmatpush1.bf16.msra.mxu0 0
        %2787 = vmatprep.subr.bf16.mxu0 0
        %2788 = vmatpush1.bf16.msra.mxu0 0
        %2789 = vmatprep.mubr.bf16.mxu0 0
        %2790 = vmatmul.mubr.bf16.gmra.mrb[0].mxu0 %v2293
        %v2791 = vpop.f32.mrb[0].mxu0
        %v2792 = vadd.f32 %v2752, %v2791
        %v2793 = vpop.f32.mrb[0].mxu0
        %v2794 = vpop.f32.mrb[0].mxu0
        %v2795 = vpop.f32.mrb[0].mxu0
        %2796 = vdwg.mxu0
        %v2797 = vadd.f32 %v2151, %v2792
        %v2798 = vld [vmem:[%s224] sm:$0xcc]
        %v2799 = vld [vmem:[%s224 + $0x8] sm:$0xcc]
        %v2800 = vld [vmem:[%s224 + $0x10] sm:$0xcc]
        %v2801 = vld [vmem:[%s224 + $0x18] sm:$0xc]
        %s2802 = scalar_lea.vmem %s2, 1792
        %v2803 = vld [vmem:[%s2802] sm:$0xf]
        %v2804 = vld [vmem:[%s2802 + $0x4] sm:$0xf]
        %v2805 = vld [vmem:[%s2802 + $0x8] sm:$0xf]
        %v2806 = vld [vmem:[%s2802 + $0xc] sm:$0xf]
        %v2807 = vld [vmem:[%s2802 + $0x10] sm:$0xf]
        %v2808 = vld [vmem:[%s2802 + $0x14] sm:$0xf]
        %v2809 = vld [vmem:[%s2802 + $0x18] sm:$0xf]
        %v2810 = vld [vmem:[%s2802 + $0x1c] sm:$0xf]
        %v2811 = vld [vmem:[%s2802 + $0x20] sm:$0xf]
        %v2812 = vld [vmem:[%s2802 + $0x24] sm:$0xf]
        %v2813 = vld [vmem:[%s2802 + $0x28] sm:$0xf]
        %v2814 = vld [vmem:[%s2802 + $0x2c] sm:$0xf]
        %v2815 = vld [vmem:[%s2802 + $0x30] sm:$0xf]
        %v2816 = vld [vmem:[%s2802 + $0x34] sm:$0xf]
        %v2817 = vld [vmem:[%s2802 + $0x38] sm:$0xf]
        %v2818 = vld [vmem:[%s2802 + $0x3c] sm:$0xf]
        %v2819 = vld [vmem:[%s2802 + $0x40] sm:$0xf]
        %v2820 = vld [vmem:[%s2802 + $0x44] sm:$0xf]
        %v2821 = vld [vmem:[%s2802 + $0x48] sm:$0xf]
        %v2822 = vld [vmem:[%s2802 + $0x4c] sm:$0xf]
        %v2823 = vld [vmem:[%s2802 + $0x50] sm:$0xf]
        %v2824 = vld [vmem:[%s2802 + $0x54] sm:$0xf]
        %v2825 = vld [vmem:[%s2802 + $0x58] sm:$0xf]
        %v2826 = vld [vmem:[%s2802 + $0x5c] sm:$0xf]
        %v2827 = vld [vmem:[%s2802 + $0x60] sm:$0xf]
        %v2828 = vld [vmem:[%s2802 + $0x64] sm:$0xf]
        %v2829 = vld [vmem:[%s2802 + $0x68] sm:$0xf]
        %v2830 = vld [vmem:[%s2802 + $0x6c] sm:$0xf]
        %v2831 = vld [vmem:[%s2802 + $0x70] sm:$0xf]
        %v2832 = vld [vmem:[%s2802 + $0x74] sm:$0xf]
        %v2833 = vld [vmem:[%s2802 + $0x78] sm:$0xf]
        %v2834 = vld [vmem:[%s2802 + $0x7c] sm:$0xf]
        %v2835 = vld [vmem:[%s2802 + $0x80] sm:$0xf]
        %v2836 = vld [vmem:[%s2802 + $0x84] sm:$0xf]
        %v2837 = vld [vmem:[%s2802 + $0x88] sm:$0xf]
        %v2838 = vld [vmem:[%s2802 + $0x8c] sm:$0xf]
        %v2839 = vld [vmem:[%s2802 + $0x90] sm:$0xf]
        %v2840 = vld [vmem:[%s2802 + $0x94] sm:$0xf]
        %v2841 = vld [vmem:[%s2802 + $0x98] sm:$0xf]
        %v2842 = vld [vmem:[%s2802 + $0x9c] sm:$0xf]
        %v2843 = vld [vmem:[%s2802 + $0xa0] sm:$0xf]
        %v2844 = vld [vmem:[%s2802 + $0xa4] sm:$0xf]
        %v2845 = vld [vmem:[%s2802 + $0xa8] sm:$0xf]
        %v2846 = vld [vmem:[%s2802 + $0xac] sm:$0xf]
        %v2847 = vld [vmem:[%s2802 + $0xb0] sm:$0xf]
        %v2848 = vld [vmem:[%s2802 + $0xb4] sm:$0xf]
        %v2849 = vld [vmem:[%s2802 + $0xb8] sm:$0xf]
        %v2850 = vld [vmem:[%s2802 + $0xbc] sm:$0xf]
        %v2851 = vld [vmem:[%s2802 + $0xc0] sm:$0xf]
        %v2852 = vld [vmem:[%s2802 + $0xc4] sm:$0xf]
        %v2853 = vld [vmem:[%s2802 + $0xc8] sm:$0xf]
        %v2854 = vld [vmem:[%s2802 + $0xcc] sm:$0xf]
        %v2855 = vld [vmem:[%s2802 + $0xd0] sm:$0xf]
        %v2856 = vld [vmem:[%s2802 + $0xd4] sm:$0xf]
        %v2857 = vld [vmem:[%s2802 + $0xd8] sm:$0xf]
        %v2858 = vld [vmem:[%s2802 + $0xdc] sm:$0xf]
        %v2859 = vld [vmem:[%s2802 + $0xe0] sm:$0xf]
        %v2860 = vld [vmem:[%s2802 + $0xe4] sm:$0xf]
        %v2861 = vld [vmem:[%s2802 + $0xe8] sm:$0xf]
        %v2862 = vld [vmem:[%s2802 + $0xec] sm:$0xf]
        %v2863 = vld [vmem:[%s2802 + $0xf0] sm:$0xf]
        %v2864 = vld [vmem:[%s2802 + $0xf4] sm:$0xf]
        %v2865 = vld [vmem:[%s2802 + $0xf8] sm:$0xf]
        %v2866 = vld [vmem:[%s2802 + $0xfc] sm:$0xf]
        %v2867 = vld [vmem:[%s2802 + $0x100] sm:$0xf]
        %v2868 = vld [vmem:[%s2802 + $0x104] sm:$0xf]
        %v2869 = vld [vmem:[%s2802 + $0x108] sm:$0xf]
        %v2870 = vld [vmem:[%s2802 + $0x10c] sm:$0xf]
        %v2871 = vld [vmem:[%s2802 + $0x110] sm:$0xf]
        %v2872 = vld [vmem:[%s2802 + $0x114] sm:$0xf]
        %v2873 = vld [vmem:[%s2802 + $0x118] sm:$0xf]
        %v2874 = vld [vmem:[%s2802 + $0x11c] sm:$0xf]
        %v2875 = vld [vmem:[%s2802 + $0x120] sm:$0xf]
        %v2876 = vld [vmem:[%s2802 + $0x124] sm:$0xf]
        %v2877 = vld [vmem:[%s2802 + $0x128] sm:$0xf]
        %v2878 = vld [vmem:[%s2802 + $0x12c] sm:$0xf]
        %v2879 = vld [vmem:[%s2802 + $0x130] sm:$0xf]
        %v2880 = vld [vmem:[%s2802 + $0x134] sm:$0xf]
        %v2881 = vld [vmem:[%s2802 + $0x138] sm:$0xf]
        %v2882 = vld [vmem:[%s2802 + $0x13c] sm:$0xf]
        %v2883 = vld [vmem:[%s2802 + $0x140] sm:$0xf]
        %v2884 = vld [vmem:[%s2802 + $0x144] sm:$0xf]
        %v2885 = vld [vmem:[%s2802 + $0x148] sm:$0xf]
        %v2886 = vld [vmem:[%s2802 + $0x14c] sm:$0xf]
        %v2887 = vld [vmem:[%s2802 + $0x150] sm:$0xf]
        %v2888 = vld [vmem:[%s2802 + $0x154] sm:$0xf]
        %v2889 = vld [vmem:[%s2802 + $0x158] sm:$0xf]
        %v2890 = vld [vmem:[%s2802 + $0x15c] sm:$0xf]
        %v2891 = vld [vmem:[%s2802 + $0x160] sm:$0xf]
        %v2892 = vld [vmem:[%s2802 + $0x164] sm:$0xf]
        %v2893 = vld [vmem:[%s2802 + $0x168] sm:$0xf]
        %v2894 = vld [vmem:[%s2802 + $0x16c] sm:$0xf]
        %v2895 = vld [vmem:[%s2802 + $0x170] sm:$0xf]
        %v2896 = vld [vmem:[%s2802 + $0x174] sm:$0xf]
        %v2897 = vld [vmem:[%s2802 + $0x178] sm:$0xf]
        %v2898 = vld [vmem:[%s2802 + $0x17c] sm:$0xf]
        %v2899 = vld [vmem:[%s2802 + $0x180] sm:$0xf]
        %v2900 = vld [vmem:[%s2802 + $0x184] sm:$0xf]
        %v2901 = vld [vmem:[%s2802 + $0x188] sm:$0xf]
        %v2902 = vld [vmem:[%s2802 + $0x18c] sm:$0xf]
        %v2903 = vld [vmem:[%s2802 + $0x190] sm:$0xf]
        %v2904 = vld [vmem:[%s2802 + $0x194] sm:$0xf]
        %v2905 = vld [vmem:[%s2802 + $0x198] sm:$0xf]
        %v2906 = vld [vmem:[%s2802 + $0x19c] sm:$0xf]
        %v2907 = vld [vmem:[%s2802 + $0x1a0] sm:$0xf]
        %v2908 = vld [vmem:[%s2802 + $0x1a4] sm:$0xf]
        %v2909 = vld [vmem:[%s2802 + $0x1a8] sm:$0xf]
        %v2910 = vld [vmem:[%s2802 + $0x1ac] sm:$0xf]
        %v2911 = vld [vmem:[%s2802 + $0x1b0] sm:$0xf]
        %v2912 = vld [vmem:[%s2802 + $0x1b4] sm:$0xf]
        %v2913 = vld [vmem:[%s2802 + $0x1b8] sm:$0xf]
        %v2914 = vld [vmem:[%s2802 + $0x1bc] sm:$0xf]
        %v2919 = vunpack.c.l.b16 %v2798
        %v2920 = vunpack.c.h.b16 %v2798
        %v2921 = vunpack.c.l.b16 %v2799
        %v2922 = vunpack.c.h.b16 %v2799
        %v2923 = vunpack.c.l.b16 %v2800
        %v2924 = vunpack.c.h.b16 %v2800
        %v2925 = vunpack.c.l.b16 %v2801
        %v2926 = vpack.c.b16 %v2919, %v2919
        %v2927 = vpack.c.b16 %v2920, %v2920
        %v2928 = vpack.c.b16 %v2921, %v2921
        %v2929 = vpack.c.b16 %v2922, %v2922
        %v2930 = vpack.c.b16 %v2923, %v2923
        %v2931 = vpack.c.b16 %v2924, %v2924
        %v2932 = vpack.c.b16 %v2925, %v2925
        %v2933 = vrot.slane %v2926, 2
        %v2934 = vrot.slane %v2927, 2
        %v2935 = vrot.slane %v2928, 2
        %v2936 = vrot.slane %v2929, 2
        %v2937 = vrot.slane %v2930, 2
        %v2938 = vrot.slane %v2931, 2
        %v2939 = vrot.slane %v2932, 2
        %v3059 = vunpack.c.l.b16 %v2803
        %v3060 = vunpack.c.l.b16 %v2804
        %v3061 = vunpack.c.l.b16 %v2805
        %v3062 = vunpack.c.l.b16 %v2806
        %v3063 = vunpack.c.l.b16 %v2807
        %v3064 = vunpack.c.l.b16 %v2808
        %v3065 = vunpack.c.l.b16 %v2809
        %v3066 = vunpack.c.l.b16 %v2810
        %v3067 = vunpack.c.l.b16 %v2811
        %v3068 = vunpack.c.l.b16 %v2812
        %v3069 = vunpack.c.l.b16 %v2813
        %v3070 = vunpack.c.l.b16 %v2814
        %v3071 = vunpack.c.l.b16 %v2815
        %v3072 = vunpack.c.l.b16 %v2816
        %v3073 = vunpack.c.l.b16 %v2817
        %v3074 = vunpack.c.l.b16 %v2818
        %v3075 = vunpack.c.l.b16 %v2819
        %v3076 = vunpack.c.l.b16 %v2820
        %v3077 = vunpack.c.l.b16 %v2821
        %v3078 = vunpack.c.l.b16 %v2822
        %v3079 = vunpack.c.l.b16 %v2823
        %v3080 = vunpack.c.l.b16 %v2824
        %v3081 = vunpack.c.l.b16 %v2825
        %v3082 = vunpack.c.l.b16 %v2826
        %v3083 = vunpack.c.l.b16 %v2827
        %v3084 = vunpack.c.l.b16 %v2828
        %v3085 = vunpack.c.l.b16 %v2829
        %v3086 = vunpack.c.l.b16 %v2830
        %v3087 = vunpack.c.l.b16 %v2831
        %v3088 = vunpack.c.l.b16 %v2832
        %v3089 = vunpack.c.l.b16 %v2833
        %v3090 = vunpack.c.l.b16 %v2834
        %v3091 = vunpack.c.l.b16 %v2835
        %v3092 = vunpack.c.l.b16 %v2836
        %v3093 = vunpack.c.l.b16 %v2837
        %v3094 = vunpack.c.l.b16 %v2838
        %v3095 = vunpack.c.l.b16 %v2839
        %v3096 = vunpack.c.l.b16 %v2840
        %v3097 = vunpack.c.l.b16 %v2841
        %v3098 = vunpack.c.l.b16 %v2842
        %v3099 = vunpack.c.l.b16 %v2843
        %v3100 = vunpack.c.l.b16 %v2844
        %v3101 = vunpack.c.l.b16 %v2845
        %v3102 = vunpack.c.l.b16 %v2846
        %v3103 = vunpack.c.l.b16 %v2847
        %v3104 = vunpack.c.l.b16 %v2848
        %v3105 = vunpack.c.l.b16 %v2849
        %v3106 = vunpack.c.l.b16 %v2850
        %v3107 = vunpack.c.l.b16 %v2851
        %v3108 = vunpack.c.l.b16 %v2852
        %v3109 = vunpack.c.l.b16 %v2853
        %v3110 = vunpack.c.l.b16 %v2854
        %v3111 = vunpack.c.l.b16 %v2855
        %v3112 = vunpack.c.l.b16 %v2856
        %v3113 = vunpack.c.l.b16 %v2857
        %v3114 = vunpack.c.l.b16 %v2858
        %v3115 = vunpack.c.l.b16 %v2859
        %v3116 = vunpack.c.l.b16 %v2860
        %v3117 = vunpack.c.l.b16 %v2861
        %v3118 = vunpack.c.l.b16 %v2862
        %v3119 = vunpack.c.l.b16 %v2863
        %v3120 = vunpack.c.l.b16 %v2864
        %v3121 = vunpack.c.l.b16 %v2865
        %v3122 = vunpack.c.l.b16 %v2866
        %v3123 = vunpack.c.l.b16 %v2867
        %v3124 = vunpack.c.l.b16 %v2868
        %v3125 = vunpack.c.l.b16 %v2869
        %v3126 = vunpack.c.l.b16 %v2870
        %v3127 = vunpack.c.l.b16 %v2871
        %v3128 = vunpack.c.l.b16 %v2872
        %v3129 = vunpack.c.l.b16 %v2873
        %v3130 = vunpack.c.l.b16 %v2874
        %v3131 = vunpack.c.l.b16 %v2875
        %v3132 = vunpack.c.l.b16 %v2876
        %v3133 = vunpack.c.l.b16 %v2877
        %v3134 = vunpack.c.l.b16 %v2878
        %v3135 = vunpack.c.l.b16 %v2879
        %v3136 = vunpack.c.l.b16 %v2880
        %v3137 = vunpack.c.l.b16 %v2881
        %v3138 = vunpack.c.l.b16 %v2882
        %v3139 = vunpack.c.l.b16 %v2883
        %v3140 = vunpack.c.l.b16 %v2884
        %v3141 = vunpack.c.l.b16 %v2885
        %v3142 = vunpack.c.l.b16 %v2886
        %v3143 = vunpack.c.l.b16 %v2887
        %v3144 = vunpack.c.l.b16 %v2888
        %v3145 = vunpack.c.l.b16 %v2889
        %v3146 = vunpack.c.l.b16 %v2890
        %v3147 = vunpack.c.l.b16 %v2891
        %v3148 = vunpack.c.l.b16 %v2892
        %v3149 = vunpack.c.l.b16 %v2893
        %v3150 = vunpack.c.l.b16 %v2894
        %v3151 = vunpack.c.l.b16 %v2895
        %v3152 = vunpack.c.l.b16 %v2896
        %v3153 = vunpack.c.l.b16 %v2897
        %v3154 = vunpack.c.l.b16 %v2898
        %v3155 = vunpack.c.l.b16 %v2899
        %v3156 = vunpack.c.l.b16 %v2900
        %v3157 = vunpack.c.l.b16 %v2901
        %v3158 = vunpack.c.l.b16 %v2902
        %v3159 = vunpack.c.l.b16 %v2903
        %v3160 = vunpack.c.l.b16 %v2904
        %v3161 = vunpack.c.l.b16 %v2905
        %v3162 = vunpack.c.l.b16 %v2906
        %v3163 = vunpack.c.l.b16 %v2907
        %v3164 = vunpack.c.l.b16 %v2908
        %v3165 = vunpack.c.l.b16 %v2909
        %v3166 = vunpack.c.l.b16 %v2910
        %v3167 = vunpack.c.l.b16 %v2911
        %v3168 = vunpack.c.l.b16 %v2912
        %v3169 = vunpack.c.l.b16 %v2913
        %v3170 = vunpack.c.l.b16 %v2914
        %v3171 = vpack.c.b16 %v3060, %v3059
        %v3172 = vpack.c.b16 %v3062, %v3061
        %v3173 = vpack.c.b16 %v3064, %v3063
        %v3174 = vpack.c.b16 %v3066, %v3065
        %v3175 = vpack.c.b16 %v3068, %v3067
        %v3176 = vpack.c.b16 %v3070, %v3069
        %v3177 = vpack.c.b16 %v3072, %v3071
        %v3178 = vpack.c.b16 %v3074, %v3073
        %v3179 = vpack.c.b16 %v3076, %v3075
        %v3180 = vpack.c.b16 %v3078, %v3077
        %v3181 = vpack.c.b16 %v3080, %v3079
        %v3182 = vpack.c.b16 %v3082, %v3081
        %v3183 = vpack.c.b16 %v3084, %v3083
        %v3184 = vpack.c.b16 %v3086, %v3085
        %v3185 = vpack.c.b16 %v3088, %v3087
        %v3186 = vpack.c.b16 %v3090, %v3089
        %v3187 = vpack.c.b16 %v3092, %v3091
        %v3188 = vpack.c.b16 %v3094, %v3093
        %v3189 = vpack.c.b16 %v3096, %v3095
        %v3190 = vpack.c.b16 %v3098, %v3097
        %v3191 = vpack.c.b16 %v3100, %v3099
        %v3192 = vpack.c.b16 %v3102, %v3101
        %v3193 = vpack.c.b16 %v3104, %v3103
        %v3194 = vpack.c.b16 %v3106, %v3105
        %v3195 = vpack.c.b16 %v3108, %v3107
        %v3196 = vpack.c.b16 %v3110, %v3109
        %v3197 = vpack.c.b16 %v3112, %v3111
        %v3198 = vpack.c.b16 %v3114, %v3113
        %v3199 = vpack.c.b16 %v3116, %v3115
        %v3200 = vpack.c.b16 %v3118, %v3117
        %v3201 = vpack.c.b16 %v3120, %v3119
        %v3202 = vpack.c.b16 %v3122, %v3121
        %v3203 = vpack.c.b16 %v3124, %v3123
        %v3204 = vpack.c.b16 %v3126, %v3125
        %v3205 = vpack.c.b16 %v3128, %v3127
        %v3206 = vpack.c.b16 %v3130, %v3129
        %v3207 = vpack.c.b16 %v3132, %v3131
        %v3208 = vpack.c.b16 %v3134, %v3133
        %v3209 = vpack.c.b16 %v3136, %v3135
        %v3210 = vpack.c.b16 %v3138, %v3137
        %v3211 = vpack.c.b16 %v3140, %v3139
        %v3212 = vpack.c.b16 %v3142, %v3141
        %v3213 = vpack.c.b16 %v3144, %v3143
        %v3214 = vpack.c.b16 %v3146, %v3145
        %v3215 = vpack.c.b16 %v3148, %v3147
        %v3216 = vpack.c.b16 %v3150, %v3149
        %v3217 = vpack.c.b16 %v3152, %v3151
        %v3218 = vpack.c.b16 %v3154, %v3153
        %v3219 = vpack.c.b16 %v3156, %v3155
        %v3220 = vpack.c.b16 %v3158, %v3157
        %v3221 = vpack.c.b16 %v3160, %v3159
        %v3222 = vpack.c.b16 %v3162, %v3161
        %v3223 = vpack.c.b16 %v3164, %v3163
        %v3224 = vpack.c.b16 %v3166, %v3165
        %v3225 = vpack.c.b16 %v3168, %v3167
        %v3226 = vpack.c.b16 %v3170, %v3169
        %3283 = vmatprep.subr.bf16.mxu0 0
        %3284 = vmatpush1.bf16.msra.mxu0 %v3171
        %3285 = vmatprep.subr.bf16.mxu0 0
        %3286 = vmatpush1.bf16.msra.mxu0 %v3172
        %3287 = vmatprep.subr.bf16.mxu0 0
        %3288 = vmatpush1.bf16.msra.mxu0 %v3173
        %3289 = vmatprep.subr.bf16.mxu0 0
        %3290 = vmatpush1.bf16.msra.mxu0 %v3174
        %3291 = vmatprep.subr.bf16.mxu0 0
        %3292 = vmatpush1.bf16.msra.mxu0 %v3175
        %3293 = vmatprep.subr.bf16.mxu0 0
        %3294 = vmatpush1.bf16.msra.mxu0 %v3176
        %3295 = vmatprep.subr.bf16.mxu0 0
        %3296 = vmatpush1.bf16.msra.mxu0 %v3177
        %3297 = vmatprep.subr.bf16.mxu0 0
        %3298 = vmatpush1.bf16.msra.mxu0 %v3178
        %3299 = vmatprep.subr.bf16.mxu0 0
        %3300 = vmatpush1.bf16.msra.mxu0 %v3179
        %3301 = vmatprep.subr.bf16.mxu0 0
        %3302 = vmatpush1.bf16.msra.mxu0 %v3180
        %3303 = vmatprep.subr.bf16.mxu0 0
        %3304 = vmatpush1.bf16.msra.mxu0 %v3181
        %3305 = vmatprep.subr.bf16.mxu0 0
        %3306 = vmatpush1.bf16.msra.mxu0 %v3182
        %3307 = vmatprep.subr.bf16.mxu0 0
        %3308 = vmatpush1.bf16.msra.mxu0 %v3183
        %3309 = vmatprep.subr.bf16.mxu0 0
        %3310 = vmatpush1.bf16.msra.mxu0 %v3184
        %3311 = vmatprep.subr.bf16.mxu0 0
        %3312 = vmatpush1.bf16.msra.mxu0 %v3185
        %3313 = vmatprep.subr.bf16.mxu0 0
        %3314 = vmatpush1.bf16.msra.mxu0 %v3186
        %3315 = vmatprep.mubr.bf16.mxu0 %v2934
        %3316 = vmatmul.mubr.bf16.gmra.mrb[0].mxu0 %v2933
        %v3317 = vpop.f32.mrb[0].mxu0
        %v3318 = vadd.f32 0.0, %v3317
        %v3319 = vpop.f32.mrb[0].mxu0
        %v3320 = vpop.f32.mrb[0].mxu0
        %v3321 = vpop.f32.mrb[0].mxu0
        %3322 = vdwg.mxu0
        %3323 = vmatprep.subr.bf16.mxu0 0
        %3324 = vmatpush1.bf16.msra.mxu0 %v3187
        %3325 = vmatprep.subr.bf16.mxu0 0
        %3326 = vmatpush1.bf16.msra.mxu0 %v3188
        %3327 = vmatprep.subr.bf16.mxu0 0
        %3328 = vmatpush1.bf16.msra.mxu0 %v3189
        %3329 = vmatprep.subr.bf16.mxu0 0
        %3330 = vmatpush1.bf16.msra.mxu0 %v3190
        %3331 = vmatprep.subr.bf16.mxu0 0
        %3332 = vmatpush1.bf16.msra.mxu0 %v3191
        %3333 = vmatprep.subr.bf16.mxu0 0
        %3334 = vmatpush1.bf16.msra.mxu0 %v3192
        %3335 = vmatprep.subr.bf16.mxu0 0
        %3336 = vmatpush1.bf16.msra.mxu0 %v3193
        %3337 = vmatprep.subr.bf16.mxu0 0
        %3338 = vmatpush1.bf16.msra.mxu0 %v3194
        %3339 = vmatprep.subr.bf16.mxu0 0
        %3340 = vmatpush1.bf16.msra.mxu0 %v3195
        %3341 = vmatprep.subr.bf16.mxu0 0
        %3342 = vmatpush1.bf16.msra.mxu0 %v3196
        %3343 = vmatprep.subr.bf16.mxu0 0
        %3344 = vmatpush1.bf16.msra.mxu0 %v3197
        %3345 = vmatprep.subr.bf16.mxu0 0
        %3346 = vmatpush1.bf16.msra.mxu0 %v3198
        %3347 = vmatprep.subr.bf16.mxu0 0
        %3348 = vmatpush1.bf16.msra.mxu0 %v3199
        %3349 = vmatprep.subr.bf16.mxu0 0
        %3350 = vmatpush1.bf16.msra.mxu0 %v3200
        %3351 = vmatprep.subr.bf16.mxu0 0
        %3352 = vmatpush1.bf16.msra.mxu0 %v3201
        %3353 = vmatprep.subr.bf16.mxu0 0
        %3354 = vmatpush1.bf16.msra.mxu0 %v3202
        %3355 = vmatprep.mubr.bf16.mxu0 %v2936
        %3356 = vmatmul.mubr.bf16.gmra.mrb[0].mxu0 %v2935
        %v3357 = vpop.f32.mrb[0].mxu0
        %v3358 = vadd.f32 %v3318, %v3357
        %v3359 = vpop.f32.mrb[0].mxu0
        %v3360 = vpop.f32.mrb[0].mxu0
        %v3361 = vpop.f32.mrb[0].mxu0
        %3362 = vdwg.mxu0
        %3363 = vmatprep.subr.bf16.mxu0 0
        %3364 = vmatpush1.bf16.msra.mxu0 %v3203
        %3365 = vmatprep.subr.bf16.mxu0 0
        %3366 = vmatpush1.bf16.msra.mxu0 %v3204
        %3367 = vmatprep.subr.bf16.mxu0 0
        %3368 = vmatpush1.bf16.msra.mxu0 %v3205
        %3369 = vmatprep.subr.bf16.mxu0 0
        %3370 = vmatpush1.bf16.msra.mxu0 %v3206
        %3371 = vmatprep.subr.bf16.mxu0 0
        %3372 = vmatpush1.bf16.msra.mxu0 %v3207
        %3373 = vmatprep.subr.bf16.mxu0 0
        %3374 = vmatpush1.bf16.msra.mxu0 %v3208
        %3375 = vmatprep.subr.bf16.mxu0 0
        %3376 = vmatpush1.bf16.msra.mxu0 %v3209
        %3377 = vmatprep.subr.bf16.mxu0 0
        %3378 = vmatpush1.bf16.msra.mxu0 %v3210
        %3379 = vmatprep.subr.bf16.mxu0 0
        %3380 = vmatpush1.bf16.msra.mxu0 %v3211
        %3381 = vmatprep.subr.bf16.mxu0 0
        %3382 = vmatpush1.bf16.msra.mxu0 %v3212
        %3383 = vmatprep.subr.bf16.mxu0 0
        %3384 = vmatpush1.bf16.msra.mxu0 %v3213
        %3385 = vmatprep.subr.bf16.mxu0 0
        %3386 = vmatpush1.bf16.msra.mxu0 %v3214
        %3387 = vmatprep.subr.bf16.mxu0 0
        %3388 = vmatpush1.bf16.msra.mxu0 %v3215
        %3389 = vmatprep.subr.bf16.mxu0 0
        %3390 = vmatpush1.bf16.msra.mxu0 %v3216
        %3391 = vmatprep.subr.bf16.mxu0 0
        %3392 = vmatpush1.bf16.msra.mxu0 %v3217
        %3393 = vmatprep.subr.bf16.mxu0 0
        %3394 = vmatpush1.bf16.msra.mxu0 %v3218
        %3395 = vmatprep.mubr.bf16.mxu0 %v2938
        %3396 = vmatmul.mubr.bf16.gmra.mrb[0].mxu0 %v2937
        %v3397 = vpop.f32.mrb[0].mxu0
        %v3398 = vadd.f32 %v3358, %v3397
        %v3399 = vpop.f32.mrb[0].mxu0
        %v3400 = vpop.f32.mrb[0].mxu0
        %v3401 = vpop.f32.mrb[0].mxu0
        %3402 = vdwg.mxu0
        %3403 = vmatprep.subr.bf16.mxu0 0
        %3404 = vmatpush1.bf16.msra.mxu0 %v3219
        %3405 = vmatprep.subr.bf16.mxu0 0
        %3406 = vmatpush1.bf16.msra.mxu0 %v3220
        %3407 = vmatprep.subr.bf16.mxu0 0
        %3408 = vmatpush1.bf16.msra.mxu0 %v3221
        %3409 = vmatprep.subr.bf16.mxu0 0
        %3410 = vmatpush1.bf16.msra.mxu0 %v3222
        %3411 = vmatprep.subr.bf16.mxu0 0
        %3412 = vmatpush1.bf16.msra.mxu0 %v3223
        %3413 = vmatprep.subr.bf16.mxu0 0
        %3414 = vmatpush1.bf16.msra.mxu0 %v3224
        %3415 = vmatprep.subr.bf16.mxu0 0
        %3416 = vmatpush1.bf16.msra.mxu0 %v3225
        %3417 = vmatprep.subr.bf16.mxu0 0
        %3418 = vmatpush1.bf16.msra.mxu0 %v3226
        %3419 = vmatprep.subr.bf16.mxu0 0
        %3420 = vmatpush1.bf16.msra.mxu0 0
        %3421 = vmatprep.subr.bf16.mxu0 0
        %3422 = vmatpush1.bf16.msra.mxu0 0
        %3423 = vmatprep.subr.bf16.mxu0 0
        %3424 = vmatpush1.bf16.msra.mxu0 0
        %3425 = vmatprep.subr.bf16.mxu0 0
        %3426 = vmatpush1.bf16.msra.mxu0 0
        %3427 = vmatprep.subr.bf16.mxu0 0
        %3428 = vmatpush1.bf16.msra.mxu0 0
        %3429 = vmatprep.subr.bf16.mxu0 0
        %3430 = vmatpush1.bf16.msra.mxu0 0
        %3431 = vmatprep.subr.bf16.mxu0 0
        %3432 = vmatpush1.bf16.msra.mxu0 0
        %3433 = vmatprep.subr.bf16.mxu0 0
        %3434 = vmatpush1.bf16.msra.mxu0 0
        %3435 = vmatprep.mubr.bf16.mxu0 0
        %3436 = vmatmul.mubr.bf16.gmra.mrb[0].mxu0 %v2939
        %v3437 = vpop.f32.mrb[0].mxu0
        %v3438 = vadd.f32 %v3398, %v3437
        %v3439 = vpop.f32.mrb[0].mxu0
        %v3440 = vpop.f32.mrb[0].mxu0
        %v3441 = vpop.f32.mrb[0].mxu0
        %3442 = vdwg.mxu0
        %v3443 = vadd.f32 %v2797, %v3438
        %v3444 = vld [vmem:[%s229] sm:$0xcc]
        %v3445 = vld [vmem:[%s229 + $0x8] sm:$0xcc]
        %v3446 = vld [vmem:[%s229 + $0x10] sm:$0xcc]
        %v3447 = vld [vmem:[%s229 + $0x18] sm:$0xc]
        %s3448 = scalar_lea.vmem %s2, 2240
        %v3449 = vld [vmem:[%s3448] sm:$0xf]
        %v3450 = vld [vmem:[%s3448 + $0x4] sm:$0xf]
        %v3451 = vld [vmem:[%s3448 + $0x8] sm:$0xf]
        %v3452 = vld [vmem:[%s3448 + $0xc] sm:$0xf]
        %v3453 = vld [vmem:[%s3448 + $0x10] sm:$0xf]
        %v3454 = vld [vmem:[%s3448 + $0x14] sm:$0xf]
        %v3455 = vld [vmem:[%s3448 + $0x18] sm:$0xf]
        %v3456 = vld [vmem:[%s3448 + $0x1c] sm:$0xf]
        %v3457 = vld [vmem:[%s3448 + $0x20] sm:$0xf]
        %v3458 = vld [vmem:[%s3448 + $0x24] sm:$0xf]
        %v3459 = vld [vmem:[%s3448 + $0x28] sm:$0xf]
        %v3460 = vld [vmem:[%s3448 + $0x2c] sm:$0xf]
        %v3461 = vld [vmem:[%s3448 + $0x30] sm:$0xf]
        %v3462 = vld [vmem:[%s3448 + $0x34] sm:$0xf]
        %v3463 = vld [vmem:[%s3448 + $0x38] sm:$0xf]
        %v3464 = vld [vmem:[%s3448 + $0x3c] sm:$0xf]
        %v3465 = vld [vmem:[%s3448 + $0x40] sm:$0xf]
        %v3466 = vld [vmem:[%s3448 + $0x44] sm:$0xf]
        %v3467 = vld [vmem:[%s3448 + $0x48] sm:$0xf]
        %v3468 = vld [vmem:[%s3448 + $0x4c] sm:$0xf]
        %v3469 = vld [vmem:[%s3448 + $0x50] sm:$0xf]
        %v3470 = vld [vmem:[%s3448 + $0x54] sm:$0xf]
        %v3471 = vld [vmem:[%s3448 + $0x58] sm:$0xf]
        %v3472 = vld [vmem:[%s3448 + $0x5c] sm:$0xf]
        %v3473 = vld [vmem:[%s3448 + $0x60] sm:$0xf]
        %v3474 = vld [vmem:[%s3448 + $0x64] sm:$0xf]
        %v3475 = vld [vmem:[%s3448 + $0x68] sm:$0xf]
        %v3476 = vld [vmem:[%s3448 + $0x6c] sm:$0xf]
        %v3477 = vld [vmem:[%s3448 + $0x70] sm:$0xf]
        %v3478 = vld [vmem:[%s3448 + $0x74] sm:$0xf]
        %v3479 = vld [vmem:[%s3448 + $0x78] sm:$0xf]
        %v3480 = vld [vmem:[%s3448 + $0x7c] sm:$0xf]
        %v3481 = vld [vmem:[%s3448 + $0x80] sm:$0xf]
        %v3482 = vld [vmem:[%s3448 + $0x84] sm:$0xf]
        %v3483 = vld [vmem:[%s3448 + $0x88] sm:$0xf]
        %v3484 = vld [vmem:[%s3448 + $0x8c] sm:$0xf]
        %v3485 = vld [vmem:[%s3448 + $0x90] sm:$0xf]
        %v3486 = vld [vmem:[%s3448 + $0x94] sm:$0xf]
        %v3487 = vld [vmem:[%s3448 + $0x98] sm:$0xf]
        %v3488 = vld [vmem:[%s3448 + $0x9c] sm:$0xf]
        %v3489 = vld [vmem:[%s3448 + $0xa0] sm:$0xf]
        %v3490 = vld [vmem:[%s3448 + $0xa4] sm:$0xf]
        %v3491 = vld [vmem:[%s3448 + $0xa8] sm:$0xf]
        %v3492 = vld [vmem:[%s3448 + $0xac] sm:$0xf]
        %v3493 = vld [vmem:[%s3448 + $0xb0] sm:$0xf]
        %v3494 = vld [vmem:[%s3448 + $0xb4] sm:$0xf]
        %v3495 = vld [vmem:[%s3448 + $0xb8] sm:$0xf]
        %v3496 = vld [vmem:[%s3448 + $0xbc] sm:$0xf]
        %v3497 = vld [vmem:[%s3448 + $0xc0] sm:$0xf]
        %v3498 = vld [vmem:[%s3448 + $0xc4] sm:$0xf]
        %v3499 = vld [vmem:[%s3448 + $0xc8] sm:$0xf]
        %v3500 = vld [vmem:[%s3448 + $0xcc] sm:$0xf]
        %v3501 = vld [vmem:[%s3448 + $0xd0] sm:$0xf]
        %v3502 = vld [vmem:[%s3448 + $0xd4] sm:$0xf]
        %v3503 = vld [vmem:[%s3448 + $0xd8] sm:$0xf]
        %v3504 = vld [vmem:[%s3448 + $0xdc] sm:$0xf]
        %v3505 = vld [vmem:[%s3448 + $0xe0] sm:$0xf]
        %v3506 = vld [vmem:[%s3448 + $0xe4] sm:$0xf]
        %v3507 = vld [vmem:[%s3448 + $0xe8] sm:$0xf]
        %v3508 = vld [vmem:[%s3448 + $0xec] sm:$0xf]
        %v3509 = vld [vmem:[%s3448 + $0xf0] sm:$0xf]
        %v3510 = vld [vmem:[%s3448 + $0xf4] sm:$0xf]
        %v3511 = vld [vmem:[%s3448 + $0xf8] sm:$0xf]
        %v3512 = vld [vmem:[%s3448 + $0xfc] sm:$0xf]
        %v3513 = vld [vmem:[%s3448 + $0x100] sm:$0xf]
        %v3514 = vld [vmem:[%s3448 + $0x104] sm:$0xf]
        %v3515 = vld [vmem:[%s3448 + $0x108] sm:$0xf]
        %v3516 = vld [vmem:[%s3448 + $0x10c] sm:$0xf]
        %v3517 = vld [vmem:[%s3448 + $0x110] sm:$0xf]
        %v3518 = vld [vmem:[%s3448 + $0x114] sm:$0xf]
        %v3519 = vld [vmem:[%s3448 + $0x118] sm:$0xf]
        %v3520 = vld [vmem:[%s3448 + $0x11c] sm:$0xf]
        %v3521 = vld [vmem:[%s3448 + $0x120] sm:$0xf]
        %v3522 = vld [vmem:[%s3448 + $0x124] sm:$0xf]
        %v3523 = vld [vmem:[%s3448 + $0x128] sm:$0xf]
        %v3524 = vld [vmem:[%s3448 + $0x12c] sm:$0xf]
        %v3525 = vld [vmem:[%s3448 + $0x130] sm:$0xf]
        %v3526 = vld [vmem:[%s3448 + $0x134] sm:$0xf]
        %v3527 = vld [vmem:[%s3448 + $0x138] sm:$0xf]
        %v3528 = vld [vmem:[%s3448 + $0x13c] sm:$0xf]
        %v3529 = vld [vmem:[%s3448 + $0x140] sm:$0xf]
        %v3530 = vld [vmem:[%s3448 + $0x144] sm:$0xf]
        %v3531 = vld [vmem:[%s3448 + $0x148] sm:$0xf]
        %v3532 = vld [vmem:[%s3448 + $0x14c] sm:$0xf]
        %v3533 = vld [vmem:[%s3448 + $0x150] sm:$0xf]
        %v3534 = vld [vmem:[%s3448 + $0x154] sm:$0xf]
        %v3535 = vld [vmem:[%s3448 + $0x158] sm:$0xf]
        %v3536 = vld [vmem:[%s3448 + $0x15c] sm:$0xf]
        %v3537 = vld [vmem:[%s3448 + $0x160] sm:$0xf]
        %v3538 = vld [vmem:[%s3448 + $0x164] sm:$0xf]
        %v3539 = vld [vmem:[%s3448 + $0x168] sm:$0xf]
        %v3540 = vld [vmem:[%s3448 + $0x16c] sm:$0xf]
        %v3541 = vld [vmem:[%s3448 + $0x170] sm:$0xf]
        %v3542 = vld [vmem:[%s3448 + $0x174] sm:$0xf]
        %v3543 = vld [vmem:[%s3448 + $0x178] sm:$0xf]
        %v3544 = vld [vmem:[%s3448 + $0x17c] sm:$0xf]
        %v3545 = vld [vmem:[%s3448 + $0x180] sm:$0xf]
        %v3546 = vld [vmem:[%s3448 + $0x184] sm:$0xf]
        %v3547 = vld [vmem:[%s3448 + $0x188] sm:$0xf]
        %v3548 = vld [vmem:[%s3448 + $0x18c] sm:$0xf]
        %v3549 = vld [vmem:[%s3448 + $0x190] sm:$0xf]
        %v3550 = vld [vmem:[%s3448 + $0x194] sm:$0xf]
        %v3551 = vld [vmem:[%s3448 + $0x198] sm:$0xf]
        %v3552 = vld [vmem:[%s3448 + $0x19c] sm:$0xf]
        %v3553 = vld [vmem:[%s3448 + $0x1a0] sm:$0xf]
        %v3554 = vld [vmem:[%s3448 + $0x1a4] sm:$0xf]
        %v3555 = vld [vmem:[%s3448 + $0x1a8] sm:$0xf]
        %v3556 = vld [vmem:[%s3448 + $0x1ac] sm:$0xf]
        %v3557 = vld [vmem:[%s3448 + $0x1b0] sm:$0xf]
        %v3558 = vld [vmem:[%s3448 + $0x1b4] sm:$0xf]
        %v3559 = vld [vmem:[%s3448 + $0x1b8] sm:$0xf]
        %v3560 = vld [vmem:[%s3448 + $0x1bc] sm:$0xf]
        %v3565 = vunpack.c.l.b16 %v3444
        %v3566 = vunpack.c.h.b16 %v3444
        %v3567 = vunpack.c.l.b16 %v3445
        %v3568 = vunpack.c.h.b16 %v3445
        %v3569 = vunpack.c.l.b16 %v3446
        %v3570 = vunpack.c.h.b16 %v3446
        %v3571 = vunpack.c.l.b16 %v3447
        %v3572 = vpack.c.b16 %v3565, %v3565
        %v3573 = vpack.c.b16 %v3566, %v3566
        %v3574 = vpack.c.b16 %v3567, %v3567
        %v3575 = vpack.c.b16 %v3568, %v3568
        %v3576 = vpack.c.b16 %v3569, %v3569
        %v3577 = vpack.c.b16 %v3570, %v3570
        %v3578 = vpack.c.b16 %v3571, %v3571
        %v3579 = vrot.slane %v3572, 2
        %v3580 = vrot.slane %v3573, 2
        %v3581 = vrot.slane %v3574, 2
        %v3582 = vrot.slane %v3575, 2
        %v3583 = vrot.slane %v3576, 2
        %v3584 = vrot.slane %v3577, 2
        %v3585 = vrot.slane %v3578, 2
        %v3705 = vunpack.c.l.b16 %v3449
        %v3706 = vunpack.c.l.b16 %v3450
        %v3707 = vunpack.c.l.b16 %v3451
        %v3708 = vunpack.c.l.b16 %v3452
        %v3709 = vunpack.c.l.b16 %v3453
        %v3710 = vunpack.c.l.b16 %v3454
        %v3711 = vunpack.c.l.b16 %v3455
        %v3712 = vunpack.c.l.b16 %v3456
        %v3713 = vunpack.c.l.b16 %v3457
        %v3714 = vunpack.c.l.b16 %v3458
        %v3715 = vunpack.c.l.b16 %v3459
        %v3716 = vunpack.c.l.b16 %v3460
        %v3717 = vunpack.c.l.b16 %v3461
        %v3718 = vunpack.c.l.b16 %v3462
        %v3719 = vunpack.c.l.b16 %v3463
        %v3720 = vunpack.c.l.b16 %v3464
        %v3721 = vunpack.c.l.b16 %v3465
        %v3722 = vunpack.c.l.b16 %v3466
        %v3723 = vunpack.c.l.b16 %v3467
        %v3724 = vunpack.c.l.b16 %v3468
        %v3725 = vunpack.c.l.b16 %v3469
        %v3726 = vunpack.c.l.b16 %v3470
        %v3727 = vunpack.c.l.b16 %v3471
        %v3728 = vunpack.c.l.b16 %v3472
        %v3729 = vunpack.c.l.b16 %v3473
        %v3730 = vunpack.c.l.b16 %v3474
        %v3731 = vunpack.c.l.b16 %v3475
        %v3732 = vunpack.c.l.b16 %v3476
        %v3733 = vunpack.c.l.b16 %v3477
        %v3734 = vunpack.c.l.b16 %v3478
        %v3735 = vunpack.c.l.b16 %v3479
        %v3736 = vunpack.c.l.b16 %v3480
        %v3737 = vunpack.c.l.b16 %v3481
        %v3738 = vunpack.c.l.b16 %v3482
        %v3739 = vunpack.c.l.b16 %v3483
        %v3740 = vunpack.c.l.b16 %v3484
        %v3741 = vunpack.c.l.b16 %v3485
        %v3742 = vunpack.c.l.b16 %v3486
        %v3743 = vunpack.c.l.b16 %v3487
        %v3744 = vunpack.c.l.b16 %v3488
        %v3745 = vunpack.c.l.b16 %v3489
        %v3746 = vunpack.c.l.b16 %v3490
        %v3747 = vunpack.c.l.b16 %v3491
        %v3748 = vunpack.c.l.b16 %v3492
        %v3749 = vunpack.c.l.b16 %v3493
        %v3750 = vunpack.c.l.b16 %v3494
        %v3751 = vunpack.c.l.b16 %v3495
        %v3752 = vunpack.c.l.b16 %v3496
        %v3753 = vunpack.c.l.b16 %v3497
        %v3754 = vunpack.c.l.b16 %v3498
        %v3755 = vunpack.c.l.b16 %v3499
        %v3756 = vunpack.c.l.b16 %v3500
        %v3757 = vunpack.c.l.b16 %v3501
        %v3758 = vunpack.c.l.b16 %v3502
        %v3759 = vunpack.c.l.b16 %v3503
        %v3760 = vunpack.c.l.b16 %v3504
        %v3761 = vunpack.c.l.b16 %v3505
        %v3762 = vunpack.c.l.b16 %v3506
        %v3763 = vunpack.c.l.b16 %v3507
        %v3764 = vunpack.c.l.b16 %v3508
        %v3765 = vunpack.c.l.b16 %v3509
        %v3766 = vunpack.c.l.b16 %v3510
        %v3767 = vunpack.c.l.b16 %v3511
        %v3768 = vunpack.c.l.b16 %v3512
        %v3769 = vunpack.c.l.b16 %v3513
        %v3770 = vunpack.c.l.b16 %v3514
        %v3771 = vunpack.c.l.b16 %v3515
        %v3772 = vunpack.c.l.b16 %v3516
        %v3773 = vunpack.c.l.b16 %v3517
        %v3774 = vunpack.c.l.b16 %v3518
        %v3775 = vunpack.c.l.b16 %v3519
        %v3776 = vunpack.c.l.b16 %v3520
        %v3777 = vunpack.c.l.b16 %v3521
        %v3778 = vunpack.c.l.b16 %v3522
        %v3779 = vunpack.c.l.b16 %v3523
        %v3780 = vunpack.c.l.b16 %v3524
        %v3781 = vunpack.c.l.b16 %v3525
        %v3782 = vunpack.c.l.b16 %v3526
        %v3783 = vunpack.c.l.b16 %v3527
        %v3784 = vunpack.c.l.b16 %v3528
        %v3785 = vunpack.c.l.b16 %v3529
        %v3786 = vunpack.c.l.b16 %v3530
        %v3787 = vunpack.c.l.b16 %v3531
        %v3788 = vunpack.c.l.b16 %v3532
        %v3789 = vunpack.c.l.b16 %v3533
        %v3790 = vunpack.c.l.b16 %v3534
        %v3791 = vunpack.c.l.b16 %v3535
        %v3792 = vunpack.c.l.b16 %v3536
        %v3793 = vunpack.c.l.b16 %v3537
        %v3794 = vunpack.c.l.b16 %v3538
        %v3795 = vunpack.c.l.b16 %v3539
        %v3796 = vunpack.c.l.b16 %v3540
        %v3797 = vunpack.c.l.b16 %v3541
        %v3798 = vunpack.c.l.b16 %v3542
        %v3799 = vunpack.c.l.b16 %v3543
        %v3800 = vunpack.c.l.b16 %v3544
        %v3801 = vunpack.c.l.b16 %v3545
        %v3802 = vunpack.c.l.b16 %v3546
        %v3803 = vunpack.c.l.b16 %v3547
        %v3804 = vunpack.c.l.b16 %v3548
        %v3805 = vunpack.c.l.b16 %v3549
        %v3806 = vunpack.c.l.b16 %v3550
        %v3807 = vunpack.c.l.b16 %v3551
        %v3808 = vunpack.c.l.b16 %v3552
        %v3809 = vunpack.c.l.b16 %v3553
        %v3810 = vunpack.c.l.b16 %v3554
        %v3811 = vunpack.c.l.b16 %v3555
        %v3812 = vunpack.c.l.b16 %v3556
        %v3813 = vunpack.c.l.b16 %v3557
        %v3814 = vunpack.c.l.b16 %v3558
        %v3815 = vunpack.c.l.b16 %v3559
        %v3816 = vunpack.c.l.b16 %v3560
        %v3817 = vpack.c.b16 %v3706, %v3705
        %v3818 = vpack.c.b16 %v3708, %v3707
        %v3819 = vpack.c.b16 %v3710, %v3709
        %v3820 = vpack.c.b16 %v3712, %v3711
        %v3821 = vpack.c.b16 %v3714, %v3713
        %v3822 = vpack.c.b16 %v3716, %v3715
        %v3823 = vpack.c.b16 %v3718, %v3717
        %v3824 = vpack.c.b16 %v3720, %v3719
        %v3825 = vpack.c.b16 %v3722, %v3721
        %v3826 = vpack.c.b16 %v3724, %v3723
        %v3827 = vpack.c.b16 %v3726, %v3725
        %v3828 = vpack.c.b16 %v3728, %v3727
        %v3829 = vpack.c.b16 %v3730, %v3729
        %v3830 = vpack.c.b16 %v3732, %v3731
        %v3831 = vpack.c.b16 %v3734, %v3733
        %v3832 = vpack.c.b16 %v3736, %v3735
        %v3833 = vpack.c.b16 %v3738, %v3737
        %v3834 = vpack.c.b16 %v3740, %v3739
        %v3835 = vpack.c.b16 %v3742, %v3741
        %v3836 = vpack.c.b16 %v3744, %v3743
        %v3837 = vpack.c.b16 %v3746, %v3745
        %v3838 = vpack.c.b16 %v3748, %v3747
        %v3839 = vpack.c.b16 %v3750, %v3749
        %v3840 = vpack.c.b16 %v3752, %v3751
        %v3841 = vpack.c.b16 %v3754, %v3753
        %v3842 = vpack.c.b16 %v3756, %v3755
        %v3843 = vpack.c.b16 %v3758, %v3757
        %v3844 = vpack.c.b16 %v3760, %v3759
        %v3845 = vpack.c.b16 %v3762, %v3761
        %v3846 = vpack.c.b16 %v3764, %v3763
        %v3847 = vpack.c.b16 %v3766, %v3765
        %v3848 = vpack.c.b16 %v3768, %v3767
        %v3849 = vpack.c.b16 %v3770, %v3769
        %v3850 = vpack.c.b16 %v3772, %v3771
        %v3851 = vpack.c.b16 %v3774, %v3773
        %v3852 = vpack.c.b16 %v3776, %v3775
        %v3853 = vpack.c.b16 %v3778, %v3777
        %v3854 = vpack.c.b16 %v3780, %v3779
        %v3855 = vpack.c.b16 %v3782, %v3781
        %v3856 = vpack.c.b16 %v3784, %v3783
        %v3857 = vpack.c.b16 %v3786, %v3785
        %v3858 = vpack.c.b16 %v3788, %v3787
        %v3859 = vpack.c.b16 %v3790, %v3789
        %v3860 = vpack.c.b16 %v3792, %v3791
        %v3861 = vpack.c.b16 %v3794, %v3793
        %v3862 = vpack.c.b16 %v3796, %v3795
        %v3863 = vpack.c.b16 %v3798, %v3797
        %v3864 = vpack.c.b16 %v3800, %v3799
        %v3865 = vpack.c.b16 %v3802, %v3801
        %v3866 = vpack.c.b16 %v3804, %v3803
        %v3867 = vpack.c.b16 %v3806, %v3805
        %v3868 = vpack.c.b16 %v3808, %v3807
        %v3869 = vpack.c.b16 %v3810, %v3809
        %v3870 = vpack.c.b16 %v3812, %v3811
        %v3871 = vpack.c.b16 %v3814, %v3813
        %v3872 = vpack.c.b16 %v3816, %v3815
        %3929 = vmatprep.subr.bf16.mxu0 0
        %3930 = vmatpush1.bf16.msra.mxu0 %v3817
        %3931 = vmatprep.subr.bf16.mxu0 0
        %3932 = vmatpush1.bf16.msra.mxu0 %v3818
        %3933 = vmatprep.subr.bf16.mxu0 0
        %3934 = vmatpush1.bf16.msra.mxu0 %v3819
        %3935 = vmatprep.subr.bf16.mxu0 0
        %3936 = vmatpush1.bf16.msra.mxu0 %v3820
        %3937 = vmatprep.subr.bf16.mxu0 0
        %3938 = vmatpush1.bf16.msra.mxu0 %v3821
        %3939 = vmatprep.subr.bf16.mxu0 0
        %3940 = vmatpush1.bf16.msra.mxu0 %v3822
        %3941 = vmatprep.subr.bf16.mxu0 0
        %3942 = vmatpush1.bf16.msra.mxu0 %v3823
        %3943 = vmatprep.subr.bf16.mxu0 0
        %3944 = vmatpush1.bf16.msra.mxu0 %v3824
        %3945 = vmatprep.subr.bf16.mxu0 0
        %3946 = vmatpush1.bf16.msra.mxu0 %v3825
        %3947 = vmatprep.subr.bf16.mxu0 0
        %3948 = vmatpush1.bf16.msra.mxu0 %v3826
        %3949 = vmatprep.subr.bf16.mxu0 0
        %3950 = vmatpush1.bf16.msra.mxu0 %v3827
        %3951 = vmatprep.subr.bf16.mxu0 0
        %3952 = vmatpush1.bf16.msra.mxu0 %v3828
        %3953 = vmatprep.subr.bf16.mxu0 0
        %3954 = vmatpush1.bf16.msra.mxu0 %v3829
        %3955 = vmatprep.subr.bf16.mxu0 0
        %3956 = vmatpush1.bf16.msra.mxu0 %v3830
        %3957 = vmatprep.subr.bf16.mxu0 0
        %3958 = vmatpush1.bf16.msra.mxu0 %v3831
        %3959 = vmatprep.subr.bf16.mxu0 0
        %3960 = vmatpush1.bf16.msra.mxu0 %v3832
        %3961 = vmatprep.mubr.bf16.mxu0 %v3580
        %3962 = vmatmul.mubr.bf16.gmra.mrb[0].mxu0 %v3579
        %v3963 = vpop.f32.mrb[0].mxu0
        %v3964 = vadd.f32 0.0, %v3963
        %v3965 = vpop.f32.mrb[0].mxu0
        %v3966 = vpop.f32.mrb[0].mxu0
        %v3967 = vpop.f32.mrb[0].mxu0
        %3968 = vdwg.mxu0
        %3969 = vmatprep.subr.bf16.mxu0 0
        %3970 = vmatpush1.bf16.msra.mxu0 %v3833
        %3971 = vmatprep.subr.bf16.mxu0 0
        %3972 = vmatpush1.bf16.msra.mxu0 %v3834
        %3973 = vmatprep.subr.bf16.mxu0 0
        %3974 = vmatpush1.bf16.msra.mxu0 %v3835
        %3975 = vmatprep.subr.bf16.mxu0 0
        %3976 = vmatpush1.bf16.msra.mxu0 %v3836
        %3977 = vmatprep.subr.bf16.mxu0 0
        %3978 = vmatpush1.bf16.msra.mxu0 %v3837
        %3979 = vmatprep.subr.bf16.mxu0 0
        %3980 = vmatpush1.bf16.msra.mxu0 %v3838
        %3981 = vmatprep.subr.bf16.mxu0 0
        %3982 = vmatpush1.bf16.msra.mxu0 %v3839
        %3983 = vmatprep.subr.bf16.mxu0 0
        %3984 = vmatpush1.bf16.msra.mxu0 %v3840
        %3985 = vmatprep.subr.bf16.mxu0 0
        %3986 = vmatpush1.bf16.msra.mxu0 %v3841
        %3987 = vmatprep.subr.bf16.mxu0 0
        %3988 = vmatpush1.bf16.msra.mxu0 %v3842
        %3989 = vmatprep.subr.bf16.mxu0 0
        %3990 = vmatpush1.bf16.msra.mxu0 %v3843
        %3991 = vmatprep.subr.bf16.mxu0 0
        %3992 = vmatpush1.bf16.msra.mxu0 %v3844
        %3993 = vmatprep.subr.bf16.mxu0 0
        %3994 = vmatpush1.bf16.msra.mxu0 %v3845
        %3995 = vmatprep.subr.bf16.mxu0 0
        %3996 = vmatpush1.bf16.msra.mxu0 %v3846
        %3997 = vmatprep.subr.bf16.mxu0 0
        %3998 = vmatpush1.bf16.msra.mxu0 %v3847
        %3999 = vmatprep.subr.bf16.mxu0 0
        %4000 = vmatpush1.bf16.msra.mxu0 %v3848
        %4001 = vmatprep.mubr.bf16.mxu0 %v3582
        %4002 = vmatmul.mubr.bf16.gmra.mrb[0].mxu0 %v3581
        %v4003 = vpop.f32.mrb[0].mxu0
        %v4004 = vadd.f32 %v3964, %v4003
        %v4005 = vpop.f32.mrb[0].mxu0
        %v4006 = vpop.f32.mrb[0].mxu0
        %v4007 = vpop.f32.mrb[0].mxu0
        %4008 = vdwg.mxu0
        %4009 = vmatprep.subr.bf16.mxu0 0
        %4010 = vmatpush1.bf16.msra.mxu0 %v3849
        %4011 = vmatprep.subr.bf16.mxu0 0
        %4012 = vmatpush1.bf16.msra.mxu0 %v3850
        %4013 = vmatprep.subr.bf16.mxu0 0
        %4014 = vmatpush1.bf16.msra.mxu0 %v3851
        %4015 = vmatprep.subr.bf16.mxu0 0
        %4016 = vmatpush1.bf16.msra.mxu0 %v3852
        %4017 = vmatprep.subr.bf16.mxu0 0
        %4018 = vmatpush1.bf16.msra.mxu0 %v3853
        %4019 = vmatprep.subr.bf16.mxu0 0
        %4020 = vmatpush1.bf16.msra.mxu0 %v3854
        %4021 = vmatprep.subr.bf16.mxu0 0
        %4022 = vmatpush1.bf16.msra.mxu0 %v3855
        %4023 = vmatprep.subr.bf16.mxu0 0
        %4024 = vmatpush1.bf16.msra.mxu0 %v3856
        %4025 = vmatprep.subr.bf16.mxu0 0
        %4026 = vmatpush1.bf16.msra.mxu0 %v3857
        %4027 = vmatprep.subr.bf16.mxu0 0
        %4028 = vmatpush1.bf16.msra.mxu0 %v3858
        %4029 = vmatprep.subr.bf16.mxu0 0
        %4030 = vmatpush1.bf16.msra.mxu0 %v3859
        %4031 = vmatprep.subr.bf16.mxu0 0
        %4032 = vmatpush1.bf16.msra.mxu0 %v3860
        %4033 = vmatprep.subr.bf16.mxu0 0
        %4034 = vmatpush1.bf16.msra.mxu0 %v3861
        %4035 = vmatprep.subr.bf16.mxu0 0
        %4036 = vmatpush1.bf16.msra.mxu0 %v3862
        %4037 = vmatprep.subr.bf16.mxu0 0
        %4038 = vmatpush1.bf16.msra.mxu0 %v3863
        %4039 = vmatprep.subr.bf16.mxu0 0
        %4040 = vmatpush1.bf16.msra.mxu0 %v3864
        %4041 = vmatprep.mubr.bf16.mxu0 %v3584
        %4042 = vmatmul.mubr.bf16.gmra.mrb[0].mxu0 %v3583
        %v4043 = vpop.f32.mrb[0].mxu0
        %v4044 = vadd.f32 %v4004, %v4043
        %v4045 = vpop.f32.mrb[0].mxu0
        %v4046 = vpop.f32.mrb[0].mxu0
        %v4047 = vpop.f32.mrb[0].mxu0
        %4048 = vdwg.mxu0
        %4049 = vmatprep.subr.bf16.mxu0 0
        %4050 = vmatpush1.bf16.msra.mxu0 %v3865
        %4051 = vmatprep.subr.bf16.mxu0 0
        %4052 = vmatpush1.bf16.msra.mxu0 %v3866
        %4053 = vmatprep.subr.bf16.mxu0 0
        %4054 = vmatpush1.bf16.msra.mxu0 %v3867
        %4055 = vmatprep.subr.bf16.mxu0 0
        %4056 = vmatpush1.bf16.msra.mxu0 %v3868
        %4057 = vmatprep.subr.bf16.mxu0 0
        %4058 = vmatpush1.bf16.msra.mxu0 %v3869
        %4059 = vmatprep.subr.bf16.mxu0 0
        %4060 = vmatpush1.bf16.msra.mxu0 %v3870
        %4061 = vmatprep.subr.bf16.mxu0 0
        %4062 = vmatpush1.bf16.msra.mxu0 %v3871
        %4063 = vmatprep.subr.bf16.mxu0 0
        %4064 = vmatpush1.bf16.msra.mxu0 %v3872
        %4065 = vmatprep.subr.bf16.mxu0 0
        %4066 = vmatpush1.bf16.msra.mxu0 0
        %4067 = vmatprep.subr.bf16.mxu0 0
        %4068 = vmatpush1.bf16.msra.mxu0 0
        %4069 = vmatprep.subr.bf16.mxu0 0
        %4070 = vmatpush1.bf16.msra.mxu0 0
        %4071 = vmatprep.subr.bf16.mxu0 0
        %4072 = vmatpush1.bf16.msra.mxu0 0
        %4073 = vmatprep.subr.bf16.mxu0 0
        %4074 = vmatpush1.bf16.msra.mxu0 0
        %4075 = vmatprep.subr.bf16.mxu0 0
        %4076 = vmatpush1.bf16.msra.mxu0 0
        %4077 = vmatprep.subr.bf16.mxu0 0
        %4078 = vmatpush1.bf16.msra.mxu0 0
        %4079 = vmatprep.subr.bf16.mxu0 0
        %4080 = vmatpush1.bf16.msra.mxu0 0
        %4081 = vmatprep.mubr.bf16.mxu0 0
        %4082 = vmatmul.mubr.bf16.gmra.mrb[0].mxu0 %v3585
        %v4083 = vpop.f32.mrb[0].mxu0
        %v4084 = vadd.f32 %v4044, %v4083
        %v4085 = vpop.f32.mrb[0].mxu0
        %v4086 = vpop.f32.mrb[0].mxu0
        %v4087 = vpop.f32.mrb[0].mxu0
        %4088 = vdwg.mxu0
        %v4089 = vadd.f32 %v3443, %v4084
        %v4090 = vld [vmem:[%s224] sm:$0x88]
        %v4091 = vld [vmem:[%s224 + $0x8] sm:$0x88]
        %v4092 = vld [vmem:[%s224 + $0x10] sm:$0x88]
        %v4093 = vld [vmem:[%s224 + $0x18] sm:$0x8]
        %v4094 = vld [vmem:[%s224 + $0x1c] sm:$0x11]
        %v4095 = vld [vmem:[%s224 + $0x24] sm:$0x11]
        %v4096 = vld [vmem:[%s224 + $0x2c] sm:$0x11]
        %v4097 = vld [vmem:[%s224 + $0x34] sm:$0x1]
        %s4098 = scalar_lea.vmem %s2, 2688
        %v4099 = vld [vmem:[%s4098] sm:$0xf]
        %v4100 = vld [vmem:[%s4098 + $0x4] sm:$0xf]
        %v4101 = vld [vmem:[%s4098 + $0x8] sm:$0xf]
        %v4102 = vld [vmem:[%s4098 + $0xc] sm:$0xf]
        %v4103 = vld [vmem:[%s4098 + $0x10] sm:$0xf]
        %v4104 = vld [vmem:[%s4098 + $0x14] sm:$0xf]
        %v4105 = vld [vmem:[%s4098 + $0x18] sm:$0xf]
        %v4106 = vld [vmem:[%s4098 + $0x1c] sm:$0xf]
        %v4107 = vld [vmem:[%s4098 + $0x20] sm:$0xf]
        %v4108 = vld [vmem:[%s4098 + $0x24] sm:$0xf]
        %v4109 = vld [vmem:[%s4098 + $0x28] sm:$0xf]
        %v4110 = vld [vmem:[%s4098 + $0x2c] sm:$0xf]
        %v4111 = vld [vmem:[%s4098 + $0x30] sm:$0xf]
        %v4112 = vld [vmem:[%s4098 + $0x34] sm:$0xf]
        %v4113 = vld [vmem:[%s4098 + $0x38] sm:$0xf]
        %v4114 = vld [vmem:[%s4098 + $0x3c] sm:$0xf]
        %v4115 = vld [vmem:[%s4098 + $0x40] sm:$0xf]
        %v4116 = vld [vmem:[%s4098 + $0x44] sm:$0xf]
        %v4117 = vld [vmem:[%s4098 + $0x48] sm:$0xf]
        %v4118 = vld [vmem:[%s4098 + $0x4c] sm:$0xf]
        %v4119 = vld [vmem:[%s4098 + $0x50] sm:$0xf]
        %v4120 = vld [vmem:[%s4098 + $0x54] sm:$0xf]
        %v4121 = vld [vmem:[%s4098 + $0x58] sm:$0xf]
        %v4122 = vld [vmem:[%s4098 + $0x5c] sm:$0xf]
        %v4123 = vld [vmem:[%s4098 + $0x60] sm:$0xf]
        %v4124 = vld [vmem:[%s4098 + $0x64] sm:$0xf]
        %v4125 = vld [vmem:[%s4098 + $0x68] sm:$0xf]
        %v4126 = vld [vmem:[%s4098 + $0x6c] sm:$0xf]
        %v4127 = vld [vmem:[%s4098 + $0x70] sm:$0xf]
        %v4128 = vld [vmem:[%s4098 + $0x74] sm:$0xf]
        %v4129 = vld [vmem:[%s4098 + $0x78] sm:$0xf]
        %v4130 = vld [vmem:[%s4098 + $0x7c] sm:$0xf]
        %v4131 = vld [vmem:[%s4098 + $0x80] sm:$0xf]
        %v4132 = vld [vmem:[%s4098 + $0x84] sm:$0xf]
        %v4133 = vld [vmem:[%s4098 + $0x88] sm:$0xf]
        %v4134 = vld [vmem:[%s4098 + $0x8c] sm:$0xf]
        %v4135 = vld [vmem:[%s4098 + $0x90] sm:$0xf]
        %v4136 = vld [vmem:[%s4098 + $0x94] sm:$0xf]
        %v4137 = vld [vmem:[%s4098 + $0x98] sm:$0xf]
        %v4138 = vld [vmem:[%s4098 + $0x9c] sm:$0xf]
        %v4139 = vld [vmem:[%s4098 + $0xa0] sm:$0xf]
        %v4140 = vld [vmem:[%s4098 + $0xa4] sm:$0xf]
        %v4141 = vld [vmem:[%s4098 + $0xa8] sm:$0xf]
        %v4142 = vld [vmem:[%s4098 + $0xac] sm:$0xf]
        %v4143 = vld [vmem:[%s4098 + $0xb0] sm:$0xf]
        %v4144 = vld [vmem:[%s4098 + $0xb4] sm:$0xf]
        %v4145 = vld [vmem:[%s4098 + $0xb8] sm:$0xf]
        %v4146 = vld [vmem:[%s4098 + $0xbc] sm:$0xf]
        %v4147 = vld [vmem:[%s4098 + $0xc0] sm:$0xf]
        %v4148 = vld [vmem:[%s4098 + $0xc4] sm:$0xf]
        %v4149 = vld [vmem:[%s4098 + $0xc8] sm:$0xf]
        %v4150 = vld [vmem:[%s4098 + $0xcc] sm:$0xf]
        %v4151 = vld [vmem:[%s4098 + $0xd0] sm:$0xf]
        %v4152 = vld [vmem:[%s4098 + $0xd4] sm:$0xf]
        %v4153 = vld [vmem:[%s4098 + $0xd8] sm:$0xf]
        %v4154 = vld [vmem:[%s4098 + $0xdc] sm:$0xf]
        %v4155 = vld [vmem:[%s4098 + $0xe0] sm:$0xf]
        %v4156 = vld [vmem:[%s4098 + $0xe4] sm:$0xf]
        %v4157 = vld [vmem:[%s4098 + $0xe8] sm:$0xf]
        %v4158 = vld [vmem:[%s4098 + $0xec] sm:$0xf]
        %v4159 = vld [vmem:[%s4098 + $0xf0] sm:$0xf]
        %v4160 = vld [vmem:[%s4098 + $0xf4] sm:$0xf]
        %v4161 = vld [vmem:[%s4098 + $0xf8] sm:$0xf]
        %v4162 = vld [vmem:[%s4098 + $0xfc] sm:$0xf]
        %v4163 = vld [vmem:[%s4098 + $0x100] sm:$0xf]
        %v4164 = vld [vmem:[%s4098 + $0x104] sm:$0xf]
        %v4165 = vld [vmem:[%s4098 + $0x108] sm:$0xf]
        %v4166 = vld [vmem:[%s4098 + $0x10c] sm:$0xf]
        %v4167 = vld [vmem:[%s4098 + $0x110] sm:$0xf]
        %v4168 = vld [vmem:[%s4098 + $0x114] sm:$0xf]
        %v4169 = vld [vmem:[%s4098 + $0x118] sm:$0xf]
        %v4170 = vld [vmem:[%s4098 + $0x11c] sm:$0xf]
        %v4171 = vld [vmem:[%s4098 + $0x120] sm:$0xf]
        %v4172 = vld [vmem:[%s4098 + $0x124] sm:$0xf]
        %v4173 = vld [vmem:[%s4098 + $0x128] sm:$0xf]
        %v4174 = vld [vmem:[%s4098 + $0x12c] sm:$0xf]
        %v4175 = vld [vmem:[%s4098 + $0x130] sm:$0xf]
        %v4176 = vld [vmem:[%s4098 + $0x134] sm:$0xf]
        %v4177 = vld [vmem:[%s4098 + $0x138] sm:$0xf]
        %v4178 = vld [vmem:[%s4098 + $0x13c] sm:$0xf]
        %v4179 = vld [vmem:[%s4098 + $0x140] sm:$0xf]
        %v4180 = vld [vmem:[%s4098 + $0x144] sm:$0xf]
        %v4181 = vld [vmem:[%s4098 + $0x148] sm:$0xf]
        %v4182 = vld [vmem:[%s4098 + $0x14c] sm:$0xf]
        %v4183 = vld [vmem:[%s4098 + $0x150] sm:$0xf]
        %v4184 = vld [vmem:[%s4098 + $0x154] sm:$0xf]
        %v4185 = vld [vmem:[%s4098 + $0x158] sm:$0xf]
        %v4186 = vld [vmem:[%s4098 + $0x15c] sm:$0xf]
        %v4187 = vld [vmem:[%s4098 + $0x160] sm:$0xf]
        %v4188 = vld [vmem:[%s4098 + $0x164] sm:$0xf]
        %v4189 = vld [vmem:[%s4098 + $0x168] sm:$0xf]
        %v4190 = vld [vmem:[%s4098 + $0x16c] sm:$0xf]
        %v4191 = vld [vmem:[%s4098 + $0x170] sm:$0xf]
        %v4192 = vld [vmem:[%s4098 + $0x174] sm:$0xf]
        %v4193 = vld [vmem:[%s4098 + $0x178] sm:$0xf]
        %v4194 = vld [vmem:[%s4098 + $0x17c] sm:$0xf]
        %v4195 = vld [vmem:[%s4098 + $0x180] sm:$0xf]
        %v4196 = vld [vmem:[%s4098 + $0x184] sm:$0xf]
        %v4197 = vld [vmem:[%s4098 + $0x188] sm:$0xf]
        %v4198 = vld [vmem:[%s4098 + $0x18c] sm:$0xf]
        %v4199 = vld [vmem:[%s4098 + $0x190] sm:$0xf]
        %v4200 = vld [vmem:[%s4098 + $0x194] sm:$0xf]
        %v4201 = vld [vmem:[%s4098 + $0x198] sm:$0xf]
        %v4202 = vld [vmem:[%s4098 + $0x19c] sm:$0xf]
        %v4203 = vld [vmem:[%s4098 + $0x1a0] sm:$0xf]
        %v4204 = vld [vmem:[%s4098 + $0x1a4] sm:$0xf]
        %v4205 = vld [vmem:[%s4098 + $0x1a8] sm:$0xf]
        %v4206 = vld [vmem:[%s4098 + $0x1ac] sm:$0xf]
        %v4207 = vld [vmem:[%s4098 + $0x1b0] sm:$0xf]
        %v4208 = vld [vmem:[%s4098 + $0x1b4] sm:$0xf]
        %v4209 = vld [vmem:[%s4098 + $0x1b8] sm:$0xf]
        %v4210 = vld [vmem:[%s4098 + $0x1bc] sm:$0xf]
        %v4219 = vunpack.c.l.b16 %v4090
        %v4220 = vunpack.c.h.b16 %v4090
        %v4221 = vunpack.c.l.b16 %v4091
        %v4222 = vunpack.c.h.b16 %v4091
        %v4223 = vunpack.c.l.b16 %v4092
        %v4224 = vunpack.c.h.b16 %v4092
        %v4225 = vunpack.c.l.b16 %v4093
        %v4226 = vunpack.c.l.b16 %v4094
        %v4227 = vunpack.c.h.b16 %v4094
        %v4228 = vunpack.c.l.b16 %v4095
        %v4229 = vunpack.c.h.b16 %v4095
        %v4230 = vunpack.c.l.b16 %v4096
        %v4231 = vunpack.c.h.b16 %v4096
        %v4232 = vunpack.c.l.b16 %v4097
        %v4233 = vpack.c.b16 %v4226, %v4219
        %v4234 = vpack.c.b16 %v4227, %v4220
        %v4235 = vpack.c.b16 %v4228, %v4221
        %v4236 = vpack.c.b16 %v4229, %v4222
        %v4237 = vpack.c.b16 %v4230, %v4223
        %v4238 = vpack.c.b16 %v4231, %v4224
        %v4239 = vpack.c.b16 %v4232, %v4225
        %v4240 = vrot.slane %v4233, 3
        %v4241 = vrot.slane %v4234, 3
        %v4242 = vrot.slane %v4235, 3
        %v4243 = vrot.slane %v4236, 3
        %v4244 = vrot.slane %v4237, 3
        %v4245 = vrot.slane %v4238, 3
        %v4246 = vrot.slane %v4239, 3
        %v4366 = vunpack.c.l.b16 %v4099
        %v4367 = vunpack.c.l.b16 %v4100
        %v4368 = vunpack.c.l.b16 %v4101
        %v4369 = vunpack.c.l.b16 %v4102
        %v4370 = vunpack.c.l.b16 %v4103
        %v4371 = vunpack.c.l.b16 %v4104
        %v4372 = vunpack.c.l.b16 %v4105
        %v4373 = vunpack.c.l.b16 %v4106
        %v4374 = vunpack.c.l.b16 %v4107
        %v4375 = vunpack.c.l.b16 %v4108
        %v4376 = vunpack.c.l.b16 %v4109
        %v4377 = vunpack.c.l.b16 %v4110
        %v4378 = vunpack.c.l.b16 %v4111
        %v4379 = vunpack.c.l.b16 %v4112
        %v4380 = vunpack.c.l.b16 %v4113
        %v4381 = vunpack.c.l.b16 %v4114
        %v4382 = vunpack.c.l.b16 %v4115
        %v4383 = vunpack.c.l.b16 %v4116
        %v4384 = vunpack.c.l.b16 %v4117
        %v4385 = vunpack.c.l.b16 %v4118
        %v4386 = vunpack.c.l.b16 %v4119
        %v4387 = vunpack.c.l.b16 %v4120
        %v4388 = vunpack.c.l.b16 %v4121
        %v4389 = vunpack.c.l.b16 %v4122
        %v4390 = vunpack.c.l.b16 %v4123
        %v4391 = vunpack.c.l.b16 %v4124
        %v4392 = vunpack.c.l.b16 %v4125
        %v4393 = vunpack.c.l.b16 %v4126
        %v4394 = vunpack.c.l.b16 %v4127
        %v4395 = vunpack.c.l.b16 %v4128
        %v4396 = vunpack.c.l.b16 %v4129
        %v4397 = vunpack.c.l.b16 %v4130
        %v4398 = vunpack.c.l.b16 %v4131
        %v4399 = vunpack.c.l.b16 %v4132
        %v4400 = vunpack.c.l.b16 %v4133
        %v4401 = vunpack.c.l.b16 %v4134
        %v4402 = vunpack.c.l.b16 %v4135
        %v4403 = vunpack.c.l.b16 %v4136
        %v4404 = vunpack.c.l.b16 %v4137
        %v4405 = vunpack.c.l.b16 %v4138
        %v4406 = vunpack.c.l.b16 %v4139
        %v4407 = vunpack.c.l.b16 %v4140
        %v4408 = vunpack.c.l.b16 %v4141
        %v4409 = vunpack.c.l.b16 %v4142
        %v4410 = vunpack.c.l.b16 %v4143
        %v4411 = vunpack.c.l.b16 %v4144
        %v4412 = vunpack.c.l.b16 %v4145
        %v4413 = vunpack.c.l.b16 %v4146
        %v4414 = vunpack.c.l.b16 %v4147
        %v4415 = vunpack.c.l.b16 %v4148
        %v4416 = vunpack.c.l.b16 %v4149
        %v4417 = vunpack.c.l.b16 %v4150
        %v4418 = vunpack.c.l.b16 %v4151
        %v4419 = vunpack.c.l.b16 %v4152
        %v4420 = vunpack.c.l.b16 %v4153
        %v4421 = vunpack.c.l.b16 %v4154
        %v4422 = vunpack.c.l.b16 %v4155
        %v4423 = vunpack.c.l.b16 %v4156
        %v4424 = vunpack.c.l.b16 %v4157
        %v4425 = vunpack.c.l.b16 %v4158
        %v4426 = vunpack.c.l.b16 %v4159
        %v4427 = vunpack.c.l.b16 %v4160
        %v4428 = vunpack.c.l.b16 %v4161
        %v4429 = vunpack.c.l.b16 %v4162
        %v4430 = vunpack.c.l.b16 %v4163
        %v4431 = vunpack.c.l.b16 %v4164
        %v4432 = vunpack.c.l.b16 %v4165
        %v4433 = vunpack.c.l.b16 %v4166
        %v4434 = vunpack.c.l.b16 %v4167
        %v4435 = vunpack.c.l.b16 %v4168
        %v4436 = vunpack.c.l.b16 %v4169
        %v4437 = vunpack.c.l.b16 %v4170
        %v4438 = vunpack.c.l.b16 %v4171
        %v4439 = vunpack.c.l.b16 %v4172
        %v4440 = vunpack.c.l.b16 %v4173
        %v4441 = vunpack.c.l.b16 %v4174
        %v4442 = vunpack.c.l.b16 %v4175
        %v4443 = vunpack.c.l.b16 %v4176
        %v4444 = vunpack.c.l.b16 %v4177
        %v4445 = vunpack.c.l.b16 %v4178
        %v4446 = vunpack.c.l.b16 %v4179
        %v4447 = vunpack.c.l.b16 %v4180
        %v4448 = vunpack.c.l.b16 %v4181
        %v4449 = vunpack.c.l.b16 %v4182
        %v4450 = vunpack.c.l.b16 %v4183
        %v4451 = vunpack.c.l.b16 %v4184
        %v4452 = vunpack.c.l.b16 %v4185
        %v4453 = vunpack.c.l.b16 %v4186
        %v4454 = vunpack.c.l.b16 %v4187
        %v4455 = vunpack.c.l.b16 %v4188
        %v4456 = vunpack.c.l.b16 %v4189
        %v4457 = vunpack.c.l.b16 %v4190
        %v4458 = vunpack.c.l.b16 %v4191
        %v4459 = vunpack.c.l.b16 %v4192
        %v4460 = vunpack.c.l.b16 %v4193
        %v4461 = vunpack.c.l.b16 %v4194
        %v4462 = vunpack.c.l.b16 %v4195
        %v4463 = vunpack.c.l.b16 %v4196
        %v4464 = vunpack.c.l.b16 %v4197
        %v4465 = vunpack.c.l.b16 %v4198
        %v4466 = vunpack.c.l.b16 %v4199
        %v4467 = vunpack.c.l.b16 %v4200
        %v4468 = vunpack.c.l.b16 %v4201
        %v4469 = vunpack.c.l.b16 %v4202
        %v4470 = vunpack.c.l.b16 %v4203
        %v4471 = vunpack.c.l.b16 %v4204
        %v4472 = vunpack.c.l.b16 %v4205
        %v4473 = vunpack.c.l.b16 %v4206
        %v4474 = vunpack.c.l.b16 %v4207
        %v4475 = vunpack.c.l.b16 %v4208
        %v4476 = vunpack.c.l.b16 %v4209
        %v4477 = vunpack.c.l.b16 %v4210
        %v4478 = vpack.c.b16 %v4367, %v4366
        %v4479 = vpack.c.b16 %v4369, %v4368
        %v4480 = vpack.c.b16 %v4371, %v4370
        %v4481 = vpack.c.b16 %v4373, %v4372
        %v4482 = vpack.c.b16 %v4375, %v4374
        %v4483 = vpack.c.b16 %v4377, %v4376
        %v4484 = vpack.c.b16 %v4379, %v4378
        %v4485 = vpack.c.b16 %v4381, %v4380
        %v4486 = vpack.c.b16 %v4383, %v4382
        %v4487 = vpack.c.b16 %v4385, %v4384
        %v4488 = vpack.c.b16 %v4387, %v4386
        %v4489 = vpack.c.b16 %v4389, %v4388
        %v4490 = vpack.c.b16 %v4391, %v4390
        %v4491 = vpack.c.b16 %v4393, %v4392
        %v4492 = vpack.c.b16 %v4395, %v4394
        %v4493 = vpack.c.b16 %v4397, %v4396
        %v4494 = vpack.c.b16 %v4399, %v4398
        %v4495 = vpack.c.b16 %v4401, %v4400
        %v4496 = vpack.c.b16 %v4403, %v4402
        %v4497 = vpack.c.b16 %v4405, %v4404
        %v4498 = vpack.c.b16 %v4407, %v4406
        %v4499 = vpack.c.b16 %v4409, %v4408
        %v4500 = vpack.c.b16 %v4411, %v4410
        %v4501 = vpack.c.b16 %v4413, %v4412
        %v4502 = vpack.c.b16 %v4415, %v4414
        %v4503 = vpack.c.b16 %v4417, %v4416
        %v4504 = vpack.c.b16 %v4419, %v4418
        %v4505 = vpack.c.b16 %v4421, %v4420
        %v4506 = vpack.c.b16 %v4423, %v4422
        %v4507 = vpack.c.b16 %v4425, %v4424
        %v4508 = vpack.c.b16 %v4427, %v4426
        %v4509 = vpack.c.b16 %v4429, %v4428
        %v4510 = vpack.c.b16 %v4431, %v4430
        %v4511 = vpack.c.b16 %v4433, %v4432
        %v4512 = vpack.c.b16 %v4435, %v4434
        %v4513 = vpack.c.b16 %v4437, %v4436
        %v4514 = vpack.c.b16 %v4439, %v4438
        %v4515 = vpack.c.b16 %v4441, %v4440
        %v4516 = vpack.c.b16 %v4443, %v4442
        %v4517 = vpack.c.b16 %v4445, %v4444
        %v4518 = vpack.c.b16 %v4447, %v4446
        %v4519 = vpack.c.b16 %v4449, %v4448
        %v4520 = vpack.c.b16 %v4451, %v4450
        %v4521 = vpack.c.b16 %v4453, %v4452
        %v4522 = vpack.c.b16 %v4455, %v4454
        %v4523 = vpack.c.b16 %v4457, %v4456
        %v4524 = vpack.c.b16 %v4459, %v4458
        %v4525 = vpack.c.b16 %v4461, %v4460
        %v4526 = vpack.c.b16 %v4463, %v4462
        %v4527 = vpack.c.b16 %v4465, %v4464
        %v4528 = vpack.c.b16 %v4467, %v4466
        %v4529 = vpack.c.b16 %v4469, %v4468
        %v4530 = vpack.c.b16 %v4471, %v4470
        %v4531 = vpack.c.b16 %v4473, %v4472
        %v4532 = vpack.c.b16 %v4475, %v4474
        %v4533 = vpack.c.b16 %v4477, %v4476
        %4590 = vmatprep.subr.bf16.mxu0 0
        %4591 = vmatpush1.bf16.msra.mxu0 %v4478
        %4592 = vmatprep.subr.bf16.mxu0 0
        %4593 = vmatpush1.bf16.msra.mxu0 %v4479
        %4594 = vmatprep.subr.bf16.mxu0 0
        %4595 = vmatpush1.bf16.msra.mxu0 %v4480
        %4596 = vmatprep.subr.bf16.mxu0 0
        %4597 = vmatpush1.bf16.msra.mxu0 %v4481
        %4598 = vmatprep.subr.bf16.mxu0 0
        %4599 = vmatpush1.bf16.msra.mxu0 %v4482
        %4600 = vmatprep.subr.bf16.mxu0 0
        %4601 = vmatpush1.bf16.msra.mxu0 %v4483
        %4602 = vmatprep.subr.bf16.mxu0 0
        %4603 = vmatpush1.bf16.msra.mxu0 %v4484
        %4604 = vmatprep.subr.bf16.mxu0 0
        %4605 = vmatpush1.bf16.msra.mxu0 %v4485
        %4606 = vmatprep.subr.bf16.mxu0 0
        %4607 = vmatpush1.bf16.msra.mxu0 %v4486
        %4608 = vmatprep.subr.bf16.mxu0 0
        %4609 = vmatpush1.bf16.msra.mxu0 %v4487
        %4610 = vmatprep.subr.bf16.mxu0 0
        %4611 = vmatpush1.bf16.msra.mxu0 %v4488
        %4612 = vmatprep.subr.bf16.mxu0 0
        %4613 = vmatpush1.bf16.msra.mxu0 %v4489
        %4614 = vmatprep.subr.bf16.mxu0 0
        %4615 = vmatpush1.bf16.msra.mxu0 %v4490
        %4616 = vmatprep.subr.bf16.mxu0 0
        %4617 = vmatpush1.bf16.msra.mxu0 %v4491
        %4618 = vmatprep.subr.bf16.mxu0 0
        %4619 = vmatpush1.bf16.msra.mxu0 %v4492
        %4620 = vmatprep.subr.bf16.mxu0 0
        %4621 = vmatpush1.bf16.msra.mxu0 %v4493
        %4622 = vmatprep.mubr.bf16.mxu0 %v4241
        %4623 = vmatmul.mubr.bf16.gmra.mrb[0].mxu0 %v4240
        %v4624 = vpop.f32.mrb[0].mxu0
        %v4625 = vadd.f32 0.0, %v4624
        %v4626 = vpop.f32.mrb[0].mxu0
        %v4627 = vpop.f32.mrb[0].mxu0
        %v4628 = vpop.f32.mrb[0].mxu0
        %4629 = vdwg.mxu0
        %4630 = vmatprep.subr.bf16.mxu0 0
        %4631 = vmatpush1.bf16.msra.mxu0 %v4494
        %4632 = vmatprep.subr.bf16.mxu0 0
        %4633 = vmatpush1.bf16.msra.mxu0 %v4495
        %4634 = vmatprep.subr.bf16.mxu0 0
        %4635 = vmatpush1.bf16.msra.mxu0 %v4496
        %4636 = vmatprep.subr.bf16.mxu0 0
        %4637 = vmatpush1.bf16.msra.mxu0 %v4497
        %4638 = vmatprep.subr.bf16.mxu0 0
        %4639 = vmatpush1.bf16.msra.mxu0 %v4498
        %4640 = vmatprep.subr.bf16.mxu0 0
        %4641 = vmatpush1.bf16.msra.mxu0 %v4499
        %4642 = vmatprep.subr.bf16.mxu0 0
        %4643 = vmatpush1.bf16.msra.mxu0 %v4500
        %4644 = vmatprep.subr.bf16.mxu0 0
        %4645 = vmatpush1.bf16.msra.mxu0 %v4501
        %4646 = vmatprep.subr.bf16.mxu0 0
        %4647 = vmatpush1.bf16.msra.mxu0 %v4502
        %4648 = vmatprep.subr.bf16.mxu0 0
        %4649 = vmatpush1.bf16.msra.mxu0 %v4503
        %4650 = vmatprep.subr.bf16.mxu0 0
        %4651 = vmatpush1.bf16.msra.mxu0 %v4504
        %4652 = vmatprep.subr.bf16.mxu0 0
        %4653 = vmatpush1.bf16.msra.mxu0 %v4505
        %4654 = vmatprep.subr.bf16.mxu0 0
        %4655 = vmatpush1.bf16.msra.mxu0 %v4506
        %4656 = vmatprep.subr.bf16.mxu0 0
        %4657 = vmatpush1.bf16.msra.mxu0 %v4507
        %4658 = vmatprep.subr.bf16.mxu0 0
        %4659 = vmatpush1.bf16.msra.mxu0 %v4508
        %4660 = vmatprep.subr.bf16.mxu0 0
        %4661 = vmatpush1.bf16.msra.mxu0 %v4509
        %4662 = vmatprep.mubr.bf16.mxu0 %v4243
        %4663 = vmatmul.mubr.bf16.gmra.mrb[0].mxu0 %v4242
        %v4664 = vpop.f32.mrb[0].mxu0
        %v4665 = vadd.f32 %v4625, %v4664
        %v4666 = vpop.f32.mrb[0].mxu0
        %v4667 = vpop.f32.mrb[0].mxu0
        %v4668 = vpop.f32.mrb[0].mxu0
        %4669 = vdwg.mxu0
        %4670 = vmatprep.subr.bf16.mxu0 0
        %4671 = vmatpush1.bf16.msra.mxu0 %v4510
        %4672 = vmatprep.subr.bf16.mxu0 0
        %4673 = vmatpush1.bf16.msra.mxu0 %v4511
        %4674 = vmatprep.subr.bf16.mxu0 0
        %4675 = vmatpush1.bf16.msra.mxu0 %v4512
        %4676 = vmatprep.subr.bf16.mxu0 0
        %4677 = vmatpush1.bf16.msra.mxu0 %v4513
        %4678 = vmatprep.subr.bf16.mxu0 0
        %4679 = vmatpush1.bf16.msra.mxu0 %v4514
        %4680 = vmatprep.subr.bf16.mxu0 0
        %4681 = vmatpush1.bf16.msra.mxu0 %v4515
        %4682 = vmatprep.subr.bf16.mxu0 0
        %4683 = vmatpush1.bf16.msra.mxu0 %v4516
        %4684 = vmatprep.subr.bf16.mxu0 0
        %4685 = vmatpush1.bf16.msra.mxu0 %v4517
        %4686 = vmatprep.subr.bf16.mxu0 0
        %4687 = vmatpush1.bf16.msra.mxu0 %v4518
        %4688 = vmatprep.subr.bf16.mxu0 0
        %4689 = vmatpush1.bf16.msra.mxu0 %v4519
        %4690 = vmatprep.subr.bf16.mxu0 0
        %4691 = vmatpush1.bf16.msra.mxu0 %v4520
        %4692 = vmatprep.subr.bf16.mxu0 0
        %4693 = vmatpush1.bf16.msra.mxu0 %v4521
        %4694 = vmatprep.subr.bf16.mxu0 0
        %4695 = vmatpush1.bf16.msra.mxu0 %v4522
        %4696 = vmatprep.subr.bf16.mxu0 0
        %4697 = vmatpush1.bf16.msra.mxu0 %v4523
        %4698 = vmatprep.subr.bf16.mxu0 0
        %4699 = vmatpush1.bf16.msra.mxu0 %v4524
        %4700 = vmatprep.subr.bf16.mxu0 0
        %4701 = vmatpush1.bf16.msra.mxu0 %v4525
        %4702 = vmatprep.mubr.bf16.mxu0 %v4245
        %4703 = vmatmul.mubr.bf16.gmra.mrb[0].mxu0 %v4244
        %v4704 = vpop.f32.mrb[0].mxu0
        %v4705 = vadd.f32 %v4665, %v4704
        %v4706 = vpop.f32.mrb[0].mxu0
        %v4707 = vpop.f32.mrb[0].mxu0
        %v4708 = vpop.f32.mrb[0].mxu0
        %4709 = vdwg.mxu0
        %4710 = vmatprep.subr.bf16.mxu0 0
        %4711 = vmatpush1.bf16.msra.mxu0 %v4526
        %4712 = vmatprep.subr.bf16.mxu0 0
        %4713 = vmatpush1.bf16.msra.mxu0 %v4527
        %4714 = vmatprep.subr.bf16.mxu0 0
        %4715 = vmatpush1.bf16.msra.mxu0 %v4528
        %4716 = vmatprep.subr.bf16.mxu0 0
        %4717 = vmatpush1.bf16.msra.mxu0 %v4529
        %4718 = vmatprep.subr.bf16.mxu0 0
        %4719 = vmatpush1.bf16.msra.mxu0 %v4530
        %4720 = vmatprep.subr.bf16.mxu0 0
        %4721 = vmatpush1.bf16.msra.mxu0 %v4531
        %4722 = vmatprep.subr.bf16.mxu0 0
        %4723 = vmatpush1.bf16.msra.mxu0 %v4532
        %4724 = vmatprep.subr.bf16.mxu0 0
        %4725 = vmatpush1.bf16.msra.mxu0 %v4533
        %4726 = vmatprep.subr.bf16.mxu0 0
        %4727 = vmatpush1.bf16.msra.mxu0 0
        %4728 = vmatprep.subr.bf16.mxu0 0
        %4729 = vmatpush1.bf16.msra.mxu0 0
        %4730 = vmatprep.subr.bf16.mxu0 0
        %4731 = vmatpush1.bf16.msra.mxu0 0
        %4732 = vmatprep.subr.bf16.mxu0 0
        %4733 = vmatpush1.bf16.msra.mxu0 0
        %4734 = vmatprep.subr.bf16.mxu0 0
        %4735 = vmatpush1.bf16.msra.mxu0 0
        %4736 = vmatprep.subr.bf16.mxu0 0
        %4737 = vmatpush1.bf16.msra.mxu0 0
        %4738 = vmatprep.subr.bf16.mxu0 0
        %4739 = vmatpush1.bf16.msra.mxu0 0
        %4740 = vmatprep.subr.bf16.mxu0 0
        %4741 = vmatpush1.bf16.msra.mxu0 0
        %4742 = vmatprep.mubr.bf16.mxu0 0
        %4743 = vmatmul.mubr.bf16.gmra.mrb[0].mxu0 %v4246
        %v4744 = vpop.f32.mrb[0].mxu0
        %v4745 = vadd.f32 %v4705, %v4744
        %v4746 = vpop.f32.mrb[0].mxu0
        %v4747 = vpop.f32.mrb[0].mxu0
        %v4748 = vpop.f32.mrb[0].mxu0
        %4749 = vdwg.mxu0
        %v4750 = vadd.f32 %v4089, %v4745
        %v4751 = vld [vmem:[%s3] sm:$0x1]
        %v4753 = vlaneseq
        %v4754 = vshrl.u32 %v4753, 7
        %v4755 = vsub.s32 0, %v4754
        %v4756 = vrot.slane %v4751, %v4755
        %v4758 = vadd.f32 %v4750, %v4756
        %4759 = vst [vmem:[%s219] sm:$0xf] %v4758
        %s4760 = sand.u32 %s134, 1
        %s4761 = scalar_lea.sflag [#allocation3], %s4760
        %s4762 = sand.u32 %s134, 1
        %s4763 = smul.addr %s4762, 4
        %s4764 = scalar_lea.vmem [#allocation2], %s4763
        // Predicated region
        $region37: #{conv_maxpool2d_forward.5} parent=35 // pred_check
          %p4765 = pneg %p144
        $region38: #{conv_maxpool2d_forward.5} parent=35 // pred_check_branch
          %4767 = sbr.rel (%p4765) target = $region40
        $region39: #{conv_maxpool2d_forward.5} parent=35 // pred_region
          %s4769 = ssub.s32 64, 64
          %4770 = vsyncadd %s4761, %s4769
          %s4771 = sadd.s32 %s23, %s22
          %s4772 = smul.addr %s4771, 64
          %s4773 = scalar_lea.hbm %s4, %s4772
          %s4775 = sshll.u32 %s4764, 4
          %s4776 = int_to_ptr.vmem [resolvable:$true] %s4775
          %4778 = dma.vmem_to_hbm [thread:$0]  %s4776, 64, %s4773, %s4761
        $region40: #{conv_maxpool2d_forward.5} parent=35 // pred_fallthru
          _
      $region36: #{conv_maxpool2d_forward.5} parent=5 // pred_fallthru
        _
      %p4779 = scmp.le.s32.totalorder 2, %s13
      // Predicated region
      $region41: #{conv_maxpool2d_forward.5} parent=5 // pred_check
        %p4780 = pneg %p4779
      $region42: #{conv_maxpool2d_forward.5} parent=5 // pred_check_branch
        %4782 = sbr.rel (%p4780) target = $region44
      $region43: #{conv_maxpool2d_forward.5} parent=5 // pred_region
        %s4783 = ssub.s32 %s13, 2
        // Predicated region
        $region45: #{conv_maxpool2d_forward.5} parent=43 // pred_check
          %p4784 = pneg %p150
        $region46: #{conv_maxpool2d_forward.5} parent=43 // pred_check_branch
          %4786 = sbr.rel (%p4784) target = $region48
        $region47: #{conv_maxpool2d_forward.5} parent=43 // pred_region
          %s4787 = sand.u32 %s135, 1
          %s4788 = scalar_lea.sflag [#allocation3], %s4787
          %s4789 = sand.u32 %s135, 1
          %s4790 = smul.addr %s4789, 4
          %s4791 = scalar_lea.vmem [#allocation2], %s4790
          %4792 = dma.done %s4788, 64
        $region48: #{conv_maxpool2d_forward.5} parent=43 // pred_fallthru
          _
      $region44: #{conv_maxpool2d_forward.5} parent=5 // pred_fallthru
        _
    $region6: #{conv_maxpool2d_forward.5} parent=1 // loop_footer
      %s17 = sadd.s32 1, %s13
    $region7: #{conv_maxpool2d_forward.5} parent=1 // loop_footer_branch
      %12 = sbr.rel target = $region3
    $region8: #{conv_maxpool2d_forward.5} parent=1 // loop_exit
      _
    %4793 = vsyncpa [#allocation3], 1
    %s4794 = scalar_lea.sflag [#allocation3], 1
    %4795 = vsyncpa %s4794, 1

</llo_original>
